<compile_context>
chip_gen: v6e
topology: v6e:2x2x1
jax: 0.10.0
libtpu: 0.0.40
codegen_flags: <defaults>
</compile_context>

<pallas_src>
import functools

import jax
import jax.numpy as jnp
from jax.experimental import pallas as pl
from jax.experimental.pallas import tpu as pltpu


# ----------------------------------------------------------------------------
# Fused Pallas kernel: conv3x3 (9 shifted matmuls) + bias + ReLU + GAP + FC
# ----------------------------------------------------------------------------
def fused_conv_gap_fc_kernel(x_ref, w_ref, b_ref, pool_ref, fcw_ref, fcb_ref,
                             o_ref, acc_ref, *, H, W):
    """One grid step == one image.

    x_ref:    [1, (H+3)*(W+2), C]  f32   padded image, spatial dims flattened
    w_ref:    [9, C, COP]          bf16  per-tap conv weights (lane-padded)
    b_ref:    [1, COP]             f32   conv bias (lane-padded)
    pool_ref: [1, H*(W+2)]         f32   GAP weights: 1/(H*W) on real pixels,
                                          0 on the 2 halo columns per row
    fcw_ref:  [COP, NCP]           f32   classifier weights (lane-padded)
    fcb_ref:  [1, NCP]             f32   classifier bias (lane-padded)
    o_ref:    [1, 1, NCP]          f32   logits for this image
    acc_ref:  [H*(W+2), COP]       f32   VMEM scratch accumulator
    """
    Wp = W + 2          # padded row length
    R = H * Wp          # rows in the flat conv workspace (includes halo cols)

    acc_ref[...] = jnp.zeros_like(acc_ref)

    # 3x3 conv as 9 shifted contiguous slices of the flattened padded image,
    # each a [R, C] @ [C, COP] matmul accumulated into the f32 scratch.
    for tap in range(9):
        di, dj = tap // 3, tap % 3
        off = di * Wp + dj                       # static offset per tap
        rows = x_ref[0, off:off + R, :].astype(jnp.bfloat16)   # [R, C]
        acc_ref[...] += jnp.dot(rows, w_ref[tap],
                                preferred_element_type=jnp.float32)

    # bias + ReLU
    y = jnp.maximum(acc_ref[...] + b_ref[...], 0.0)            # [R, COP]

    # Global average pool via the MXU: pool row-vector already carries 1/(H*W)
    # and zeros out the interleaved halo columns.
    pooled = jnp.dot(pool_ref[...], y,
                     preferred_element_type=jnp.float32)       # [1, COP]

    # Classifier head.
    logits = jnp.dot(pooled, fcw_ref[...],
                     preferred_element_type=jnp.float32)       # [1, NCP]
    o_ref[0] = logits + fcb_ref[...]


# ----------------------------------------------------------------------------
# JAX wrapper
# ----------------------------------------------------------------------------
def image_model_forward(x_nchw, params):
    """conv3x3(pad=1) + ReLU -> GAP -> linear. Returns [B, num_classes]."""
    conv_w, conv_b, fc_w, fc_b = params
    B, C, H, W = x_nchw.shape
    C_out = conv_w.shape[0]
    num_classes = fc_w.shape[1]

    LANE = 128
    COP = -(-C_out // LANE) * LANE          # conv channels padded to 128 lanes
    NCP = -(-num_classes // LANE) * LANE    # classes padded to 128 lanes
    Wp = W + 2
    R = H * Wp

    # NHWC + halo pad: 1 top / 2 bottom rows, 1 col each side.  The extra
    # bottom row keeps every tap's contiguous flat slice in bounds.
    x_nhwc = jnp.transpose(x_nchw, (0, 2, 3, 1)).astype(jnp.float32)
    xp = jnp.pad(x_nhwc, ((0, 0), (1, 2), (1, 1), (0, 0)))     # [B, H+3, Wp, C]
    x_flat = xp.reshape(B, (H + 3) * Wp, C)

    # conv weight [C_out, C, 3, 3] -> per-tap [9, C, COP], bf16 for the MXU.
    w_taps = jnp.transpose(conv_w, (2, 3, 1, 0)).reshape(9, C, C_out)
    w_taps = jnp.pad(w_taps, ((0, 0), (0, 0), (0, COP - C_out)))
    w_taps = w_taps.astype(jnp.bfloat16)
    b_pad = jnp.pad(conv_b, (0, COP - C_out)).reshape(1, COP).astype(jnp.float32)

    # GAP weights: 1/(H*W) on real pixels, 0 on the 2 halo columns of each row.
    col = jnp.arange(R, dtype=jnp.int32) % Wp
    pool_w = jnp.where(col < W, 1.0 / float(H * W), 0.0)
    pool_w = pool_w.astype(jnp.float32).reshape(1, R)

    # Classifier head, lane-padded to 128.
    fcw = jnp.pad(fc_w.astype(jnp.float32),
                  ((0, COP - C_out), (0, NCP - num_classes)))
    fcb = jnp.pad(fc_b.astype(jnp.float32),
                  (0, NCP - num_classes)).reshape(1, NCP)

    kernel = functools.partial(fused_conv_gap_fc_kernel, H=H, W=W)

    out = pl.pallas_call(
        kernel,
        out_shape=jax.ShapeDtypeStruct((B, 1, NCP), jnp.float32),
        grid=(B,),
        in_specs=[
            pl.BlockSpec((1, (H + 3) * Wp, C), lambda b: (b, 0, 0)),
            pl.BlockSpec((9, C, COP), lambda b: (0, 0, 0)),
            pl.BlockSpec((1, COP), lambda b: (0, 0)),
            pl.BlockSpec((1, R), lambda b: (0, 0)),
            pl.BlockSpec((COP, NCP), lambda b: (0, 0)),
            pl.BlockSpec((1, NCP), lambda b: (0, 0)),
        ],
        out_specs=pl.BlockSpec((1, 1, NCP), lambda b: (b, 0, 0)),
        scratch_shapes=[pltpu.VMEM((R, COP), jnp.float32)],
        compiler_params=pltpu.CompilerParams(
            dimension_semantics=("parallel",),
            vmem_limit_bytes=32 * 1024 * 1024),
    )(x_flat, w_taps, b_pad, pool_w, fcw, fcb)

    return out.reshape(B, NCP)[:, :num_classes]


# ----------------------------------------------------------------------------
# Pure-JAX reference (f32) for validation
# ----------------------------------------------------------------------------
def reference_forward(x_nchw, params):
    conv_w, conv_b, fc_w, fc_b = params
    B, C, H, W = x_nchw.shape
    xp = jnp.pad(x_nchw.astype(jnp.float32), ((0, 0), (0, 0), (1, 1), (1, 1)))
    acc = jnp.zeros((B, conv_w.shape[0], H, W), jnp.float32)
    for di in range(3):
        for dj in range(3):
            acc = acc + jnp.einsum('bchw,oc->bohw',
                                   xp[:, :, di:di + H, dj:dj + W],
                                   conv_w[:, :, di, dj])
    feat = jax.nn.relu(acc + conv_b[None, :, None, None])
    pooled = feat.mean(axis=(2, 3))
    return pooled @ fc_w + fc_b


def init_params(key, in_channels, hidden_channels, num_classes):
    k1, k2, k3, k4 = jax.random.split(key, 4)
    conv_w = jax.random.normal(k1, (hidden_channels, in_channels, 3, 3),
                               jnp.float32) * 0.1
    conv_b = jax.random.normal(k2, (hidden_channels,), jnp.float32) * 0.01
    fc_w = jax.random.normal(k3, (hidden_channels, num_classes),
                             jnp.float32) * 0.1
    fc_b = jax.random.normal(k4, (num_classes,), jnp.float32) * 0.01
    return conv_w, conv_b, fc_w, fc_b


if __name__ == "__main__":
    # Small shapes: batch=2, RGB channels=3, spatial=16x16, hidden=32, classes=10
    B, C, H, W = 2, 3, 16, 16
    HIDDEN = 32
    NUM_CLASSES = 10

    key = jax.random.PRNGKey(0)
    kx, kp = jax.random.split(key)
    x = jax.random.normal(kx, (B, C, H, W), jnp.float32)   # NCHW, like PyTorch
    params = init_params(kp, C, HIDDEN, NUM_CLASSES)

    out = image_model_forward(x, params)
    out = jax.block_until_ready(out)
    assert out.shape == (B, NUM_CLASSES), out.shape

    ref = reference_forward(x, params)
    assert jnp.allclose(out, ref, atol=2e-2, rtol=2e-2), \
        float(jnp.max(jnp.abs(out - ref)))
    print("KERNEL_OK")
</pallas_src>

<mosaic_0001>
module attributes {stable_mosaic.version = 11 : i64} {
  func.func @fused_conv_gap_fc_kernel(%arg0: i32, %arg1: memref<1x342x3xf32, #tpu.memory_space<vmem>>, %arg2: memref<9x3x128xbf16, #tpu.memory_space<vmem>>, %arg3: memref<1x128xf32, #tpu.memory_space<vmem>>, %arg4: memref<1x288xf32, #tpu.memory_space<vmem>>, %arg5: memref<128x128xf32, #tpu.memory_space<vmem>>, %arg6: memref<1x128xf32, #tpu.memory_space<vmem>>, %arg7: memref<1x1x128xf32, #tpu.memory_space<vmem>>, %arg8: memref<288x128xf32, #tpu.memory_space<vmem>>) attributes {dimension_semantics = [#tpu.dimension_semantics<parallel>], iteration_bounds = array<i64: 2>, scalar_prefetch = 0 : i64, scratch_operands = 1 : i64, tpu.core_type = #tpu.core_type<tc>, window_params = [{transform_indices = @transform_0, window_bounds = array<i64: 1, 342, 3>}, {pipeline_mode = #tpu.pipeline_mode<synchronous>, transform_indices = @transform_1, window_bounds = array<i64: 9, 3, 128>}, {pipeline_mode = #tpu.pipeline_mode<synchronous>, transform_indices = @transform_2, window_bounds = array<i64: 1, 128>}, {pipeline_mode = #tpu.pipeline_mode<synchronous>, transform_indices = @transform_3, window_bounds = array<i64: 1, 288>}, {pipeline_mode = #tpu.pipeline_mode<synchronous>, transform_indices = @transform_4, window_bounds = array<i64: 128, 128>}, {pipeline_mode = #tpu.pipeline_mode<synchronous>, transform_indices = @transform_5, window_bounds = array<i64: 1, 128>}, {transform_indices = @transform_6, window_bounds = array<i64: 1, 1, 128>}]} {
    %cst = arith.constant 0.000000e+00 : f32
    %0 = vector.broadcast %cst : f32 to vector<288x128xf32>
    %c0 = arith.constant 0 : index
    %c0_0 = arith.constant 0 : index
    %1 = vector.load %arg8[%c0, %c0_0] : memref<288x128xf32, #tpu.memory_space<vmem>>, vector<288x128xf32>
    tpu.vector_store %arg8[%c0, %c0_0], %0 {strides = array<i32>} : memref<288x128xf32, #tpu.memory_space<vmem>>, vector<288x128xf32>,
    %c0_1 = arith.constant 0 : index
    %c0_2 = arith.constant 0 : index
    %c0_3 = arith.constant 0 : index
    %2 = vector.load %arg1[%c0_1, %c0_2, %c0_3] : memref<1x342x3xf32, #tpu.memory_space<vmem>>, vector<1x288x3xf32>
    %3 = vector.shape_cast %2 : vector<1x288x3xf32> to vector<288x3xf32>
    %4 = arith.truncf %3 : vector<288x3xf32> to vector<288x3xbf16>
    %c0_4 = arith.constant 0 : index
    %c0_5 = arith.constant 0 : index
    %5 = vector.load %arg8[%c0_4, %c0_5] : memref<288x128xf32, #tpu.memory_space<vmem>>, vector<288x128xf32>
    %c0_6 = arith.constant 0 : index
    %c0_7 = arith.constant 0 : index
    %c0_8 = arith.constant 0 : index
    %6 = vector.load %arg2[%c0_6, %c0_7, %c0_8] : memref<9x3x128xbf16, #tpu.memory_space<vmem>>, vector<1x3x128xbf16>
    %7 = vector.shape_cast %6 : vector<1x3x128xbf16> to vector<3x128xbf16>
    %cst_9 = arith.constant dense<0.000000e+00> : vector<288x128xf32>
    %8 = tpu.matmul %4, %7, %cst_9 {dimension_numbers = #tpu.dot_dimension_numbers<[1], [0], [0], [1], [0, 0, 1, 1], [], []>} : vector<288x3xbf16>, vector<3x128xbf16>, vector<288x128xf32> -> vector<288x128xf32>
    %9 = arith.addf %5, %8 : vector<288x128xf32>
    %c0_10 = arith.constant 0 : index
    %c0_11 = arith.constant 0 : index
    %10 = vector.load %arg8[%c0_10, %c0_11] : memref<288x128xf32, #tpu.memory_space<vmem>>, vector<288x128xf32>
    tpu.vector_store %arg8[%c0_10, %c0_11], %9 {strides = array<i32>} : memref<288x128xf32, #tpu.memory_space<vmem>>, vector<288x128xf32>,
    %c0_12 = arith.constant 0 : index
    %c1 = arith.constant 1 : index
    %c0_13 = arith.constant 0 : index
    %11 = vector.load %arg1[%c0_12, %c1, %c0_13] : memref<1x342x3xf32, #tpu.memory_space<vmem>>, vector<1x288x3xf32>
    %12 = vector.shape_cast %11 : vector<1x288x3xf32> to vector<288x3xf32>
    %13 = arith.truncf %12 : vector<288x3xf32> to vector<288x3xbf16>
    %c0_14 = arith.constant 0 : index
    %c0_15 = arith.constant 0 : index
    %14 = vector.load %arg8[%c0_14, %c0_15] : memref<288x128xf32, #tpu.memory_space<vmem>>, vector<288x128xf32>
    %c1_16 = arith.constant 1 : index
    %c0_17 = arith.constant 0 : index
    %c0_18 = arith.constant 0 : index
    %15 = vector.load %arg2[%c1_16, %c0_17, %c0_18] : memref<9x3x128xbf16, #tpu.memory_space<vmem>>, vector<1x3x128xbf16>
    %16 = vector.shape_cast %15 : vector<1x3x128xbf16> to vector<3x128xbf16>
    %cst_19 = arith.constant dense<0.000000e+00> : vector<288x128xf32>
    %17 = tpu.matmul %13, %16, %cst_19 {dimension_numbers = #tpu.dot_dimension_numbers<[1], [0], [0], [1], [0, 0, 1, 1], [], []>} : vector<288x3xbf16>, vector<3x128xbf16>, vector<288x128xf32> -> vector<288x128xf32>
    %18 = arith.addf %14, %17 : vector<288x128xf32>
    %c0_20 = arith.constant 0 : index
    %c0_21 = arith.constant 0 : index
    %19 = vector.load %arg8[%c0_20, %c0_21] : memref<288x128xf32, #tpu.memory_space<vmem>>, vector<288x128xf32>
    tpu.vector_store %arg8[%c0_20, %c0_21], %18 {strides = array<i32>} : memref<288x128xf32, #tpu.memory_space<vmem>>, vector<288x128xf32>,
    %c0_22 = arith.constant 0 : index
    %c2 = arith.constant 2 : index
    %c0_23 = arith.constant 0 : index
    %20 = vector.load %arg1[%c0_22, %c2, %c0_23] : memref<1x342x3xf32, #tpu.memory_space<vmem>>, vector<1x288x3xf32>
    %21 = vector.shape_cast %20 : vector<1x288x3xf32> to vector<288x3xf32>
    %22 = arith.truncf %21 : vector<288x3xf32> to vector<288x3xbf16>
    %c0_24 = arith.constant 0 : index
    %c0_25 = arith.constant 0 : index
    %23 = vector.load %arg8[%c0_24, %c0_25] : memref<288x128xf32, #tpu.memory_space<vmem>>, vector<288x128xf32>
    %c2_26 = arith.constant 2 : index
    %c0_27 = arith.constant 0 : index
    %c0_28 = arith.constant 0 : index
    %24 = vector.load %arg2[%c2_26, %c0_27, %c0_28] : memref<9x3x128xbf16, #tpu.memory_space<vmem>>, vector<1x3x128xbf16>
    %25 = vector.shape_cast %24 : vector<1x3x128xbf16> to vector<3x128xbf16>
    %cst_29 = arith.constant dense<0.000000e+00> : vector<288x128xf32>
    %26 = tpu.matmul %22, %25, %cst_29 {dimension_numbers = #tpu.dot_dimension_numbers<[1], [0], [0], [1], [0, 0, 1, 1], [], []>} : vector<288x3xbf16>, vector<3x128xbf16>, vector<288x128xf32> -> vector<288x128xf32>
    %27 = arith.addf %23, %26 : vector<288x128xf32>
    %c0_30 = arith.constant 0 : index
    %c0_31 = arith.constant 0 : index
    %28 = vector.load %arg8[%c0_30, %c0_31] : memref<288x128xf32, #tpu.memory_space<vmem>>, vector<288x128xf32>
    tpu.vector_store %arg8[%c0_30, %c0_31], %27 {strides = array<i32>} : memref<288x128xf32, #tpu.memory_space<vmem>>, vector<288x128xf32>,
    %c0_32 = arith.constant 0 : index
    %c18 = arith.constant 18 : index
    %c0_33 = arith.constant 0 : index
    %29 = vector.load %arg1[%c0_32, %c18, %c0_33] : memref<1x342x3xf32, #tpu.memory_space<vmem>>, vector<1x288x3xf32>
    %30 = vector.shape_cast %29 : vector<1x288x3xf32> to vector<288x3xf32>
    %31 = arith.truncf %30 : vector<288x3xf32> to vector<288x3xbf16>
    %c0_34 = arith.constant 0 : index
    %c0_35 = arith.constant 0 : index
    %32 = vector.load %arg8[%c0_34, %c0_35] : memref<288x128xf32, #tpu.memory_space<vmem>>, vector<288x128xf32>
    %c3 = arith.constant 3 : index
    %c0_36 = arith.constant 0 : index
    %c0_37 = arith.constant 0 : index
    %33 = vector.load %arg2[%c3, %c0_36, %c0_37] : memref<9x3x128xbf16, #tpu.memory_space<vmem>>, vector<1x3x128xbf16>
    %34 = vector.shape_cast %33 : vector<1x3x128xbf16> to vector<3x128xbf16>
    %cst_38 = arith.constant dense<0.000000e+00> : vector<288x128xf32>
    %35 = tpu.matmul %31, %34, %cst_38 {dimension_numbers = #tpu.dot_dimension_numbers<[1], [0], [0], [1], [0, 0, 1, 1], [], []>} : vector<288x3xbf16>, vector<3x128xbf16>, vector<288x128xf32> -> vector<288x128xf32>
    %36 = arith.addf %32, %35 : vector<288x128xf32>
    %c0_39 = arith.constant 0 : index
    %c0_40 = arith.constant 0 : index
    %37 = vector.load %arg8[%c0_39, %c0_40] : memref<288x128xf32, #tpu.memory_space<vmem>>, vector<288x128xf32>
    tpu.vector_store %arg8[%c0_39, %c0_40], %36 {strides = array<i32>} : memref<288x128xf32, #tpu.memory_space<vmem>>, vector<288x128xf32>,
    %c0_41 = arith.constant 0 : index
    %c19 = arith.constant 19 : index
    %c0_42 = arith.constant 0 : index
    %38 = vector.load %arg1[%c0_41, %c19, %c0_42] : memref<1x342x3xf32, #tpu.memory_space<vmem>>, vector<1x288x3xf32>
    %39 = vector.shape_cast %38 : vector<1x288x3xf32> to vector<288x3xf32>
    %40 = arith.truncf %39 : vector<288x3xf32> to vector<288x3xbf16>
    %c0_43 = arith.constant 0 : index
    %c0_44 = arith.constant 0 : index
    %41 = vector.load %arg8[%c0_43, %c0_44] : memref<288x128xf32, #tpu.memory_space<vmem>>, vector<288x128xf32>
    %c4 = arith.constant 4 : index
    %c0_45 = arith.constant 0 : index
    %c0_46 = arith.constant 0 : index
    %42 = vector.load %arg2[%c4, %c0_45, %c0_46] : memref<9x3x128xbf16, #tpu.memory_space<vmem>>, vector<1x3x128xbf16>
    %43 = vector.shape_cast %42 : vector<1x3x128xbf16> to vector<3x128xbf16>
    %cst_47 = arith.constant dense<0.000000e+00> : vector<288x128xf32>
    %44 = tpu.matmul %40, %43, %cst_47 {dimension_numbers = #tpu.dot_dimension_numbers<[1], [0], [0], [1], [0, 0, 1, 1], [], []>} : vector<288x3xbf16>, vector<3x128xbf16>, vector<288x128xf32> -> vector<288x128xf32>
    %45 = arith.addf %41, %44 : vector<288x128xf32>
    %c0_48 = arith.constant 0 : index
    %c0_49 = arith.constant 0 : index
    %46 = vector.load %arg8[%c0_48, %c0_49] : memref<288x128xf32, #tpu.memory_space<vmem>>, vector<288x128xf32>
    tpu.vector_store %arg8[%c0_48, %c0_49], %45 {strides = array<i32>} : memref<288x128xf32, #tpu.memory_space<vmem>>, vector<288x128xf32>,
    %c0_50 = arith.constant 0 : index
    %c20 = arith.constant 20 : index
    %c0_51 = arith.constant 0 : index
    %47 = vector.load %arg1[%c0_50, %c20, %c0_51] : memref<1x342x3xf32, #tpu.memory_space<vmem>>, vector<1x288x3xf32>
    %48 = vector.shape_cast %47 : vector<1x288x3xf32> to vector<288x3xf32>
    %49 = arith.truncf %48 : vector<288x3xf32> to vector<288x3xbf16>
    %c0_52 = arith.constant 0 : index
    %c0_53 = arith.constant 0 : index
    %50 = vector.load %arg8[%c0_52, %c0_53] : memref<288x128xf32, #tpu.memory_space<vmem>>, vector<288x128xf32>
    %c5 = arith.constant 5 : index
    %c0_54 = arith.constant 0 : index
    %c0_55 = arith.constant 0 : index
    %51 = vector.load %arg2[%c5, %c0_54, %c0_55] : memref<9x3x128xbf16, #tpu.memory_space<vmem>>, vector<1x3x128xbf16>
    %52 = vector.shape_cast %51 : vector<1x3x128xbf16> to vector<3x128xbf16>
    %cst_56 = arith.constant dense<0.000000e+00> : vector<288x128xf32>
    %53 = tpu.matmul %49, %52, %cst_56 {dimension_numbers = #tpu.dot_dimension_numbers<[1], [0], [0], [1], [0, 0, 1, 1], [], []>} : vector<288x3xbf16>, vector<3x128xbf16>, vector<288x128xf32> -> vector<288x128xf32>
    %54 = arith.addf %50, %53 : vector<288x128xf32>
    %c0_57 = arith.constant 0 : index
    %c0_58 = arith.constant 0 : index
    %55 = vector.load %arg8[%c0_57, %c0_58] : memref<288x128xf32, #tpu.memory_space<vmem>>, vector<288x128xf32>
    tpu.vector_store %arg8[%c0_57, %c0_58], %54 {strides = array<i32>} : memref<288x128xf32, #tpu.memory_space<vmem>>, vector<288x128xf32>,
    %c0_59 = arith.constant 0 : index
    %c36 = arith.constant 36 : index
    %c0_60 = arith.constant 0 : index
    %56 = vector.load %arg1[%c0_59, %c36, %c0_60] : memref<1x342x3xf32, #tpu.memory_space<vmem>>, vector<1x288x3xf32>
    %57 = vector.shape_cast %56 : vector<1x288x3xf32> to vector<288x3xf32>
    %58 = arith.truncf %57 : vector<288x3xf32> to vector<288x3xbf16>
    %c0_61 = arith.constant 0 : index
    %c0_62 = arith.constant 0 : index
    %59 = vector.load %arg8[%c0_61, %c0_62] : memref<288x128xf32, #tpu.memory_space<vmem>>, vector<288x128xf32>
    %c6 = arith.constant 6 : index
    %c0_63 = arith.constant 0 : index
    %c0_64 = arith.constant 0 : index
    %60 = vector.load %arg2[%c6, %c0_63, %c0_64] : memref<9x3x128xbf16, #tpu.memory_space<vmem>>, vector<1x3x128xbf16>
    %61 = vector.shape_cast %60 : vector<1x3x128xbf16> to vector<3x128xbf16>
    %cst_65 = arith.constant dense<0.000000e+00> : vector<288x128xf32>
    %62 = tpu.matmul %58, %61, %cst_65 {dimension_numbers = #tpu.dot_dimension_numbers<[1], [0], [0], [1], [0, 0, 1, 1], [], []>} : vector<288x3xbf16>, vector<3x128xbf16>, vector<288x128xf32> -> vector<288x128xf32>
    %63 = arith.addf %59, %62 : vector<288x128xf32>
    %c0_66 = arith.constant 0 : index
    %c0_67 = arith.constant 0 : index
    %64 = vector.load %arg8[%c0_66, %c0_67] : memref<288x128xf32, #tpu.memory_space<vmem>>, vector<288x128xf32>
    tpu.vector_store %arg8[%c0_66, %c0_67], %63 {strides = array<i32>} : memref<288x128xf32, #tpu.memory_space<vmem>>, vector<288x128xf32>,
    %c0_68 = arith.constant 0 : index
    %c37 = arith.constant 37 : index
    %c0_69 = arith.constant 0 : index
    %65 = vector.load %arg1[%c0_68, %c37, %c0_69] : memref<1x342x3xf32, #tpu.memory_space<vmem>>, vector<1x288x3xf32>
    %66 = vector.shape_cast %65 : vector<1x288x3xf32> to vector<288x3xf32>
    %67 = arith.truncf %66 : vector<288x3xf32> to vector<288x3xbf16>
    %c0_70 = arith.constant 0 : index
    %c0_71 = arith.constant 0 : index
    %68 = vector.load %arg8[%c0_70, %c0_71] : memref<288x128xf32, #tpu.memory_space<vmem>>, vector<288x128xf32>
    %c7 = arith.constant 7 : index
    %c0_72 = arith.constant 0 : index
    %c0_73 = arith.constant 0 : index
    %69 = vector.load %arg2[%c7, %c0_72, %c0_73] : memref<9x3x128xbf16, #tpu.memory_space<vmem>>, vector<1x3x128xbf16>
    %70 = vector.shape_cast %69 : vector<1x3x128xbf16> to vector<3x128xbf16>
    %cst_74 = arith.constant dense<0.000000e+00> : vector<288x128xf32>
    %71 = tpu.matmul %67, %70, %cst_74 {dimension_numbers = #tpu.dot_dimension_numbers<[1], [0], [0], [1], [0, 0, 1, 1], [], []>} : vector<288x3xbf16>, vector<3x128xbf16>, vector<288x128xf32> -> vector<288x128xf32>
    %72 = arith.addf %68, %71 : vector<288x128xf32>
    %c0_75 = arith.constant 0 : index
    %c0_76 = arith.constant 0 : index
    %73 = vector.load %arg8[%c0_75, %c0_76] : memref<288x128xf32, #tpu.memory_space<vmem>>, vector<288x128xf32>
    tpu.vector_store %arg8[%c0_75, %c0_76], %72 {strides = array<i32>} : memref<288x128xf32, #tpu.memory_space<vmem>>, vector<288x128xf32>,
    %c0_77 = arith.constant 0 : index
    %c38 = arith.constant 38 : index
    %c0_78 = arith.constant 0 : index
    %74 = vector.load %arg1[%c0_77, %c38, %c0_78] : memref<1x342x3xf32, #tpu.memory_space<vmem>>, vector<1x288x3xf32>
    %75 = vector.shape_cast %74 : vector<1x288x3xf32> to vector<288x3xf32>
    %76 = arith.truncf %75 : vector<288x3xf32> to vector<288x3xbf16>
    %c0_79 = arith.constant 0 : index
    %c0_80 = arith.constant 0 : index
    %77 = vector.load %arg8[%c0_79, %c0_80] : memref<288x128xf32, #tpu.memory_space<vmem>>, vector<288x128xf32>
    %c8 = arith.constant 8 : index
    %c0_81 = arith.constant 0 : index
    %c0_82 = arith.constant 0 : index
    %78 = vector.load %arg2[%c8, %c0_81, %c0_82] : memref<9x3x128xbf16, #tpu.memory_space<vmem>>, vector<1x3x128xbf16>
    %79 = vector.shape_cast %78 : vector<1x3x128xbf16> to vector<3x128xbf16>
    %cst_83 = arith.constant dense<0.000000e+00> : vector<288x128xf32>
    %80 = tpu.matmul %76, %79, %cst_83 {dimension_numbers = #tpu.dot_dimension_numbers<[1], [0], [0], [1], [0, 0, 1, 1], [], []>} : vector<288x3xbf16>, vector<3x128xbf16>, vector<288x128xf32> -> vector<288x128xf32>
    %81 = arith.addf %77, %80 : vector<288x128xf32>
    %c0_84 = arith.constant 0 : index
    %c0_85 = arith.constant 0 : index
    %82 = vector.load %arg8[%c0_84, %c0_85] : memref<288x128xf32, #tpu.memory_space<vmem>>, vector<288x128xf32>
    tpu.vector_store %arg8[%c0_84, %c0_85], %81 {strides = array<i32>} : memref<288x128xf32, #tpu.memory_space<vmem>>, vector<288x128xf32>,
    %c0_86 = arith.constant 0 : index
    %c0_87 = arith.constant 0 : index
    %83 = vector.load %arg8[%c0_86, %c0_87] : memref<288x128xf32, #tpu.memory_space<vmem>>, vector<288x128xf32>
    %c0_88 = arith.constant 0 : index
    %c0_89 = arith.constant 0 : index
    %84 = vector.load %arg3[%c0_88, %c0_89] : memref<1x128xf32, #tpu.memory_space<vmem>>, vector<1x128xf32>
    %85 = vector.broadcast %84 : vector<1x128xf32> to vector<288x128xf32>
    %86 = arith.addf %83, %85 : vector<288x128xf32>
    %cst_90 = arith.constant 0.000000e+00 : f32
    %87 = vector.broadcast %cst_90 : f32 to vector<288x128xf32>
    %88 = arith.maximumf %86, %87 : vector<288x128xf32>
    %c0_91 = arith.constant 0 : index
    %c0_92 = arith.constant 0 : index
    %89 = vector.load %arg4[%c0_91, %c0_92] : memref<1x288xf32, #tpu.memory_space<vmem>>, vector<1x288xf32>
    %cst_93 = arith.constant dense<0.000000e+00> : vector<1x128xf32>
    %90 = tpu.matmul %89, %88, %cst_93 {dimension_numbers = #tpu.dot_dimension_numbers<[1], [0], [0], [1], [0, 0, 1, 1], [], []>} : vector<1x288xf32>, vector<288x128xf32>, vector<1x128xf32> -> vector<1x128xf32>
    %c0_94 = arith.constant 0 : index
    %c0_95 = arith.constant 0 : index
    %91 = vector.load %arg5[%c0_94, %c0_95] : memref<128x128xf32, #tpu.memory_space<vmem>>, vector<128x128xf32>
    %cst_96 = arith.constant dense<0.000000e+00> : vector<1x128xf32>
    %92 = tpu.matmul %90, %91, %cst_96 {dimension_numbers = #tpu.dot_dimension_numbers<[1], [0], [0], [1], [0, 0, 1, 1], [], []>} : vector<1x128xf32>, vector<128x128xf32>, vector<1x128xf32> -> vector<1x128xf32>
    %c0_97 = arith.constant 0 : index
    %c0_98 = arith.constant 0 : index
    %93 = vector.load %arg6[%c0_97, %c0_98] : memref<1x128xf32, #tpu.memory_space<vmem>>, vector<1x128xf32>
    %94 = arith.addf %92, %93 : vector<1x128xf32>
    %c0_99 = arith.constant 0 : index
    %c0_100 = arith.constant 0 : index
    %c0_101 = arith.constant 0 : index
    %95 = vector.load %arg7[%c0_99, %c0_100, %c0_101] : memref<1x1x128xf32, #tpu.memory_space<vmem>>, vector<1x1x128xf32>
    %96 = vector.shape_cast %95 : vector<1x1x128xf32> to vector<1x128xf32>
    %97 = vector.shape_cast %94 : vector<1x128xf32> to vector<1x1x128xf32>
    tpu.vector_store %arg7[%c0_99, %c0_100, %c0_101], %97 {strides = array<i32>} : memref<1x1x128xf32, #tpu.memory_space<vmem>>, vector<1x1x128xf32>,
    return
  }
  func.func @transform_0(%arg0: i32) -> (i32, i32, i32) {
    %c0_i32 = arith.constant 0 : i32
    %c0_i32_0 = arith.constant 0 : i32
    %c0_i32_1 = arith.constant 0 : i32
    return %arg0, %c0_i32, %c0_i32_0 : i32, i32, i32
  }
  func.func @transform_1(%arg0: i32) -> (i32, i32, i32) {
    %c0_i32 = arith.constant 0 : i32
    %c0_i32_0 = arith.constant 0 : i32
    %c0_i32_1 = arith.constant 0 : i32
    %c0_i32_2 = arith.constant 0 : i32
    return %c0_i32, %c0_i32_0, %c0_i32_1 : i32, i32, i32
  }
  func.func @transform_2(%arg0: i32) -> (i32, i32) {
    %c0_i32 = arith.constant 0 : i32
    %c0_i32_0 = arith.constant 0 : i32
    %c0_i32_1 = arith.constant 0 : i32
    return %c0_i32, %c0_i32_0 : i32, i32
  }
  func.func @transform_3(%arg0: i32) -> (i32, i32) {
    %c0_i32 = arith.constant 0 : i32
    %c0_i32_0 = arith.constant 0 : i32
    %c0_i32_1 = arith.constant 0 : i32
    return %c0_i32, %c0_i32_0 : i32, i32
  }
  func.func @transform_4(%arg0: i32) -> (i32, i32) {
    %c0_i32 = arith.constant 0 : i32
    %c0_i32_0 = arith.constant 0 : i32
    %c0_i32_1 = arith.constant 0 : i32
    return %c0_i32, %c0_i32_0 : i32, i32
  }
  func.func @transform_5(%arg0: i32) -> (i32, i32) {
    %c0_i32 = arith.constant 0 : i32
    %c0_i32_0 = arith.constant 0 : i32
    %c0_i32_1 = arith.constant 0 : i32
    return %c0_i32, %c0_i32_0 : i32, i32
  }
  func.func @transform_6(%arg0: i32) -> (i32, i32, i32) {
    %c0_i32 = arith.constant 0 : i32
    %c0_i32_0 = arith.constant 0 : i32
    %c0_i32_1 = arith.constant 0 : i32
    return %arg0, %c0_i32, %c0_i32_0 : i32, i32, i32
  }
}

</mosaic_0001>

<llo_original>
// kernel: tpu_custom_call.1
$region0: #{tpu_custom_call.1}
  #allocation0 [shape = 'u32[]', space=smem, size = 0x4, offset = 0x4, fixed_abs, tag = 'smem constant byte address 0x4 - core index']
  #allocation1 [shape = 'u32[144,128]{1,0:T(1,128)}', space=vmem, size = 0x12000, scoped, tag = 'internal scratch']
  #allocation2 [shape = 'f32[288,128]{1,0:T(8,128)}', space=vmem, size = 0x24000, scoped, tag = 'scratch operand']
  %s0 = inlined_call_operand.vmem [shape: f32[2,342,3], index: 0, kind: input, shape index: {}]
  %s1 = inlined_call_operand.vmem [shape: bf16[9,3,128], index: 1, kind: input, shape index: {}]
  %s2 = inlined_call_operand.vmem [shape: f32[1,128], index: 2, kind: input, shape index: {}]
  %s3 = inlined_call_operand.vmem [shape: f32[1,288], index: 3, kind: input, shape index: {}]
  %s4 = inlined_call_operand.vmem [shape: f32[128,128], index: 4, kind: input, shape index: {}]
  %s5 = inlined_call_operand.vmem [shape: f32[1,128], index: 5, kind: input, shape index: {}]
  %s6 = inlined_call_operand.hbm [shape: f32[2,1,128], index: 6, kind: output, shape index: {}]
  %s7 = sld [smem:[#allocation0]]
  $region57: #{tpu_custom_call.1} parent=0
    _
  %s9 = ssub.s32 1, %s7
  %s10 = scalar_select 0, %s9, %s7
  $region1: #{tpu_custom_call.1} parent=0
    #allocation3 [shape = 'u8[1024]{0}', space=vmem, size = 0x400, scoped, tag = 'output window, operand 0']
    #allocation4 [shape = 's32[2]{0}', space=sflag, size = 0x8, scoped, tag = 'scoped memory for tpu_custom_call.1']
    %11 = vsyncpa [#allocation4], 0
    %s12 = scalar_lea.sflag [#allocation4], 1
    %13 = vsyncpa %s12, 0
    loop: start=0, step=1, limit=4
    $region2: #{tpu_custom_call.1} parent=1 // loop_pre_header
      _
    $region3: #{tpu_custom_call.1} parent=1 // loop_header
      %s15 = sphi 0, %s19
      %p16 = scmp.ge.s32.totalorder %s15, 4
      %s25 = sphi 0, %s27
      %s28 = sphi 0, %s25
      %s29 = sphi 0, %s28
      %s45 = sphi 0, %s29
      %s49 = sphi 0, %s49
      %s51 = sphi 0, %s49
      %s52 = sphi 0, %s51
      %s66 = sphi 0, %s52
      %s70 = sphi 0, %s70
      %s72 = sphi 0, %s70
      %s73 = sphi 0, %s72
      %s87 = sphi 0, %s73
      %s91 = sphi 0, %s91
      %s93 = sphi 0, %s91
      %s94 = sphi 0, %s93
      %s108 = sphi 0, %s94
      %s112 = sphi 0, %s112
      %s114 = sphi 0, %s112
      %s115 = sphi 0, %s114
      %s129 = sphi 0, %s115
      %s133 = sphi 0, %s133
      %s135 = sphi 0, %s133
      %s136 = sphi 0, %s135
      %s150 = sphi 0, %s136
      %s156 = sphi 0, %s158
      %s159 = sphi 0, %s156
      %s160 = sphi 0, %s159
      %s176 = sphi 0, %s160
    $region4: #{tpu_custom_call.1} parent=1 // loop_header_branch
      %18 = sbr.rel (%p16) target = $region8
    $region5: #{tpu_custom_call.1} parent=1 // loop_body
      %s20 = ssub.s32 %s15, 1
      %s21 = ssub.s32 %s15, 2
      %s22 = sadd.s32 %s15, 1
      %s23 = ssub.s32 %s15, %s22
      %p24 = scmp.eq.s32.totalorder %s23, 0
      %s26 = sadd.s32 %s25, 1
      %s27 = scalar_select %p24, %s25, %s26
      %p30 = pneg %p24
      %p31 = scmp.eq.s32.totalorder %s15, 1
      %p32 = por %p30, %p31
      %p33 = scmp.ne.s32.totalorder %s25, %s28
      %p34 = scmp.eq.s32.totalorder %s15, 0
      %p35 = por %p33, %p34
      %p36 = scmp.ne.s32.totalorder %s25, %s28
      %p37 = scmp.eq.s32.totalorder %s20, 1
      %p38 = por %p36, %p37
      %p39 = scmp.ne.s32.totalorder %s28, %s29
      %p40 = scmp.eq.s32.totalorder %s20, 0
      %p41 = por %p39, %p40
      %p42 = scmp.ne.s32.totalorder %s28, %s29
      %p43 = scmp.eq.s32.totalorder %s21, 1
      %p44 = por %p42, %p43
      %p46 = scmp.ne.s32.totalorder %s29, %s45
      %p47 = scmp.eq.s32.totalorder %s21, 0
      %p48 = por %p46, %p47
      %s50 = sadd.s32 %s49, 1
      %p53 = scmp.eq.s32.totalorder %s15, 1
      %p54 = scmp.ne.s32.totalorder %s49, %s51
      %p55 = scmp.eq.s32.totalorder %s15, 0
      %p56 = por %p54, %p55
      %p57 = scmp.ne.s32.totalorder %s49, %s51
      %p58 = scmp.eq.s32.totalorder %s20, 1
      %p59 = por %p57, %p58
      %p60 = scmp.ne.s32.totalorder %s51, %s52
      %p61 = scmp.eq.s32.totalorder %s20, 0
      %p62 = por %p60, %p61
      %p63 = scmp.ne.s32.totalorder %s51, %s52
      %p64 = scmp.eq.s32.totalorder %s21, 1
      %p65 = por %p63, %p64
      %p67 = scmp.ne.s32.totalorder %s52, %s66
      %p68 = scmp.eq.s32.totalorder %s21, 0
      %p69 = por %p67, %p68
      %s71 = sadd.s32 %s70, 1
      %p74 = scmp.eq.s32.totalorder %s15, 1
      %p75 = scmp.ne.s32.totalorder %s70, %s72
      %p76 = scmp.eq.s32.totalorder %s15, 0
      %p77 = por %p75, %p76
      %p78 = scmp.ne.s32.totalorder %s70, %s72
      %p79 = scmp.eq.s32.totalorder %s20, 1
      %p80 = por %p78, %p79
      %p81 = scmp.ne.s32.totalorder %s72, %s73
      %p82 = scmp.eq.s32.totalorder %s20, 0
      %p83 = por %p81, %p82
      %p84 = scmp.ne.s32.totalorder %s72, %s73
      %p85 = scmp.eq.s32.totalorder %s21, 1
      %p86 = por %p84, %p85
      %p88 = scmp.ne.s32.totalorder %s73, %s87
      %p89 = scmp.eq.s32.totalorder %s21, 0
      %p90 = por %p88, %p89
      %s92 = sadd.s32 %s91, 1
      %p95 = scmp.eq.s32.totalorder %s15, 1
      %p96 = scmp.ne.s32.totalorder %s91, %s93
      %p97 = scmp.eq.s32.totalorder %s15, 0
      %p98 = por %p96, %p97
      %p99 = scmp.ne.s32.totalorder %s91, %s93
      %p100 = scmp.eq.s32.totalorder %s20, 1
      %p101 = por %p99, %p100
      %p102 = scmp.ne.s32.totalorder %s93, %s94
      %p103 = scmp.eq.s32.totalorder %s20, 0
      %p104 = por %p102, %p103
      %p105 = scmp.ne.s32.totalorder %s93, %s94
      %p106 = scmp.eq.s32.totalorder %s21, 1
      %p107 = por %p105, %p106
      %p109 = scmp.ne.s32.totalorder %s94, %s108
      %p110 = scmp.eq.s32.totalorder %s21, 0
      %p111 = por %p109, %p110
      %s113 = sadd.s32 %s112, 1
      %p116 = scmp.eq.s32.totalorder %s15, 1
      %p117 = scmp.ne.s32.totalorder %s112, %s114
      %p118 = scmp.eq.s32.totalorder %s15, 0
      %p119 = por %p117, %p118
      %p120 = scmp.ne.s32.totalorder %s112, %s114
      %p121 = scmp.eq.s32.totalorder %s20, 1
      %p122 = por %p120, %p121
      %p123 = scmp.ne.s32.totalorder %s114, %s115
      %p124 = scmp.eq.s32.totalorder %s20, 0
      %p125 = por %p123, %p124
      %p126 = scmp.ne.s32.totalorder %s114, %s115
      %p127 = scmp.eq.s32.totalorder %s21, 1
      %p128 = por %p126, %p127
      %p130 = scmp.ne.s32.totalorder %s115, %s129
      %p131 = scmp.eq.s32.totalorder %s21, 0
      %p132 = por %p130, %p131
      %s134 = sadd.s32 %s133, 1
      %p137 = scmp.eq.s32.totalorder %s15, 1
      %p138 = scmp.ne.s32.totalorder %s133, %s135
      %p139 = scmp.eq.s32.totalorder %s15, 0
      %p140 = por %p138, %p139
      %p141 = scmp.ne.s32.totalorder %s133, %s135
      %p142 = scmp.eq.s32.totalorder %s20, 1
      %p143 = por %p141, %p142
      %p144 = scmp.ne.s32.totalorder %s135, %s136
      %p145 = scmp.eq.s32.totalorder %s20, 0
      %p146 = por %p144, %p145
      %p147 = scmp.ne.s32.totalorder %s135, %s136
      %p148 = scmp.eq.s32.totalorder %s21, 1
      %p149 = por %p147, %p148
      %p151 = scmp.ne.s32.totalorder %s136, %s150
      %p152 = scmp.eq.s32.totalorder %s21, 0
      %p153 = por %p151, %p152
      %s154 = ssub.s32 %s15, %s22
      %p155 = scmp.eq.s32.totalorder %s154, 0
      %s157 = sadd.s32 %s156, 1
      %s158 = scalar_select %p155, %s156, %s157
      %p161 = pneg %p155
      %p162 = scmp.eq.s32.totalorder %s15, 1
      %p163 = por %p161, %p162
      %p164 = scmp.ne.s32.totalorder %s156, %s159
      %p165 = scmp.eq.s32.totalorder %s15, 0
      %p166 = por %p164, %p165
      %p167 = scmp.ne.s32.totalorder %s156, %s159
      %p168 = scmp.eq.s32.totalorder %s20, 1
      %p169 = por %p167, %p168
      %p170 = scmp.ne.s32.totalorder %s159, %s160
      %p171 = scmp.eq.s32.totalorder %s20, 0
      %p172 = por %p170, %p171
      %p173 = scmp.ne.s32.totalorder %s159, %s160
      %p174 = scmp.eq.s32.totalorder %s21, 1
      %p175 = por %p173, %p174
      %p177 = scmp.ne.s32.totalorder %s160, %s176
      %p178 = scmp.eq.s32.totalorder %s21, 0
      %p179 = por %p177, %p178
      %p180 = scmp.le.s32.totalorder 1, %s15
      %p181 = scmp.lt.s32.totalorder %s15, 3
      %p182 = pnand %p180, %p181
      %p183 = pneg %p182
      // Predicated region
      $region9: #{tpu_custom_call.1} parent=5 // pred_check
        _
      $region10: #{tpu_custom_call.1} parent=5 // pred_check_branch
        %185 = sbr.rel (%p182) target = $region12
      $region11: #{tpu_custom_call.1} parent=5 // pred_region
        %s186 = ssub.s32 %s15, 1
        // Predicated region
        $region13: #{tpu_custom_call.1} parent=11 // pred_check
          %p187 = pneg %p62
        $region14: #{tpu_custom_call.1} parent=11 // pred_check_branch
          %189 = sbr.rel (%p187) target = $region16
        $region15: #{tpu_custom_call.1} parent=11 // pred_region
          _
        $region16: #{tpu_custom_call.1} parent=11 // pred_fallthru
          _
        // Predicated region
        $region17: #{tpu_custom_call.1} parent=11 // pred_check
          %p190 = pneg %p83
        $region18: #{tpu_custom_call.1} parent=11 // pred_check_branch
          %192 = sbr.rel (%p190) target = $region20
        $region19: #{tpu_custom_call.1} parent=11 // pred_region
          _
        $region20: #{tpu_custom_call.1} parent=11 // pred_fallthru
          _
        // Predicated region
        $region21: #{tpu_custom_call.1} parent=11 // pred_check
          %p193 = pneg %p104
        $region22: #{tpu_custom_call.1} parent=11 // pred_check_branch
          %195 = sbr.rel (%p193) target = $region24
        $region23: #{tpu_custom_call.1} parent=11 // pred_region
          _
        $region24: #{tpu_custom_call.1} parent=11 // pred_fallthru
          _
        // Predicated region
        $region25: #{tpu_custom_call.1} parent=11 // pred_check
          %p196 = pneg %p125
        $region26: #{tpu_custom_call.1} parent=11 // pred_check_branch
          %198 = sbr.rel (%p196) target = $region28
        $region27: #{tpu_custom_call.1} parent=11 // pred_region
          _
        $region28: #{tpu_custom_call.1} parent=11 // pred_fallthru
          _
        // Predicated region
        $region29: #{tpu_custom_call.1} parent=11 // pred_check
          %p199 = pneg %p146
        $region30: #{tpu_custom_call.1} parent=11 // pred_check_branch
          %201 = sbr.rel (%p199) target = $region32
        $region31: #{tpu_custom_call.1} parent=11 // pred_region
          _
        $region32: #{tpu_custom_call.1} parent=11 // pred_fallthru
          _
      $region12: #{tpu_custom_call.1} parent=5 // pred_fallthru
        _
      %p202 = scmp.lt.s32.totalorder %s15, 2
      // Predicated region
      $region33: #{tpu_custom_call.1} parent=5 // pred_check
        %p203 = pneg %p202
      $region34: #{tpu_custom_call.1} parent=5 // pred_check_branch
        %205 = sbr.rel (%p203) target = $region36
      $region35: #{tpu_custom_call.1} parent=5 // pred_region
        // Predicated region
        $region37: #{tpu_custom_call.1} parent=35 // pred_check
          %p206 = pneg %p35
        $region38: #{tpu_custom_call.1} parent=35 // pred_check_branch
          %208 = sbr.rel (%p206) target = $region40
        $region39: #{tpu_custom_call.1} parent=35 // pred_region
          %p209 = scmp.lt.s32.totalorder %s15, 1
          %s210 = scalar_select %p209, %s15, 1
          %s211 = smul.addr %s210, 43
          %s212 = smul.addr %s211, 8
          %s213 = scalar_lea.vmem %s0, %s212
        $region40: #{tpu_custom_call.1} parent=35 // pred_fallthru
          _
      $region36: #{tpu_custom_call.1} parent=5 // pred_fallthru
        _
      %p214 = scmp.le.s32.totalorder 1, %s15
      %p215 = scmp.lt.s32.totalorder %s15, 3
      %p216 = pnand %p214, %p215
      %p217 = pneg %p216
      // Predicated region
      $region41: #{tpu_custom_call.1} parent=5 // pred_check
        _
      $region42: #{tpu_custom_call.1} parent=5 // pred_check_branch
        %219 = sbr.rel (%p216) target = $region44
      $region43: #{tpu_custom_call.1} parent=5 // pred_region
        %s220 = ssub.s32 %s15, 1
        %p221 = scmp.lt.s32.totalorder %s20, 1
        %s222 = scalar_select %p221, %s20, 1
        %s223 = smul.addr %s222, 43
        %s224 = smul.addr %s223, 8
        %s225 = scalar_lea.vmem %s0, %s224
        %p226 = pneg %p41
        %p227 = pneg %p38
        %p228 = pneg %p62
        %p229 = pneg %p59
        %p230 = pneg %p83
        %p231 = pneg %p80
        %p232 = pneg %p104
        %p233 = pneg %p101
        %p234 = pneg %p125
        %p235 = pneg %p122
        %p236 = pneg %p146
        %p237 = pneg %p143
        %p238 = pneg %p172
        %p239 = pneg %p169
        %s240 = sand.u32 %s159, 1
        %s241 = scalar_lea.sflag [#allocation4], %s240
        %s242 = sand.u32 %s159, 1
        %s243 = scalar_lea.vmem [#allocation3], %s242
        %p244 = scmp.lt.s32.totalorder %s20, 1
        %s245 = scalar_select %p244, %s20, 1
        %s246 = smul.addr %s245, 43
        %s247 = smul.addr %s246, 8
        %s248 = scalar_lea.vmem %s0, %s247
        %250 = vst [vmem:[#allocation2] sm:$0xff] 0.0
        %251 = vst [vmem:[#allocation2 + $0x8] sm:$0xff] 0.0
        %252 = vst [vmem:[#allocation2 + $0x10] sm:$0xff] 0.0
        %253 = vst [vmem:[#allocation2 + $0x18] sm:$0xff] 0.0
        %254 = vst [vmem:[#allocation2 + $0x20] sm:$0xff] 0.0
        %255 = vst [vmem:[#allocation2 + $0x28] sm:$0xff] 0.0
        %256 = vst [vmem:[#allocation2 + $0x30] sm:$0xff] 0.0
        %257 = vst [vmem:[#allocation2 + $0x38] sm:$0xff] 0.0
        %258 = vst [vmem:[#allocation2 + $0x40] sm:$0xff] 0.0
        %259 = vst [vmem:[#allocation2 + $0x48] sm:$0xff] 0.0
        %260 = vst [vmem:[#allocation2 + $0x50] sm:$0xff] 0.0
        %261 = vst [vmem:[#allocation2 + $0x58] sm:$0xff] 0.0
        %262 = vst [vmem:[#allocation2 + $0x60] sm:$0xff] 0.0
        %263 = vst [vmem:[#allocation2 + $0x68] sm:$0xff] 0.0
        %264 = vst [vmem:[#allocation2 + $0x70] sm:$0xff] 0.0
        %265 = vst [vmem:[#allocation2 + $0x78] sm:$0xff] 0.0
        %266 = vst [vmem:[#allocation2 + $0x80] sm:$0xff] 0.0
        %267 = vst [vmem:[#allocation2 + $0x88] sm:$0xff] 0.0
        %268 = vst [vmem:[#allocation2 + $0x90] sm:$0xff] 0.0
        %269 = vst [vmem:[#allocation2 + $0x98] sm:$0xff] 0.0
        %270 = vst [vmem:[#allocation2 + $0xa0] sm:$0xff] 0.0
        %271 = vst [vmem:[#allocation2 + $0xa8] sm:$0xff] 0.0
        %272 = vst [vmem:[#allocation2 + $0xb0] sm:$0xff] 0.0
        %273 = vst [vmem:[#allocation2 + $0xb8] sm:$0xff] 0.0
        %274 = vst [vmem:[#allocation2 + $0xc0] sm:$0xff] 0.0
        %275 = vst [vmem:[#allocation2 + $0xc8] sm:$0xff] 0.0
        %276 = vst [vmem:[#allocation2 + $0xd0] sm:$0xff] 0.0
        %277 = vst [vmem:[#allocation2 + $0xd8] sm:$0xff] 0.0
        %278 = vst [vmem:[#allocation2 + $0xe0] sm:$0xff] 0.0
        %279 = vst [vmem:[#allocation2 + $0xe8] sm:$0xff] 0.0
        %280 = vst [vmem:[#allocation2 + $0xf0] sm:$0xff] 0.0
        %281 = vst [vmem:[#allocation2 + $0xf8] sm:$0xff] 0.0
        %282 = vst [vmem:[#allocation2 + $0x100] sm:$0xff] 0.0
        %283 = vst [vmem:[#allocation2 + $0x108] sm:$0xff] 0.0
        %284 = vst [vmem:[#allocation2 + $0x110] sm:$0xff] 0.0
        %285 = vst [vmem:[#allocation2 + $0x118] sm:$0xff] 0.0
        %v286 = vld [vmem:[%s248] sm:$0xff]
        %v287 = vld [vmem:[%s248 + $0x8] sm:$0xff]
        %v288 = vld [vmem:[%s248 + $0x10] sm:$0xff]
        %v289 = vld [vmem:[%s248 + $0x18] sm:$0xff]
        %v290 = vld [vmem:[%s248 + $0x20] sm:$0xff]
        %v291 = vld [vmem:[%s248 + $0x28] sm:$0xff]
        %v292 = vld [vmem:[%s248 + $0x30] sm:$0xff]
        %v293 = vld [vmem:[%s248 + $0x38] sm:$0xff]
        %v294 = vld [vmem:[%s248 + $0x40] sm:$0xff]
        %v295 = vld [vmem:[%s248 + $0x48] sm:$0xff]
        %v296 = vld [vmem:[%s248 + $0x50] sm:$0xff]
        %v297 = vld [vmem:[%s248 + $0x58] sm:$0xff]
        %v298 = vld [vmem:[%s248 + $0x60] sm:$0xff]
        %v299 = vld [vmem:[%s248 + $0x68] sm:$0xff]
        %v300 = vld [vmem:[%s248 + $0x70] sm:$0xff]
        %v301 = vld [vmem:[%s248 + $0x78] sm:$0xff]
        %v302 = vld [vmem:[%s248 + $0x80] sm:$0xff]
        %v303 = vld [vmem:[%s248 + $0x88] sm:$0xff]
        %v304 = vld [vmem:[%s248 + $0x90] sm:$0xff]
        %v305 = vld [vmem:[%s248 + $0x98] sm:$0xff]
        %v306 = vld [vmem:[%s248 + $0xa0] sm:$0xff]
        %v307 = vld [vmem:[%s248 + $0xa8] sm:$0xff]
        %v308 = vld [vmem:[%s248 + $0xb0] sm:$0xff]
        %v309 = vld [vmem:[%s248 + $0xb8] sm:$0xff]
        %v310 = vld [vmem:[%s248 + $0xc0] sm:$0xff]
        %v311 = vld [vmem:[%s248 + $0xc8] sm:$0xff]
        %v312 = vld [vmem:[%s248 + $0xd0] sm:$0xff]
        %v313 = vld [vmem:[%s248 + $0xd8] sm:$0xff]
        %v314 = vld [vmem:[%s248 + $0xe0] sm:$0xff]
        %v315 = vld [vmem:[%s248 + $0xe8] sm:$0xff]
        %v316 = vld [vmem:[%s248 + $0xf0] sm:$0xff]
        %v317 = vld [vmem:[%s248 + $0xf8] sm:$0xff]
        %v318 = vld [vmem:[%s248 + $0x100] sm:$0xff]
        %v319 = vld [vmem:[%s248 + $0x108] sm:$0xff]
        %v320 = vld [vmem:[%s248 + $0x110] sm:$0xff]
        %v321 = vld [vmem:[%s248 + $0x118] sm:$0xff]
        %v322 = vpack.c.bf16 %v287, %v286
        %v323 = vpack.c.bf16 %v289, %v288
        %v324 = vpack.c.bf16 %v291, %v290
        %v325 = vpack.c.bf16 %v293, %v292
        %v326 = vpack.c.bf16 %v295, %v294
        %v327 = vpack.c.bf16 %v297, %v296
        %v328 = vpack.c.bf16 %v299, %v298
        %v329 = vpack.c.bf16 %v301, %v300
        %v330 = vpack.c.bf16 %v303, %v302
        %v331 = vpack.c.bf16 %v305, %v304
        %v332 = vpack.c.bf16 %v307, %v306
        %v333 = vpack.c.bf16 %v309, %v308
        %v334 = vpack.c.bf16 %v311, %v310
        %v335 = vpack.c.bf16 %v313, %v312
        %v336 = vpack.c.bf16 %v315, %v314
        %v337 = vpack.c.bf16 %v317, %v316
        %v338 = vpack.c.bf16 %v319, %v318
        %v339 = vpack.c.bf16 %v321, %v320
        %v340 = vld [vmem:[#allocation2] sm:$0xff]
        %v341 = vld [vmem:[#allocation2 + $0x8] sm:$0xff]
        %v342 = vld [vmem:[#allocation2 + $0x10] sm:$0xff]
        %v343 = vld [vmem:[#allocation2 + $0x18] sm:$0xff]
        %v344 = vld [vmem:[#allocation2 + $0x20] sm:$0xff]
        %v345 = vld [vmem:[#allocation2 + $0x28] sm:$0xff]
        %v346 = vld [vmem:[#allocation2 + $0x30] sm:$0xff]
        %v347 = vld [vmem:[#allocation2 + $0x38] sm:$0xff]
        %v348 = vld [vmem:[#allocation2 + $0x40] sm:$0xff]
        %v349 = vld [vmem:[#allocation2 + $0x48] sm:$0xff]
        %v350 = vld [vmem:[#allocation2 + $0x50] sm:$0xff]
        %v351 = vld [vmem:[#allocation2 + $0x58] sm:$0xff]
        %v352 = vld [vmem:[#allocation2 + $0x60] sm:$0xff]
        %v353 = vld [vmem:[#allocation2 + $0x68] sm:$0xff]
        %v354 = vld [vmem:[#allocation2 + $0x70] sm:$0xff]
        %v355 = vld [vmem:[#allocation2 + $0x78] sm:$0xff]
        %v356 = vld [vmem:[#allocation2 + $0x80] sm:$0xff]
        %v357 = vld [vmem:[#allocation2 + $0x88] sm:$0xff]
        %v358 = vld [vmem:[#allocation2 + $0x90] sm:$0xff]
        %v359 = vld [vmem:[#allocation2 + $0x98] sm:$0xff]
        %v360 = vld [vmem:[#allocation2 + $0xa0] sm:$0xff]
        %v361 = vld [vmem:[#allocation2 + $0xa8] sm:$0xff]
        %v362 = vld [vmem:[#allocation2 + $0xb0] sm:$0xff]
        %v363 = vld [vmem:[#allocation2 + $0xb8] sm:$0xff]
        %v364 = vld [vmem:[#allocation2 + $0xc0] sm:$0xff]
        %v365 = vld [vmem:[#allocation2 + $0xc8] sm:$0xff]
        %v366 = vld [vmem:[#allocation2 + $0xd0] sm:$0xff]
        %v367 = vld [vmem:[#allocation2 + $0xd8] sm:$0xff]
        %v368 = vld [vmem:[#allocation2 + $0xe0] sm:$0xff]
        %v369 = vld [vmem:[#allocation2 + $0xe8] sm:$0xff]
        %v370 = vld [vmem:[#allocation2 + $0xf0] sm:$0xff]
        %v371 = vld [vmem:[#allocation2 + $0xf8] sm:$0xff]
        %v372 = vld [vmem:[#allocation2 + $0x100] sm:$0xff]
        %v373 = vld [vmem:[#allocation2 + $0x108] sm:$0xff]
        %v374 = vld [vmem:[#allocation2 + $0x110] sm:$0xff]
        %v375 = vld [vmem:[#allocation2 + $0x118] sm:$0xff]
        %v376 = vld [vmem:[%s1] sm:$0x3]
        %vm377 = vcmask 23552
        %v379 = vsel %vm377, %v322, 0
        %v382 = vsel %vm377, %v323, 0
        %v385 = vsel %vm377, %v324, 0
        %v388 = vsel %vm377, %v325, 0
        %v391 = vsel %vm377, %v326, 0
        %v394 = vsel %vm377, %v327, 0
        %v397 = vsel %vm377, %v328, 0
        %v400 = vsel %vm377, %v329, 0
        %v403 = vsel %vm377, %v330, 0
        %v406 = vsel %vm377, %v331, 0
        %v409 = vsel %vm377, %v332, 0
        %v412 = vsel %vm377, %v333, 0
        %v415 = vsel %vm377, %v334, 0
        %v418 = vsel %vm377, %v335, 0
        %v421 = vsel %vm377, %v336, 0
        %v424 = vsel %vm377, %v337, 0
        %v427 = vsel %vm377, %v338, 0
        %v430 = vsel %vm377, %v339, 0
        %vm432 = vcmask 1040384
        %vm433 = vcmask 1041408
        %v434 = vsel %vm432, 4294967295, 65535
        %v435 = vsel %vm433, %v434, 0
        %v437 = vand.u32 %v376, %v435
        %439 = vmatprep.subr.bf16.mxu0 0
        %440 = vmatpush1.bf16.msra.mxu0 0
        %441 = vmatprep.subr.bf16.mxu0 0
        %442 = vmatpush1.bf16.msra.mxu0 0
        %443 = vmatprep.subr.bf16.mxu0 0
        %444 = vmatpush1.bf16.msra.mxu0 0
        %445 = vmatprep.subr.bf16.mxu0 0
        %446 = vmatpush1.bf16.msra.mxu0 0
        %447 = vmatprep.subr.bf16.mxu0 0
        %448 = vmatpush1.bf16.msra.mxu0 0
        %449 = vmatprep.subr.bf16.mxu0 0
        %450 = vmatpush1.bf16.msra.mxu0 0
        %451 = vmatprep.subr.bf16.mxu0 0
        %452 = vmatpush1.bf16.msra.mxu0 0
        %453 = vmatprep.subr.bf16.mxu0 0
        %454 = vmatpush1.bf16.msra.mxu0 %v437
        %455 = vmatprep.subr.bf16.mxu0 0
        %456 = vmatpush2.bf16.msra.mxu0 0
        %457 = vmatprep.subr.bf16.mxu0 0
        %458 = vmatpush2.bf16.msra.mxu0 0
        %459 = vmatprep.subr.bf16.mxu0 0
        %460 = vmatpush2.bf16.msra.mxu0 0
        %461 = vmatprep.subr.bf16.mxu0 0
        %462 = vmatpush2.bf16.msra.mxu0 0
        %463 = vmatprep.subr.bf16.mxu0 0
        %464 = vmatpush2.bf16.msra.mxu0 0
        %465 = vmatprep.subr.bf16.mxu0 0
        %466 = vmatpush2.bf16.msra.mxu0 0
        %467 = vmatprep.subr.bf16.mxu0 0
        %468 = vmatpush2.bf16.msra.mxu0 0
        %469 = vmatprep.subr.bf16.mxu0 0
        %470 = vmatpush2.bf16.msra.mxu0 0
        %471 = vmatprep.mubr.bf16.mxu0 0
        %472 = vmatmul.mubr.bf16.gmra.mxu0 %v379
        %v473 = vpop.f32.mrf.mxu0
        %v474 = vadd.f32 0.0, %v473
        %v475 = vpop.f32.mrf.mxu0
        %v476 = vpop.f32.mrf.mxu0
        %v477 = vadd.f32 0.0, %v476
        %v478 = vpop.f32.mrf.mxu0
        %479 = vmatprep.mubr.bf16.mxu0 0
        %480 = vmatmul.mubr.bf16.gmra.mxu0 %v382
        %v481 = vpop.f32.mrf.mxu0
        %v482 = vadd.f32 0.0, %v481
        %v483 = vpop.f32.mrf.mxu0
        %v484 = vpop.f32.mrf.mxu0
        %v485 = vadd.f32 0.0, %v484
        %v486 = vpop.f32.mrf.mxu0
        %487 = vmatprep.mubr.bf16.mxu0 0
        %488 = vmatmul.mubr.bf16.gmra.mxu0 %v385
        %v489 = vpop.f32.mrf.mxu0
        %v490 = vadd.f32 0.0, %v489
        %v491 = vpop.f32.mrf.mxu0
        %v492 = vpop.f32.mrf.mxu0
        %v493 = vadd.f32 0.0, %v492
        %v494 = vpop.f32.mrf.mxu0
        %495 = vmatprep.mubr.bf16.mxu0 0
        %496 = vmatmul.mubr.bf16.gmra.mxu0 %v388
        %v497 = vpop.f32.mrf.mxu0
        %v498 = vadd.f32 0.0, %v497
        %v499 = vpop.f32.mrf.mxu0
        %v500 = vpop.f32.mrf.mxu0
        %v501 = vadd.f32 0.0, %v500
        %v502 = vpop.f32.mrf.mxu0
        %503 = vmatprep.mubr.bf16.mxu0 0
        %504 = vmatmul.mubr.bf16.gmra.mxu0 %v391
        %v505 = vpop.f32.mrf.mxu0
        %v506 = vadd.f32 0.0, %v505
        %v507 = vpop.f32.mrf.mxu0
        %v508 = vpop.f32.mrf.mxu0
        %v509 = vadd.f32 0.0, %v508
        %v510 = vpop.f32.mrf.mxu0
        %511 = vmatprep.mubr.bf16.mxu0 0
        %512 = vmatmul.mubr.bf16.gmra.mxu0 %v394
        %v513 = vpop.f32.mrf.mxu0
        %v514 = vadd.f32 0.0, %v513
        %v515 = vpop.f32.mrf.mxu0
        %v516 = vpop.f32.mrf.mxu0
        %v517 = vadd.f32 0.0, %v516
        %v518 = vpop.f32.mrf.mxu0
        %519 = vmatprep.mubr.bf16.mxu0 0
        %520 = vmatmul.mubr.bf16.gmra.mxu0 %v397
        %v521 = vpop.f32.mrf.mxu0
        %v522 = vadd.f32 0.0, %v521
        %v523 = vpop.f32.mrf.mxu0
        %v524 = vpop.f32.mrf.mxu0
        %v525 = vadd.f32 0.0, %v524
        %v526 = vpop.f32.mrf.mxu0
        %527 = vmatprep.mubr.bf16.mxu0 0
        %528 = vmatmul.mubr.bf16.gmra.mxu0 %v400
        %v529 = vpop.f32.mrf.mxu0
        %v530 = vadd.f32 0.0, %v529
        %v531 = vpop.f32.mrf.mxu0
        %v532 = vpop.f32.mrf.mxu0
        %v533 = vadd.f32 0.0, %v532
        %v534 = vpop.f32.mrf.mxu0
        %535 = vmatprep.mubr.bf16.mxu0 0
        %536 = vmatmul.mubr.bf16.gmra.mxu0 %v403
        %v537 = vpop.f32.mrf.mxu0
        %v538 = vadd.f32 0.0, %v537
        %v539 = vpop.f32.mrf.mxu0
        %v540 = vpop.f32.mrf.mxu0
        %v541 = vadd.f32 0.0, %v540
        %v542 = vpop.f32.mrf.mxu0
        %543 = vmatprep.mubr.bf16.mxu0 0
        %544 = vmatmul.mubr.bf16.gmra.mxu0 %v406
        %v545 = vpop.f32.mrf.mxu0
        %v546 = vadd.f32 0.0, %v545
        %v547 = vpop.f32.mrf.mxu0
        %v548 = vpop.f32.mrf.mxu0
        %v549 = vadd.f32 0.0, %v548
        %v550 = vpop.f32.mrf.mxu0
        %551 = vmatprep.mubr.bf16.mxu0 0
        %552 = vmatmul.mubr.bf16.gmra.mxu0 %v409
        %v553 = vpop.f32.mrf.mxu0
        %v554 = vadd.f32 0.0, %v553
        %v555 = vpop.f32.mrf.mxu0
        %v556 = vpop.f32.mrf.mxu0
        %v557 = vadd.f32 0.0, %v556
        %v558 = vpop.f32.mrf.mxu0
        %559 = vmatprep.mubr.bf16.mxu0 0
        %560 = vmatmul.mubr.bf16.gmra.mxu0 %v412
        %v561 = vpop.f32.mrf.mxu0
        %v562 = vadd.f32 0.0, %v561
        %v563 = vpop.f32.mrf.mxu0
        %v564 = vpop.f32.mrf.mxu0
        %v565 = vadd.f32 0.0, %v564
        %v566 = vpop.f32.mrf.mxu0
        %567 = vmatprep.mubr.bf16.mxu0 0
        %568 = vmatmul.mubr.bf16.gmra.mxu0 %v415
        %v569 = vpop.f32.mrf.mxu0
        %v570 = vadd.f32 0.0, %v569
        %v571 = vpop.f32.mrf.mxu0
        %v572 = vpop.f32.mrf.mxu0
        %v573 = vadd.f32 0.0, %v572
        %v574 = vpop.f32.mrf.mxu0
        %575 = vmatprep.mubr.bf16.mxu0 0
        %576 = vmatmul.mubr.bf16.gmra.mxu0 %v418
        %v577 = vpop.f32.mrf.mxu0
        %v578 = vadd.f32 0.0, %v577
        %v579 = vpop.f32.mrf.mxu0
        %v580 = vpop.f32.mrf.mxu0
        %v581 = vadd.f32 0.0, %v580
        %v582 = vpop.f32.mrf.mxu0
        %583 = vmatprep.mubr.bf16.mxu0 0
        %584 = vmatmul.mubr.bf16.gmra.mxu0 %v421
        %v585 = vpop.f32.mrf.mxu0
        %v586 = vadd.f32 0.0, %v585
        %v587 = vpop.f32.mrf.mxu0
        %v588 = vpop.f32.mrf.mxu0
        %v589 = vadd.f32 0.0, %v588
        %v590 = vpop.f32.mrf.mxu0
        %591 = vmatprep.mubr.bf16.mxu0 0
        %592 = vmatmul.mubr.bf16.gmra.mxu0 %v424
        %v593 = vpop.f32.mrf.mxu0
        %v594 = vadd.f32 0.0, %v593
        %v595 = vpop.f32.mrf.mxu0
        %v596 = vpop.f32.mrf.mxu0
        %v597 = vadd.f32 0.0, %v596
        %v598 = vpop.f32.mrf.mxu0
        %599 = vmatprep.mubr.bf16.mxu0 0
        %600 = vmatmul.mubr.bf16.gmra.mxu0 %v427
        %v601 = vpop.f32.mrf.mxu0
        %v602 = vadd.f32 0.0, %v601
        %v603 = vpop.f32.mrf.mxu0
        %v604 = vpop.f32.mrf.mxu0
        %v605 = vadd.f32 0.0, %v604
        %v606 = vpop.f32.mrf.mxu0
        %607 = vmatprep.mubr.bf16.mxu0 0
        %608 = vmatmul.mubr.bf16.gmra.mxu0 %v430
        %v609 = vpop.f32.mrf.mxu0
        %v610 = vadd.f32 0.0, %v609
        %v611 = vpop.f32.mrf.mxu0
        %v612 = vpop.f32.mrf.mxu0
        %v613 = vadd.f32 0.0, %v612
        %v614 = vpop.f32.mrf.mxu0
        %615 = vdwg.mxu0
        %v616 = vadd.f32 %v340, %v474
        %v617 = vadd.f32 %v341, %v477
        %v618 = vadd.f32 %v342, %v482
        %v619 = vadd.f32 %v343, %v485
        %v620 = vadd.f32 %v344, %v490
        %v621 = vadd.f32 %v345, %v493
        %v622 = vadd.f32 %v346, %v498
        %v623 = vadd.f32 %v347, %v501
        %v624 = vadd.f32 %v348, %v506
        %v625 = vadd.f32 %v349, %v509
        %v626 = vadd.f32 %v350, %v514
        %v627 = vadd.f32 %v351, %v517
        %v628 = vadd.f32 %v352, %v522
        %v629 = vadd.f32 %v353, %v525
        %v630 = vadd.f32 %v354, %v530
        %v631 = vadd.f32 %v355, %v533
        %v632 = vadd.f32 %v356, %v538
        %v633 = vadd.f32 %v357, %v541
        %v634 = vadd.f32 %v358, %v546
        %v635 = vadd.f32 %v359, %v549
        %v636 = vadd.f32 %v360, %v554
        %v637 = vadd.f32 %v361, %v557
        %v638 = vadd.f32 %v362, %v562
        %v639 = vadd.f32 %v363, %v565
        %v640 = vadd.f32 %v364, %v570
        %v641 = vadd.f32 %v365, %v573
        %v642 = vadd.f32 %v366, %v578
        %v643 = vadd.f32 %v367, %v581
        %v644 = vadd.f32 %v368, %v586
        %v645 = vadd.f32 %v369, %v589
        %v646 = vadd.f32 %v370, %v594
        %v647 = vadd.f32 %v371, %v597
        %v648 = vadd.f32 %v372, %v602
        %v649 = vadd.f32 %v373, %v605
        %v650 = vadd.f32 %v374, %v610
        %v651 = vadd.f32 %v375, %v613
        %652 = vst [vmem:[#allocation2] sm:$0xff] %v616
        %653 = vst [vmem:[#allocation2 + $0x8] sm:$0xff] %v617
        %654 = vst [vmem:[#allocation2 + $0x10] sm:$0xff] %v618
        %655 = vst [vmem:[#allocation2 + $0x18] sm:$0xff] %v619
        %656 = vst [vmem:[#allocation2 + $0x20] sm:$0xff] %v620
        %657 = vst [vmem:[#allocation2 + $0x28] sm:$0xff] %v621
        %658 = vst [vmem:[#allocation2 + $0x30] sm:$0xff] %v622
        %659 = vst [vmem:[#allocation2 + $0x38] sm:$0xff] %v623
        %660 = vst [vmem:[#allocation2 + $0x40] sm:$0xff] %v624
        %661 = vst [vmem:[#allocation2 + $0x48] sm:$0xff] %v625
        %662 = vst [vmem:[#allocation2 + $0x50] sm:$0xff] %v626
        %663 = vst [vmem:[#allocation2 + $0x58] sm:$0xff] %v627
        %664 = vst [vmem:[#allocation2 + $0x60] sm:$0xff] %v628
        %665 = vst [vmem:[#allocation2 + $0x68] sm:$0xff] %v629
        %666 = vst [vmem:[#allocation2 + $0x70] sm:$0xff] %v630
        %667 = vst [vmem:[#allocation2 + $0x78] sm:$0xff] %v631
        %668 = vst [vmem:[#allocation2 + $0x80] sm:$0xff] %v632
        %669 = vst [vmem:[#allocation2 + $0x88] sm:$0xff] %v633
        %670 = vst [vmem:[#allocation2 + $0x90] sm:$0xff] %v634
        %671 = vst [vmem:[#allocation2 + $0x98] sm:$0xff] %v635
        %672 = vst [vmem:[#allocation2 + $0xa0] sm:$0xff] %v636
        %673 = vst [vmem:[#allocation2 + $0xa8] sm:$0xff] %v637
        %674 = vst [vmem:[#allocation2 + $0xb0] sm:$0xff] %v638
        %675 = vst [vmem:[#allocation2 + $0xb8] sm:$0xff] %v639
        %676 = vst [vmem:[#allocation2 + $0xc0] sm:$0xff] %v640
        %677 = vst [vmem:[#allocation2 + $0xc8] sm:$0xff] %v641
        %678 = vst [vmem:[#allocation2 + $0xd0] sm:$0xff] %v642
        %679 = vst [vmem:[#allocation2 + $0xd8] sm:$0xff] %v643
        %680 = vst [vmem:[#allocation2 + $0xe0] sm:$0xff] %v644
        %681 = vst [vmem:[#allocation2 + $0xe8] sm:$0xff] %v645
        %682 = vst [vmem:[#allocation2 + $0xf0] sm:$0xff] %v646
        %683 = vst [vmem:[#allocation2 + $0xf8] sm:$0xff] %v647
        %684 = vst [vmem:[#allocation2 + $0x100] sm:$0xff] %v648
        %685 = vst [vmem:[#allocation2 + $0x108] sm:$0xff] %v649
        %686 = vst [vmem:[#allocation2 + $0x110] sm:$0xff] %v650
        %687 = vst [vmem:[#allocation2 + $0x118] sm:$0xff] %v651
        %v688 = vld [vmem:[%s248 + $0x1] sm:$0xff]
        %v689 = vld [vmem:[%s248 + $0x9] sm:$0xff]
        %v690 = vld [vmem:[%s248 + $0x11] sm:$0xff]
        %v691 = vld [vmem:[%s248 + $0x19] sm:$0xff]
        %v692 = vld [vmem:[%s248 + $0x21] sm:$0xff]
        %v693 = vld [vmem:[%s248 + $0x29] sm:$0xff]
        %v694 = vld [vmem:[%s248 + $0x31] sm:$0xff]
        %v695 = vld [vmem:[%s248 + $0x39] sm:$0xff]
        %v696 = vld [vmem:[%s248 + $0x41] sm:$0xff]
        %v697 = vld [vmem:[%s248 + $0x49] sm:$0xff]
        %v698 = vld [vmem:[%s248 + $0x51] sm:$0xff]
        %v699 = vld [vmem:[%s248 + $0x59] sm:$0xff]
        %v700 = vld [vmem:[%s248 + $0x61] sm:$0xff]
        %v701 = vld [vmem:[%s248 + $0x69] sm:$0xff]
        %v702 = vld [vmem:[%s248 + $0x71] sm:$0xff]
        %v703 = vld [vmem:[%s248 + $0x79] sm:$0xff]
        %v704 = vld [vmem:[%s248 + $0x81] sm:$0xff]
        %v705 = vld [vmem:[%s248 + $0x89] sm:$0xff]
        %v706 = vld [vmem:[%s248 + $0x91] sm:$0xff]
        %v707 = vld [vmem:[%s248 + $0x99] sm:$0xff]
        %v708 = vld [vmem:[%s248 + $0xa1] sm:$0xff]
        %v709 = vld [vmem:[%s248 + $0xa9] sm:$0xff]
        %v710 = vld [vmem:[%s248 + $0xb1] sm:$0xff]
        %v711 = vld [vmem:[%s248 + $0xb9] sm:$0xff]
        %v712 = vld [vmem:[%s248 + $0xc1] sm:$0xff]
        %v713 = vld [vmem:[%s248 + $0xc9] sm:$0xff]
        %v714 = vld [vmem:[%s248 + $0xd1] sm:$0xff]
        %v715 = vld [vmem:[%s248 + $0xd9] sm:$0xff]
        %v716 = vld [vmem:[%s248 + $0xe1] sm:$0xff]
        %v717 = vld [vmem:[%s248 + $0xe9] sm:$0xff]
        %v718 = vld [vmem:[%s248 + $0xf1] sm:$0xff]
        %v719 = vld [vmem:[%s248 + $0xf9] sm:$0xff]
        %v720 = vld [vmem:[%s248 + $0x101] sm:$0xff]
        %v721 = vld [vmem:[%s248 + $0x109] sm:$0xff]
        %v722 = vld [vmem:[%s248 + $0x111] sm:$0xff]
        %v723 = vld [vmem:[%s248 + $0x119] sm:$0xff]
        %v724 = vpack.c.bf16 %v689, %v688
        %v725 = vpack.c.bf16 %v691, %v690
        %v726 = vpack.c.bf16 %v693, %v692
        %v727 = vpack.c.bf16 %v695, %v694
        %v728 = vpack.c.bf16 %v697, %v696
        %v729 = vpack.c.bf16 %v699, %v698
        %v730 = vpack.c.bf16 %v701, %v700
        %v731 = vpack.c.bf16 %v703, %v702
        %v732 = vpack.c.bf16 %v705, %v704
        %v733 = vpack.c.bf16 %v707, %v706
        %v734 = vpack.c.bf16 %v709, %v708
        %v735 = vpack.c.bf16 %v711, %v710
        %v736 = vpack.c.bf16 %v713, %v712
        %v737 = vpack.c.bf16 %v715, %v714
        %v738 = vpack.c.bf16 %v717, %v716
        %v739 = vpack.c.bf16 %v719, %v718
        %v740 = vpack.c.bf16 %v721, %v720
        %v741 = vpack.c.bf16 %v723, %v722
        %v742 = vld [vmem:[#allocation2] sm:$0xff]
        %v743 = vld [vmem:[#allocation2 + $0x8] sm:$0xff]
        %v744 = vld [vmem:[#allocation2 + $0x10] sm:$0xff]
        %v745 = vld [vmem:[#allocation2 + $0x18] sm:$0xff]
        %v746 = vld [vmem:[#allocation2 + $0x20] sm:$0xff]
        %v747 = vld [vmem:[#allocation2 + $0x28] sm:$0xff]
        %v748 = vld [vmem:[#allocation2 + $0x30] sm:$0xff]
        %v749 = vld [vmem:[#allocation2 + $0x38] sm:$0xff]
        %v750 = vld [vmem:[#allocation2 + $0x40] sm:$0xff]
        %v751 = vld [vmem:[#allocation2 + $0x48] sm:$0xff]
        %v752 = vld [vmem:[#allocation2 + $0x50] sm:$0xff]
        %v753 = vld [vmem:[#allocation2 + $0x58] sm:$0xff]
        %v754 = vld [vmem:[#allocation2 + $0x60] sm:$0xff]
        %v755 = vld [vmem:[#allocation2 + $0x68] sm:$0xff]
        %v756 = vld [vmem:[#allocation2 + $0x70] sm:$0xff]
        %v757 = vld [vmem:[#allocation2 + $0x78] sm:$0xff]
        %v758 = vld [vmem:[#allocation2 + $0x80] sm:$0xff]
        %v759 = vld [vmem:[#allocation2 + $0x88] sm:$0xff]
        %v760 = vld [vmem:[#allocation2 + $0x90] sm:$0xff]
        %v761 = vld [vmem:[#allocation2 + $0x98] sm:$0xff]
        %v762 = vld [vmem:[#allocation2 + $0xa0] sm:$0xff]
        %v763 = vld [vmem:[#allocation2 + $0xa8] sm:$0xff]
        %v764 = vld [vmem:[#allocation2 + $0xb0] sm:$0xff]
        %v765 = vld [vmem:[#allocation2 + $0xb8] sm:$0xff]
        %v766 = vld [vmem:[#allocation2 + $0xc0] sm:$0xff]
        %v767 = vld [vmem:[#allocation2 + $0xc8] sm:$0xff]
        %v768 = vld [vmem:[#allocation2 + $0xd0] sm:$0xff]
        %v769 = vld [vmem:[#allocation2 + $0xd8] sm:$0xff]
        %v770 = vld [vmem:[#allocation2 + $0xe0] sm:$0xff]
        %v771 = vld [vmem:[#allocation2 + $0xe8] sm:$0xff]
        %v772 = vld [vmem:[#allocation2 + $0xf0] sm:$0xff]
        %v773 = vld [vmem:[#allocation2 + $0xf8] sm:$0xff]
        %v774 = vld [vmem:[#allocation2 + $0x100] sm:$0xff]
        %v775 = vld [vmem:[#allocation2 + $0x108] sm:$0xff]
        %v776 = vld [vmem:[#allocation2 + $0x110] sm:$0xff]
        %v777 = vld [vmem:[#allocation2 + $0x118] sm:$0xff]
        %s778 = scalar_lea.vmem %s1, 2
        %v779 = vld [vmem:[%s778] sm:$0x3]
        %v781 = vsel %vm377, %v724, 0
        %v784 = vsel %vm377, %v725, 0
        %v787 = vsel %vm377, %v726, 0
        %v790 = vsel %vm377, %v727, 0
        %v793 = vsel %vm377, %v728, 0
        %v796 = vsel %vm377, %v729, 0
        %v799 = vsel %vm377, %v730, 0
        %v802 = vsel %vm377, %v731, 0
        %v805 = vsel %vm377, %v732, 0
        %v808 = vsel %vm377, %v733, 0
        %v811 = vsel %vm377, %v734, 0
        %v814 = vsel %vm377, %v735, 0
        %v817 = vsel %vm377, %v736, 0
        %v820 = vsel %vm377, %v737, 0
        %v823 = vsel %vm377, %v738, 0
        %v826 = vsel %vm377, %v739, 0
        %v829 = vsel %vm377, %v740, 0
        %v832 = vsel %vm377, %v741, 0
        %v835 = vand.u32 %v779, %v435
        %837 = vmatprep.subr.bf16.mxu0 0
        %838 = vmatpush1.bf16.msra.mxu0 0
        %839 = vmatprep.subr.bf16.mxu0 0
        %840 = vmatpush1.bf16.msra.mxu0 0
        %841 = vmatprep.subr.bf16.mxu0 0
        %842 = vmatpush1.bf16.msra.mxu0 0
        %843 = vmatprep.subr.bf16.mxu0 0
        %844 = vmatpush1.bf16.msra.mxu0 0
        %845 = vmatprep.subr.bf16.mxu0 0
        %846 = vmatpush1.bf16.msra.mxu0 0
        %847 = vmatprep.subr.bf16.mxu0 0
        %848 = vmatpush1.bf16.msra.mxu0 0
        %849 = vmatprep.subr.bf16.mxu0 0
        %850 = vmatpush1.bf16.msra.mxu0 0
        %851 = vmatprep.subr.bf16.mxu0 0
        %852 = vmatpush1.bf16.msra.mxu0 %v835
        %853 = vmatprep.subr.bf16.mxu0 0
        %854 = vmatpush2.bf16.msra.mxu0 0
        %855 = vmatprep.subr.bf16.mxu0 0
        %856 = vmatpush2.bf16.msra.mxu0 0
        %857 = vmatprep.subr.bf16.mxu0 0
        %858 = vmatpush2.bf16.msra.mxu0 0
        %859 = vmatprep.subr.bf16.mxu0 0
        %860 = vmatpush2.bf16.msra.mxu0 0
        %861 = vmatprep.subr.bf16.mxu0 0
        %862 = vmatpush2.bf16.msra.mxu0 0
        %863 = vmatprep.subr.bf16.mxu0 0
        %864 = vmatpush2.bf16.msra.mxu0 0
        %865 = vmatprep.subr.bf16.mxu0 0
        %866 = vmatpush2.bf16.msra.mxu0 0
        %867 = vmatprep.subr.bf16.mxu0 0
        %868 = vmatpush2.bf16.msra.mxu0 0
        %869 = vmatprep.mubr.bf16.mxu0 0
        %870 = vmatmul.mubr.bf16.gmra.mxu0 %v781
        %v871 = vpop.f32.mrf.mxu0
        %v872 = vadd.f32 0.0, %v871
        %v873 = vpop.f32.mrf.mxu0
        %v874 = vpop.f32.mrf.mxu0
        %v875 = vadd.f32 0.0, %v874
        %v876 = vpop.f32.mrf.mxu0
        %877 = vmatprep.mubr.bf16.mxu0 0
        %878 = vmatmul.mubr.bf16.gmra.mxu0 %v784
        %v879 = vpop.f32.mrf.mxu0
        %v880 = vadd.f32 0.0, %v879
        %v881 = vpop.f32.mrf.mxu0
        %v882 = vpop.f32.mrf.mxu0
        %v883 = vadd.f32 0.0, %v882
        %v884 = vpop.f32.mrf.mxu0
        %885 = vmatprep.mubr.bf16.mxu0 0
        %886 = vmatmul.mubr.bf16.gmra.mxu0 %v787
        %v887 = vpop.f32.mrf.mxu0
        %v888 = vadd.f32 0.0, %v887
        %v889 = vpop.f32.mrf.mxu0
        %v890 = vpop.f32.mrf.mxu0
        %v891 = vadd.f32 0.0, %v890
        %v892 = vpop.f32.mrf.mxu0
        %893 = vmatprep.mubr.bf16.mxu0 0
        %894 = vmatmul.mubr.bf16.gmra.mxu0 %v790
        %v895 = vpop.f32.mrf.mxu0
        %v896 = vadd.f32 0.0, %v895
        %v897 = vpop.f32.mrf.mxu0
        %v898 = vpop.f32.mrf.mxu0
        %v899 = vadd.f32 0.0, %v898
        %v900 = vpop.f32.mrf.mxu0
        %901 = vmatprep.mubr.bf16.mxu0 0
        %902 = vmatmul.mubr.bf16.gmra.mxu0 %v793
        %v903 = vpop.f32.mrf.mxu0
        %v904 = vadd.f32 0.0, %v903
        %v905 = vpop.f32.mrf.mxu0
        %v906 = vpop.f32.mrf.mxu0
        %v907 = vadd.f32 0.0, %v906
        %v908 = vpop.f32.mrf.mxu0
        %909 = vmatprep.mubr.bf16.mxu0 0
        %910 = vmatmul.mubr.bf16.gmra.mxu0 %v796
        %v911 = vpop.f32.mrf.mxu0
        %v912 = vadd.f32 0.0, %v911
        %v913 = vpop.f32.mrf.mxu0
        %v914 = vpop.f32.mrf.mxu0
        %v915 = vadd.f32 0.0, %v914
        %v916 = vpop.f32.mrf.mxu0
        %917 = vmatprep.mubr.bf16.mxu0 0
        %918 = vmatmul.mubr.bf16.gmra.mxu0 %v799
        %v919 = vpop.f32.mrf.mxu0
        %v920 = vadd.f32 0.0, %v919
        %v921 = vpop.f32.mrf.mxu0
        %v922 = vpop.f32.mrf.mxu0
        %v923 = vadd.f32 0.0, %v922
        %v924 = vpop.f32.mrf.mxu0
        %925 = vmatprep.mubr.bf16.mxu0 0
        %926 = vmatmul.mubr.bf16.gmra.mxu0 %v802
        %v927 = vpop.f32.mrf.mxu0
        %v928 = vadd.f32 0.0, %v927
        %v929 = vpop.f32.mrf.mxu0
        %v930 = vpop.f32.mrf.mxu0
        %v931 = vadd.f32 0.0, %v930
        %v932 = vpop.f32.mrf.mxu0
        %933 = vmatprep.mubr.bf16.mxu0 0
        %934 = vmatmul.mubr.bf16.gmra.mxu0 %v805
        %v935 = vpop.f32.mrf.mxu0
        %v936 = vadd.f32 0.0, %v935
        %v937 = vpop.f32.mrf.mxu0
        %v938 = vpop.f32.mrf.mxu0
        %v939 = vadd.f32 0.0, %v938
        %v940 = vpop.f32.mrf.mxu0
        %941 = vmatprep.mubr.bf16.mxu0 0
        %942 = vmatmul.mubr.bf16.gmra.mxu0 %v808
        %v943 = vpop.f32.mrf.mxu0
        %v944 = vadd.f32 0.0, %v943
        %v945 = vpop.f32.mrf.mxu0
        %v946 = vpop.f32.mrf.mxu0
        %v947 = vadd.f32 0.0, %v946
        %v948 = vpop.f32.mrf.mxu0
        %949 = vmatprep.mubr.bf16.mxu0 0
        %950 = vmatmul.mubr.bf16.gmra.mxu0 %v811
        %v951 = vpop.f32.mrf.mxu0
        %v952 = vadd.f32 0.0, %v951
        %v953 = vpop.f32.mrf.mxu0
        %v954 = vpop.f32.mrf.mxu0
        %v955 = vadd.f32 0.0, %v954
        %v956 = vpop.f32.mrf.mxu0
        %957 = vmatprep.mubr.bf16.mxu0 0
        %958 = vmatmul.mubr.bf16.gmra.mxu0 %v814
        %v959 = vpop.f32.mrf.mxu0
        %v960 = vadd.f32 0.0, %v959
        %v961 = vpop.f32.mrf.mxu0
        %v962 = vpop.f32.mrf.mxu0
        %v963 = vadd.f32 0.0, %v962
        %v964 = vpop.f32.mrf.mxu0
        %965 = vmatprep.mubr.bf16.mxu0 0
        %966 = vmatmul.mubr.bf16.gmra.mxu0 %v817
        %v967 = vpop.f32.mrf.mxu0
        %v968 = vadd.f32 0.0, %v967
        %v969 = vpop.f32.mrf.mxu0
        %v970 = vpop.f32.mrf.mxu0
        %v971 = vadd.f32 0.0, %v970
        %v972 = vpop.f32.mrf.mxu0
        %973 = vmatprep.mubr.bf16.mxu0 0
        %974 = vmatmul.mubr.bf16.gmra.mxu0 %v820
        %v975 = vpop.f32.mrf.mxu0
        %v976 = vadd.f32 0.0, %v975
        %v977 = vpop.f32.mrf.mxu0
        %v978 = vpop.f32.mrf.mxu0
        %v979 = vadd.f32 0.0, %v978
        %v980 = vpop.f32.mrf.mxu0
        %981 = vmatprep.mubr.bf16.mxu0 0
        %982 = vmatmul.mubr.bf16.gmra.mxu0 %v823
        %v983 = vpop.f32.mrf.mxu0
        %v984 = vadd.f32 0.0, %v983
        %v985 = vpop.f32.mrf.mxu0
        %v986 = vpop.f32.mrf.mxu0
        %v987 = vadd.f32 0.0, %v986
        %v988 = vpop.f32.mrf.mxu0
        %989 = vmatprep.mubr.bf16.mxu0 0
        %990 = vmatmul.mubr.bf16.gmra.mxu0 %v826
        %v991 = vpop.f32.mrf.mxu0
        %v992 = vadd.f32 0.0, %v991
        %v993 = vpop.f32.mrf.mxu0
        %v994 = vpop.f32.mrf.mxu0
        %v995 = vadd.f32 0.0, %v994
        %v996 = vpop.f32.mrf.mxu0
        %997 = vmatprep.mubr.bf16.mxu0 0
        %998 = vmatmul.mubr.bf16.gmra.mxu0 %v829
        %v999 = vpop.f32.mrf.mxu0
        %v1000 = vadd.f32 0.0, %v999
        %v1001 = vpop.f32.mrf.mxu0
        %v1002 = vpop.f32.mrf.mxu0
        %v1003 = vadd.f32 0.0, %v1002
        %v1004 = vpop.f32.mrf.mxu0
        %1005 = vmatprep.mubr.bf16.mxu0 0
        %1006 = vmatmul.mubr.bf16.gmra.mxu0 %v832
        %v1007 = vpop.f32.mrf.mxu0
        %v1008 = vadd.f32 0.0, %v1007
        %v1009 = vpop.f32.mrf.mxu0
        %v1010 = vpop.f32.mrf.mxu0
        %v1011 = vadd.f32 0.0, %v1010
        %v1012 = vpop.f32.mrf.mxu0
        %1013 = vdwg.mxu0
        %v1014 = vadd.f32 %v742, %v872
        %v1015 = vadd.f32 %v743, %v875
        %v1016 = vadd.f32 %v744, %v880
        %v1017 = vadd.f32 %v745, %v883
        %v1018 = vadd.f32 %v746, %v888
        %v1019 = vadd.f32 %v747, %v891
        %v1020 = vadd.f32 %v748, %v896
        %v1021 = vadd.f32 %v749, %v899
        %v1022 = vadd.f32 %v750, %v904
        %v1023 = vadd.f32 %v751, %v907
        %v1024 = vadd.f32 %v752, %v912
        %v1025 = vadd.f32 %v753, %v915
        %v1026 = vadd.f32 %v754, %v920
        %v1027 = vadd.f32 %v755, %v923
        %v1028 = vadd.f32 %v756, %v928
        %v1029 = vadd.f32 %v757, %v931
        %v1030 = vadd.f32 %v758, %v936
        %v1031 = vadd.f32 %v759, %v939
        %v1032 = vadd.f32 %v760, %v944
        %v1033 = vadd.f32 %v761, %v947
        %v1034 = vadd.f32 %v762, %v952
        %v1035 = vadd.f32 %v763, %v955
        %v1036 = vadd.f32 %v764, %v960
        %v1037 = vadd.f32 %v765, %v963
        %v1038 = vadd.f32 %v766, %v968
        %v1039 = vadd.f32 %v767, %v971
        %v1040 = vadd.f32 %v768, %v976
        %v1041 = vadd.f32 %v769, %v979
        %v1042 = vadd.f32 %v770, %v984
        %v1043 = vadd.f32 %v771, %v987
        %v1044 = vadd.f32 %v772, %v992
        %v1045 = vadd.f32 %v773, %v995
        %v1046 = vadd.f32 %v774, %v1000
        %v1047 = vadd.f32 %v775, %v1003
        %v1048 = vadd.f32 %v776, %v1008
        %v1049 = vadd.f32 %v777, %v1011
        %1050 = vst [vmem:[#allocation2] sm:$0xff] %v1014
        %1051 = vst [vmem:[#allocation2 + $0x8] sm:$0xff] %v1015
        %1052 = vst [vmem:[#allocation2 + $0x10] sm:$0xff] %v1016
        %1053 = vst [vmem:[#allocation2 + $0x18] sm:$0xff] %v1017
        %1054 = vst [vmem:[#allocation2 + $0x20] sm:$0xff] %v1018
        %1055 = vst [vmem:[#allocation2 + $0x28] sm:$0xff] %v1019
        %1056 = vst [vmem:[#allocation2 + $0x30] sm:$0xff] %v1020
        %1057 = vst [vmem:[#allocation2 + $0x38] sm:$0xff] %v1021
        %1058 = vst [vmem:[#allocation2 + $0x40] sm:$0xff] %v1022
        %1059 = vst [vmem:[#allocation2 + $0x48] sm:$0xff] %v1023
        %1060 = vst [vmem:[#allocation2 + $0x50] sm:$0xff] %v1024
        %1061 = vst [vmem:[#allocation2 + $0x58] sm:$0xff] %v1025
        %1062 = vst [vmem:[#allocation2 + $0x60] sm:$0xff] %v1026
        %1063 = vst [vmem:[#allocation2 + $0x68] sm:$0xff] %v1027
        %1064 = vst [vmem:[#allocation2 + $0x70] sm:$0xff] %v1028
        %1065 = vst [vmem:[#allocation2 + $0x78] sm:$0xff] %v1029
        %1066 = vst [vmem:[#allocation2 + $0x80] sm:$0xff] %v1030
        %1067 = vst [vmem:[#allocation2 + $0x88] sm:$0xff] %v1031
        %1068 = vst [vmem:[#allocation2 + $0x90] sm:$0xff] %v1032
        %1069 = vst [vmem:[#allocation2 + $0x98] sm:$0xff] %v1033
        %1070 = vst [vmem:[#allocation2 + $0xa0] sm:$0xff] %v1034
        %1071 = vst [vmem:[#allocation2 + $0xa8] sm:$0xff] %v1035
        %1072 = vst [vmem:[#allocation2 + $0xb0] sm:$0xff] %v1036
        %1073 = vst [vmem:[#allocation2 + $0xb8] sm:$0xff] %v1037
        %1074 = vst [vmem:[#allocation2 + $0xc0] sm:$0xff] %v1038
        %1075 = vst [vmem:[#allocation2 + $0xc8] sm:$0xff] %v1039
        %1076 = vst [vmem:[#allocation2 + $0xd0] sm:$0xff] %v1040
        %1077 = vst [vmem:[#allocation2 + $0xd8] sm:$0xff] %v1041
        %1078 = vst [vmem:[#allocation2 + $0xe0] sm:$0xff] %v1042
        %1079 = vst [vmem:[#allocation2 + $0xe8] sm:$0xff] %v1043
        %1080 = vst [vmem:[#allocation2 + $0xf0] sm:$0xff] %v1044
        %1081 = vst [vmem:[#allocation2 + $0xf8] sm:$0xff] %v1045
        %1082 = vst [vmem:[#allocation2 + $0x100] sm:$0xff] %v1046
        %1083 = vst [vmem:[#allocation2 + $0x108] sm:$0xff] %v1047
        %1084 = vst [vmem:[#allocation2 + $0x110] sm:$0xff] %v1048
        %1085 = vst [vmem:[#allocation2 + $0x118] sm:$0xff] %v1049
        %v1086 = vld [vmem:[%s248 + $0x2] sm:$0xff]
        %v1087 = vld [vmem:[%s248 + $0xa] sm:$0xff]
        %v1088 = vld [vmem:[%s248 + $0x12] sm:$0xff]
        %v1089 = vld [vmem:[%s248 + $0x1a] sm:$0xff]
        %v1090 = vld [vmem:[%s248 + $0x22] sm:$0xff]
        %v1091 = vld [vmem:[%s248 + $0x2a] sm:$0xff]
        %v1092 = vld [vmem:[%s248 + $0x32] sm:$0xff]
        %v1093 = vld [vmem:[%s248 + $0x3a] sm:$0xff]
        %v1094 = vld [vmem:[%s248 + $0x42] sm:$0xff]
        %v1095 = vld [vmem:[%s248 + $0x4a] sm:$0xff]
        %v1096 = vld [vmem:[%s248 + $0x52] sm:$0xff]
        %v1097 = vld [vmem:[%s248 + $0x5a] sm:$0xff]
        %v1098 = vld [vmem:[%s248 + $0x62] sm:$0xff]
        %v1099 = vld [vmem:[%s248 + $0x6a] sm:$0xff]
        %v1100 = vld [vmem:[%s248 + $0x72] sm:$0xff]
        %v1101 = vld [vmem:[%s248 + $0x7a] sm:$0xff]
        %v1102 = vld [vmem:[%s248 + $0x82] sm:$0xff]
        %v1103 = vld [vmem:[%s248 + $0x8a] sm:$0xff]
        %v1104 = vld [vmem:[%s248 + $0x92] sm:$0xff]
        %v1105 = vld [vmem:[%s248 + $0x9a] sm:$0xff]
        %v1106 = vld [vmem:[%s248 + $0xa2] sm:$0xff]
        %v1107 = vld [vmem:[%s248 + $0xaa] sm:$0xff]
        %v1108 = vld [vmem:[%s248 + $0xb2] sm:$0xff]
        %v1109 = vld [vmem:[%s248 + $0xba] sm:$0xff]
        %v1110 = vld [vmem:[%s248 + $0xc2] sm:$0xff]
        %v1111 = vld [vmem:[%s248 + $0xca] sm:$0xff]
        %v1112 = vld [vmem:[%s248 + $0xd2] sm:$0xff]
        %v1113 = vld [vmem:[%s248 + $0xda] sm:$0xff]
        %v1114 = vld [vmem:[%s248 + $0xe2] sm:$0xff]
        %v1115 = vld [vmem:[%s248 + $0xea] sm:$0xff]
        %v1116 = vld [vmem:[%s248 + $0xf2] sm:$0xff]
        %v1117 = vld [vmem:[%s248 + $0xfa] sm:$0xff]
        %v1118 = vld [vmem:[%s248 + $0x102] sm:$0xff]
        %v1119 = vld [vmem:[%s248 + $0x10a] sm:$0xff]
        %v1120 = vld [vmem:[%s248 + $0x112] sm:$0xff]
        %v1121 = vld [vmem:[%s248 + $0x11a] sm:$0xff]
        %v1122 = vpack.c.bf16 %v1087, %v1086
        %v1123 = vpack.c.bf16 %v1089, %v1088
        %v1124 = vpack.c.bf16 %v1091, %v1090
        %v1125 = vpack.c.bf16 %v1093, %v1092
        %v1126 = vpack.c.bf16 %v1095, %v1094
        %v1127 = vpack.c.bf16 %v1097, %v1096
        %v1128 = vpack.c.bf16 %v1099, %v1098
        %v1129 = vpack.c.bf16 %v1101, %v1100
        %v1130 = vpack.c.bf16 %v1103, %v1102
        %v1131 = vpack.c.bf16 %v1105, %v1104
        %v1132 = vpack.c.bf16 %v1107, %v1106
        %v1133 = vpack.c.bf16 %v1109, %v1108
        %v1134 = vpack.c.bf16 %v1111, %v1110
        %v1135 = vpack.c.bf16 %v1113, %v1112
        %v1136 = vpack.c.bf16 %v1115, %v1114
        %v1137 = vpack.c.bf16 %v1117, %v1116
        %v1138 = vpack.c.bf16 %v1119, %v1118
        %v1139 = vpack.c.bf16 %v1121, %v1120
        %v1140 = vld [vmem:[#allocation2] sm:$0xff]
        %v1141 = vld [vmem:[#allocation2 + $0x8] sm:$0xff]
        %v1142 = vld [vmem:[#allocation2 + $0x10] sm:$0xff]
        %v1143 = vld [vmem:[#allocation2 + $0x18] sm:$0xff]
        %v1144 = vld [vmem:[#allocation2 + $0x20] sm:$0xff]
        %v1145 = vld [vmem:[#allocation2 + $0x28] sm:$0xff]
        %v1146 = vld [vmem:[#allocation2 + $0x30] sm:$0xff]
        %v1147 = vld [vmem:[#allocation2 + $0x38] sm:$0xff]
        %v1148 = vld [vmem:[#allocation2 + $0x40] sm:$0xff]
        %v1149 = vld [vmem:[#allocation2 + $0x48] sm:$0xff]
        %v1150 = vld [vmem:[#allocation2 + $0x50] sm:$0xff]
        %v1151 = vld [vmem:[#allocation2 + $0x58] sm:$0xff]
        %v1152 = vld [vmem:[#allocation2 + $0x60] sm:$0xff]
        %v1153 = vld [vmem:[#allocation2 + $0x68] sm:$0xff]
        %v1154 = vld [vmem:[#allocation2 + $0x70] sm:$0xff]
        %v1155 = vld [vmem:[#allocation2 + $0x78] sm:$0xff]
        %v1156 = vld [vmem:[#allocation2 + $0x80] sm:$0xff]
        %v1157 = vld [vmem:[#allocation2 + $0x88] sm:$0xff]
        %v1158 = vld [vmem:[#allocation2 + $0x90] sm:$0xff]
        %v1159 = vld [vmem:[#allocation2 + $0x98] sm:$0xff]
        %v1160 = vld [vmem:[#allocation2 + $0xa0] sm:$0xff]
        %v1161 = vld [vmem:[#allocation2 + $0xa8] sm:$0xff]
        %v1162 = vld [vmem:[#allocation2 + $0xb0] sm:$0xff]
        %v1163 = vld [vmem:[#allocation2 + $0xb8] sm:$0xff]
        %v1164 = vld [vmem:[#allocation2 + $0xc0] sm:$0xff]
        %v1165 = vld [vmem:[#allocation2 + $0xc8] sm:$0xff]
        %v1166 = vld [vmem:[#allocation2 + $0xd0] sm:$0xff]
        %v1167 = vld [vmem:[#allocation2 + $0xd8] sm:$0xff]
        %v1168 = vld [vmem:[#allocation2 + $0xe0] sm:$0xff]
        %v1169 = vld [vmem:[#allocation2 + $0xe8] sm:$0xff]
        %v1170 = vld [vmem:[#allocation2 + $0xf0] sm:$0xff]
        %v1171 = vld [vmem:[#allocation2 + $0xf8] sm:$0xff]
        %v1172 = vld [vmem:[#allocation2 + $0x100] sm:$0xff]
        %v1173 = vld [vmem:[#allocation2 + $0x108] sm:$0xff]
        %v1174 = vld [vmem:[#allocation2 + $0x110] sm:$0xff]
        %v1175 = vld [vmem:[#allocation2 + $0x118] sm:$0xff]
        %s1176 = scalar_lea.vmem %s1, 4
        %v1177 = vld [vmem:[%s1176] sm:$0x3]
        %v1179 = vsel %vm377, %v1122, 0
        %v1182 = vsel %vm377, %v1123, 0
        %v1185 = vsel %vm377, %v1124, 0
        %v1188 = vsel %vm377, %v1125, 0
        %v1191 = vsel %vm377, %v1126, 0
        %v1194 = vsel %vm377, %v1127, 0
        %v1197 = vsel %vm377, %v1128, 0
        %v1200 = vsel %vm377, %v1129, 0
        %v1203 = vsel %vm377, %v1130, 0
        %v1206 = vsel %vm377, %v1131, 0
        %v1209 = vsel %vm377, %v1132, 0
        %v1212 = vsel %vm377, %v1133, 0
        %v1215 = vsel %vm377, %v1134, 0
        %v1218 = vsel %vm377, %v1135, 0
        %v1221 = vsel %vm377, %v1136, 0
        %v1224 = vsel %vm377, %v1137, 0
        %v1227 = vsel %vm377, %v1138, 0
        %v1230 = vsel %vm377, %v1139, 0
        %v1233 = vand.u32 %v1177, %v435
        %1235 = vmatprep.subr.bf16.mxu0 0
        %1236 = vmatpush1.bf16.msra.mxu0 0
        %1237 = vmatprep.subr.bf16.mxu0 0
        %1238 = vmatpush1.bf16.msra.mxu0 0
        %1239 = vmatprep.subr.bf16.mxu0 0
        %1240 = vmatpush1.bf16.msra.mxu0 0
        %1241 = vmatprep.subr.bf16.mxu0 0
        %1242 = vmatpush1.bf16.msra.mxu0 0
        %1243 = vmatprep.subr.bf16.mxu0 0
        %1244 = vmatpush1.bf16.msra.mxu0 0
        %1245 = vmatprep.subr.bf16.mxu0 0
        %1246 = vmatpush1.bf16.msra.mxu0 0
        %1247 = vmatprep.subr.bf16.mxu0 0
        %1248 = vmatpush1.bf16.msra.mxu0 0
        %1249 = vmatprep.subr.bf16.mxu0 0
        %1250 = vmatpush1.bf16.msra.mxu0 %v1233
        %1251 = vmatprep.subr.bf16.mxu0 0
        %1252 = vmatpush2.bf16.msra.mxu0 0
        %1253 = vmatprep.subr.bf16.mxu0 0
        %1254 = vmatpush2.bf16.msra.mxu0 0
        %1255 = vmatprep.subr.bf16.mxu0 0
        %1256 = vmatpush2.bf16.msra.mxu0 0
        %1257 = vmatprep.subr.bf16.mxu0 0
        %1258 = vmatpush2.bf16.msra.mxu0 0
        %1259 = vmatprep.subr.bf16.mxu0 0
        %1260 = vmatpush2.bf16.msra.mxu0 0
        %1261 = vmatprep.subr.bf16.mxu0 0
        %1262 = vmatpush2.bf16.msra.mxu0 0
        %1263 = vmatprep.subr.bf16.mxu0 0
        %1264 = vmatpush2.bf16.msra.mxu0 0
        %1265 = vmatprep.subr.bf16.mxu0 0
        %1266 = vmatpush2.bf16.msra.mxu0 0
        %1267 = vmatprep.mubr.bf16.mxu0 0
        %1268 = vmatmul.mubr.bf16.gmra.mxu0 %v1179
        %v1269 = vpop.f32.mrf.mxu0
        %v1270 = vadd.f32 0.0, %v1269
        %v1271 = vpop.f32.mrf.mxu0
        %v1272 = vpop.f32.mrf.mxu0
        %v1273 = vadd.f32 0.0, %v1272
        %v1274 = vpop.f32.mrf.mxu0
        %1275 = vmatprep.mubr.bf16.mxu0 0
        %1276 = vmatmul.mubr.bf16.gmra.mxu0 %v1182
        %v1277 = vpop.f32.mrf.mxu0
        %v1278 = vadd.f32 0.0, %v1277
        %v1279 = vpop.f32.mrf.mxu0
        %v1280 = vpop.f32.mrf.mxu0
        %v1281 = vadd.f32 0.0, %v1280
        %v1282 = vpop.f32.mrf.mxu0
        %1283 = vmatprep.mubr.bf16.mxu0 0
        %1284 = vmatmul.mubr.bf16.gmra.mxu0 %v1185
        %v1285 = vpop.f32.mrf.mxu0
        %v1286 = vadd.f32 0.0, %v1285
        %v1287 = vpop.f32.mrf.mxu0
        %v1288 = vpop.f32.mrf.mxu0
        %v1289 = vadd.f32 0.0, %v1288
        %v1290 = vpop.f32.mrf.mxu0
        %1291 = vmatprep.mubr.bf16.mxu0 0
        %1292 = vmatmul.mubr.bf16.gmra.mxu0 %v1188
        %v1293 = vpop.f32.mrf.mxu0
        %v1294 = vadd.f32 0.0, %v1293
        %v1295 = vpop.f32.mrf.mxu0
        %v1296 = vpop.f32.mrf.mxu0
        %v1297 = vadd.f32 0.0, %v1296
        %v1298 = vpop.f32.mrf.mxu0
        %1299 = vmatprep.mubr.bf16.mxu0 0
        %1300 = vmatmul.mubr.bf16.gmra.mxu0 %v1191
        %v1301 = vpop.f32.mrf.mxu0
        %v1302 = vadd.f32 0.0, %v1301
        %v1303 = vpop.f32.mrf.mxu0
        %v1304 = vpop.f32.mrf.mxu0
        %v1305 = vadd.f32 0.0, %v1304
        %v1306 = vpop.f32.mrf.mxu0
        %1307 = vmatprep.mubr.bf16.mxu0 0
        %1308 = vmatmul.mubr.bf16.gmra.mxu0 %v1194
        %v1309 = vpop.f32.mrf.mxu0
        %v1310 = vadd.f32 0.0, %v1309
        %v1311 = vpop.f32.mrf.mxu0
        %v1312 = vpop.f32.mrf.mxu0
        %v1313 = vadd.f32 0.0, %v1312
        %v1314 = vpop.f32.mrf.mxu0
        %1315 = vmatprep.mubr.bf16.mxu0 0
        %1316 = vmatmul.mubr.bf16.gmra.mxu0 %v1197
        %v1317 = vpop.f32.mrf.mxu0
        %v1318 = vadd.f32 0.0, %v1317
        %v1319 = vpop.f32.mrf.mxu0
        %v1320 = vpop.f32.mrf.mxu0
        %v1321 = vadd.f32 0.0, %v1320
        %v1322 = vpop.f32.mrf.mxu0
        %1323 = vmatprep.mubr.bf16.mxu0 0
        %1324 = vmatmul.mubr.bf16.gmra.mxu0 %v1200
        %v1325 = vpop.f32.mrf.mxu0
        %v1326 = vadd.f32 0.0, %v1325
        %v1327 = vpop.f32.mrf.mxu0
        %v1328 = vpop.f32.mrf.mxu0
        %v1329 = vadd.f32 0.0, %v1328
        %v1330 = vpop.f32.mrf.mxu0
        %1331 = vmatprep.mubr.bf16.mxu0 0
        %1332 = vmatmul.mubr.bf16.gmra.mxu0 %v1203
        %v1333 = vpop.f32.mrf.mxu0
        %v1334 = vadd.f32 0.0, %v1333
        %v1335 = vpop.f32.mrf.mxu0
        %v1336 = vpop.f32.mrf.mxu0
        %v1337 = vadd.f32 0.0, %v1336
        %v1338 = vpop.f32.mrf.mxu0
        %1339 = vmatprep.mubr.bf16.mxu0 0
        %1340 = vmatmul.mubr.bf16.gmra.mxu0 %v1206
        %v1341 = vpop.f32.mrf.mxu0
        %v1342 = vadd.f32 0.0, %v1341
        %v1343 = vpop.f32.mrf.mxu0
        %v1344 = vpop.f32.mrf.mxu0
        %v1345 = vadd.f32 0.0, %v1344
        %v1346 = vpop.f32.mrf.mxu0
        %1347 = vmatprep.mubr.bf16.mxu0 0
        %1348 = vmatmul.mubr.bf16.gmra.mxu0 %v1209
        %v1349 = vpop.f32.mrf.mxu0
        %v1350 = vadd.f32 0.0, %v1349
        %v1351 = vpop.f32.mrf.mxu0
        %v1352 = vpop.f32.mrf.mxu0
        %v1353 = vadd.f32 0.0, %v1352
        %v1354 = vpop.f32.mrf.mxu0
        %1355 = vmatprep.mubr.bf16.mxu0 0
        %1356 = vmatmul.mubr.bf16.gmra.mxu0 %v1212
        %v1357 = vpop.f32.mrf.mxu0
        %v1358 = vadd.f32 0.0, %v1357
        %v1359 = vpop.f32.mrf.mxu0
        %v1360 = vpop.f32.mrf.mxu0
        %v1361 = vadd.f32 0.0, %v1360
        %v1362 = vpop.f32.mrf.mxu0
        %1363 = vmatprep.mubr.bf16.mxu0 0
        %1364 = vmatmul.mubr.bf16.gmra.mxu0 %v1215
        %v1365 = vpop.f32.mrf.mxu0
        %v1366 = vadd.f32 0.0, %v1365
        %v1367 = vpop.f32.mrf.mxu0
        %v1368 = vpop.f32.mrf.mxu0
        %v1369 = vadd.f32 0.0, %v1368
        %v1370 = vpop.f32.mrf.mxu0
        %1371 = vmatprep.mubr.bf16.mxu0 0
        %1372 = vmatmul.mubr.bf16.gmra.mxu0 %v1218
        %v1373 = vpop.f32.mrf.mxu0
        %v1374 = vadd.f32 0.0, %v1373
        %v1375 = vpop.f32.mrf.mxu0
        %v1376 = vpop.f32.mrf.mxu0
        %v1377 = vadd.f32 0.0, %v1376
        %v1378 = vpop.f32.mrf.mxu0
        %1379 = vmatprep.mubr.bf16.mxu0 0
        %1380 = vmatmul.mubr.bf16.gmra.mxu0 %v1221
        %v1381 = vpop.f32.mrf.mxu0
        %v1382 = vadd.f32 0.0, %v1381
        %v1383 = vpop.f32.mrf.mxu0
        %v1384 = vpop.f32.mrf.mxu0
        %v1385 = vadd.f32 0.0, %v1384
        %v1386 = vpop.f32.mrf.mxu0
        %1387 = vmatprep.mubr.bf16.mxu0 0
        %1388 = vmatmul.mubr.bf16.gmra.mxu0 %v1224
        %v1389 = vpop.f32.mrf.mxu0
        %v1390 = vadd.f32 0.0, %v1389
        %v1391 = vpop.f32.mrf.mxu0
        %v1392 = vpop.f32.mrf.mxu0
        %v1393 = vadd.f32 0.0, %v1392
        %v1394 = vpop.f32.mrf.mxu0
        %1395 = vmatprep.mubr.bf16.mxu0 0
        %1396 = vmatmul.mubr.bf16.gmra.mxu0 %v1227
        %v1397 = vpop.f32.mrf.mxu0
        %v1398 = vadd.f32 0.0, %v1397
        %v1399 = vpop.f32.mrf.mxu0
        %v1400 = vpop.f32.mrf.mxu0
        %v1401 = vadd.f32 0.0, %v1400
        %v1402 = vpop.f32.mrf.mxu0
        %1403 = vmatprep.mubr.bf16.mxu0 0
        %1404 = vmatmul.mubr.bf16.gmra.mxu0 %v1230
        %v1405 = vpop.f32.mrf.mxu0
        %v1406 = vadd.f32 0.0, %v1405
        %v1407 = vpop.f32.mrf.mxu0
        %v1408 = vpop.f32.mrf.mxu0
        %v1409 = vadd.f32 0.0, %v1408
        %v1410 = vpop.f32.mrf.mxu0
        %1411 = vdwg.mxu0
        %v1412 = vadd.f32 %v1140, %v1270
        %v1413 = vadd.f32 %v1141, %v1273
        %v1414 = vadd.f32 %v1142, %v1278
        %v1415 = vadd.f32 %v1143, %v1281
        %v1416 = vadd.f32 %v1144, %v1286
        %v1417 = vadd.f32 %v1145, %v1289
        %v1418 = vadd.f32 %v1146, %v1294
        %v1419 = vadd.f32 %v1147, %v1297
        %v1420 = vadd.f32 %v1148, %v1302
        %v1421 = vadd.f32 %v1149, %v1305
        %v1422 = vadd.f32 %v1150, %v1310
        %v1423 = vadd.f32 %v1151, %v1313
        %v1424 = vadd.f32 %v1152, %v1318
        %v1425 = vadd.f32 %v1153, %v1321
        %v1426 = vadd.f32 %v1154, %v1326
        %v1427 = vadd.f32 %v1155, %v1329
        %v1428 = vadd.f32 %v1156, %v1334
        %v1429 = vadd.f32 %v1157, %v1337
        %v1430 = vadd.f32 %v1158, %v1342
        %v1431 = vadd.f32 %v1159, %v1345
        %v1432 = vadd.f32 %v1160, %v1350
        %v1433 = vadd.f32 %v1161, %v1353
        %v1434 = vadd.f32 %v1162, %v1358
        %v1435 = vadd.f32 %v1163, %v1361
        %v1436 = vadd.f32 %v1164, %v1366
        %v1437 = vadd.f32 %v1165, %v1369
        %v1438 = vadd.f32 %v1166, %v1374
        %v1439 = vadd.f32 %v1167, %v1377
        %v1440 = vadd.f32 %v1168, %v1382
        %v1441 = vadd.f32 %v1169, %v1385
        %v1442 = vadd.f32 %v1170, %v1390
        %v1443 = vadd.f32 %v1171, %v1393
        %v1444 = vadd.f32 %v1172, %v1398
        %v1445 = vadd.f32 %v1173, %v1401
        %v1446 = vadd.f32 %v1174, %v1406
        %v1447 = vadd.f32 %v1175, %v1409
        %1448 = vst [vmem:[#allocation2] sm:$0xff] %v1412
        %1449 = vst [vmem:[#allocation2 + $0x8] sm:$0xff] %v1413
        %1450 = vst [vmem:[#allocation2 + $0x10] sm:$0xff] %v1414
        %1451 = vst [vmem:[#allocation2 + $0x18] sm:$0xff] %v1415
        %1452 = vst [vmem:[#allocation2 + $0x20] sm:$0xff] %v1416
        %1453 = vst [vmem:[#allocation2 + $0x28] sm:$0xff] %v1417
        %1454 = vst [vmem:[#allocation2 + $0x30] sm:$0xff] %v1418
        %1455 = vst [vmem:[#allocation2 + $0x38] sm:$0xff] %v1419
        %1456 = vst [vmem:[#allocation2 + $0x40] sm:$0xff] %v1420
        %1457 = vst [vmem:[#allocation2 + $0x48] sm:$0xff] %v1421
        %1458 = vst [vmem:[#allocation2 + $0x50] sm:$0xff] %v1422
        %1459 = vst [vmem:[#allocation2 + $0x58] sm:$0xff] %v1423
        %1460 = vst [vmem:[#allocation2 + $0x60] sm:$0xff] %v1424
        %1461 = vst [vmem:[#allocation2 + $0x68] sm:$0xff] %v1425
        %1462 = vst [vmem:[#allocation2 + $0x70] sm:$0xff] %v1426
        %1463 = vst [vmem:[#allocation2 + $0x78] sm:$0xff] %v1427
        %1464 = vst [vmem:[#allocation2 + $0x80] sm:$0xff] %v1428
        %1465 = vst [vmem:[#allocation2 + $0x88] sm:$0xff] %v1429
        %1466 = vst [vmem:[#allocation2 + $0x90] sm:$0xff] %v1430
        %1467 = vst [vmem:[#allocation2 + $0x98] sm:$0xff] %v1431
        %1468 = vst [vmem:[#allocation2 + $0xa0] sm:$0xff] %v1432
        %1469 = vst [vmem:[#allocation2 + $0xa8] sm:$0xff] %v1433
        %1470 = vst [vmem:[#allocation2 + $0xb0] sm:$0xff] %v1434
        %1471 = vst [vmem:[#allocation2 + $0xb8] sm:$0xff] %v1435
        %1472 = vst [vmem:[#allocation2 + $0xc0] sm:$0xff] %v1436
        %1473 = vst [vmem:[#allocation2 + $0xc8] sm:$0xff] %v1437
        %1474 = vst [vmem:[#allocation2 + $0xd0] sm:$0xff] %v1438
        %1475 = vst [vmem:[#allocation2 + $0xd8] sm:$0xff] %v1439
        %1476 = vst [vmem:[#allocation2 + $0xe0] sm:$0xff] %v1440
        %1477 = vst [vmem:[#allocation2 + $0xe8] sm:$0xff] %v1441
        %1478 = vst [vmem:[#allocation2 + $0xf0] sm:$0xff] %v1442
        %1479 = vst [vmem:[#allocation2 + $0xf8] sm:$0xff] %v1443
        %1480 = vst [vmem:[#allocation2 + $0x100] sm:$0xff] %v1444
        %1481 = vst [vmem:[#allocation2 + $0x108] sm:$0xff] %v1445
        %1482 = vst [vmem:[#allocation2 + $0x110] sm:$0xff] %v1446
        %1483 = vst [vmem:[#allocation2 + $0x118] sm:$0xff] %v1447
        %v1484 = vld [vmem:[%s248 + $0x12] sm:$0xff]
        %v1485 = vld [vmem:[%s248 + $0x1a] sm:$0xff]
        %v1486 = vld [vmem:[%s248 + $0x22] sm:$0xff]
        %v1487 = vld [vmem:[%s248 + $0x2a] sm:$0xff]
        %v1488 = vld [vmem:[%s248 + $0x32] sm:$0xff]
        %v1489 = vld [vmem:[%s248 + $0x3a] sm:$0xff]
        %v1490 = vld [vmem:[%s248 + $0x42] sm:$0xff]
        %v1491 = vld [vmem:[%s248 + $0x4a] sm:$0xff]
        %v1492 = vld [vmem:[%s248 + $0x52] sm:$0xff]
        %v1493 = vld [vmem:[%s248 + $0x5a] sm:$0xff]
        %v1494 = vld [vmem:[%s248 + $0x62] sm:$0xff]
        %v1495 = vld [vmem:[%s248 + $0x6a] sm:$0xff]
        %v1496 = vld [vmem:[%s248 + $0x72] sm:$0xff]
        %v1497 = vld [vmem:[%s248 + $0x7a] sm:$0xff]
        %v1498 = vld [vmem:[%s248 + $0x82] sm:$0xff]
        %v1499 = vld [vmem:[%s248 + $0x8a] sm:$0xff]
        %v1500 = vld [vmem:[%s248 + $0x92] sm:$0xff]
        %v1501 = vld [vmem:[%s248 + $0x9a] sm:$0xff]
        %v1502 = vld [vmem:[%s248 + $0xa2] sm:$0xff]
        %v1503 = vld [vmem:[%s248 + $0xaa] sm:$0xff]
        %v1504 = vld [vmem:[%s248 + $0xb2] sm:$0xff]
        %v1505 = vld [vmem:[%s248 + $0xba] sm:$0xff]
        %v1506 = vld [vmem:[%s248 + $0xc2] sm:$0xff]
        %v1507 = vld [vmem:[%s248 + $0xca] sm:$0xff]
        %v1508 = vld [vmem:[%s248 + $0xd2] sm:$0xff]
        %v1509 = vld [vmem:[%s248 + $0xda] sm:$0xff]
        %v1510 = vld [vmem:[%s248 + $0xe2] sm:$0xff]
        %v1511 = vld [vmem:[%s248 + $0xea] sm:$0xff]
        %v1512 = vld [vmem:[%s248 + $0xf2] sm:$0xff]
        %v1513 = vld [vmem:[%s248 + $0xfa] sm:$0xff]
        %v1514 = vld [vmem:[%s248 + $0x102] sm:$0xff]
        %v1515 = vld [vmem:[%s248 + $0x10a] sm:$0xff]
        %v1516 = vld [vmem:[%s248 + $0x112] sm:$0xff]
        %v1517 = vld [vmem:[%s248 + $0x11a] sm:$0xff]
        %v1518 = vld [vmem:[%s248 + $0x122] sm:$0xff]
        %v1519 = vld [vmem:[%s248 + $0x12a] sm:$0xff]
        %v1520 = vpack.c.bf16 %v1485, %v1484
        %v1521 = vpack.c.bf16 %v1487, %v1486
        %v1522 = vpack.c.bf16 %v1489, %v1488
        %v1523 = vpack.c.bf16 %v1491, %v1490
        %v1524 = vpack.c.bf16 %v1493, %v1492
        %v1525 = vpack.c.bf16 %v1495, %v1494
        %v1526 = vpack.c.bf16 %v1497, %v1496
        %v1527 = vpack.c.bf16 %v1499, %v1498
        %v1528 = vpack.c.bf16 %v1501, %v1500
        %v1529 = vpack.c.bf16 %v1503, %v1502
        %v1530 = vpack.c.bf16 %v1505, %v1504
        %v1531 = vpack.c.bf16 %v1507, %v1506
        %v1532 = vpack.c.bf16 %v1509, %v1508
        %v1533 = vpack.c.bf16 %v1511, %v1510
        %v1534 = vpack.c.bf16 %v1513, %v1512
        %v1535 = vpack.c.bf16 %v1515, %v1514
        %v1536 = vpack.c.bf16 %v1517, %v1516
        %v1537 = vpack.c.bf16 %v1519, %v1518
        %v1538 = vld [vmem:[#allocation2] sm:$0xff]
        %v1539 = vld [vmem:[#allocation2 + $0x8] sm:$0xff]
        %v1540 = vld [vmem:[#allocation2 + $0x10] sm:$0xff]
        %v1541 = vld [vmem:[#allocation2 + $0x18] sm:$0xff]
        %v1542 = vld [vmem:[#allocation2 + $0x20] sm:$0xff]
        %v1543 = vld [vmem:[#allocation2 + $0x28] sm:$0xff]
        %v1544 = vld [vmem:[#allocation2 + $0x30] sm:$0xff]
        %v1545 = vld [vmem:[#allocation2 + $0x38] sm:$0xff]
        %v1546 = vld [vmem:[#allocation2 + $0x40] sm:$0xff]
        %v1547 = vld [vmem:[#allocation2 + $0x48] sm:$0xff]
        %v1548 = vld [vmem:[#allocation2 + $0x50] sm:$0xff]
        %v1549 = vld [vmem:[#allocation2 + $0x58] sm:$0xff]
        %v1550 = vld [vmem:[#allocation2 + $0x60] sm:$0xff]
        %v1551 = vld [vmem:[#allocation2 + $0x68] sm:$0xff]
        %v1552 = vld [vmem:[#allocation2 + $0x70] sm:$0xff]
        %v1553 = vld [vmem:[#allocation2 + $0x78] sm:$0xff]
        %v1554 = vld [vmem:[#allocation2 + $0x80] sm:$0xff]
        %v1555 = vld [vmem:[#allocation2 + $0x88] sm:$0xff]
        %v1556 = vld [vmem:[#allocation2 + $0x90] sm:$0xff]
        %v1557 = vld [vmem:[#allocation2 + $0x98] sm:$0xff]
        %v1558 = vld [vmem:[#allocation2 + $0xa0] sm:$0xff]
        %v1559 = vld [vmem:[#allocation2 + $0xa8] sm:$0xff]
        %v1560 = vld [vmem:[#allocation2 + $0xb0] sm:$0xff]
        %v1561 = vld [vmem:[#allocation2 + $0xb8] sm:$0xff]
        %v1562 = vld [vmem:[#allocation2 + $0xc0] sm:$0xff]
        %v1563 = vld [vmem:[#allocation2 + $0xc8] sm:$0xff]
        %v1564 = vld [vmem:[#allocation2 + $0xd0] sm:$0xff]
        %v1565 = vld [vmem:[#allocation2 + $0xd8] sm:$0xff]
        %v1566 = vld [vmem:[#allocation2 + $0xe0] sm:$0xff]
        %v1567 = vld [vmem:[#allocation2 + $0xe8] sm:$0xff]
        %v1568 = vld [vmem:[#allocation2 + $0xf0] sm:$0xff]
        %v1569 = vld [vmem:[#allocation2 + $0xf8] sm:$0xff]
        %v1570 = vld [vmem:[#allocation2 + $0x100] sm:$0xff]
        %v1571 = vld [vmem:[#allocation2 + $0x108] sm:$0xff]
        %v1572 = vld [vmem:[#allocation2 + $0x110] sm:$0xff]
        %v1573 = vld [vmem:[#allocation2 + $0x118] sm:$0xff]
        %s1574 = scalar_lea.vmem %s1, 6
        %v1575 = vld [vmem:[%s1574] sm:$0x3]
        %v1577 = vsel %vm377, %v1520, 0
        %v1580 = vsel %vm377, %v1521, 0
        %v1583 = vsel %vm377, %v1522, 0
        %v1586 = vsel %vm377, %v1523, 0
        %v1589 = vsel %vm377, %v1524, 0
        %v1592 = vsel %vm377, %v1525, 0
        %v1595 = vsel %vm377, %v1526, 0
        %v1598 = vsel %vm377, %v1527, 0
        %v1601 = vsel %vm377, %v1528, 0
        %v1604 = vsel %vm377, %v1529, 0
        %v1607 = vsel %vm377, %v1530, 0
        %v1610 = vsel %vm377, %v1531, 0
        %v1613 = vsel %vm377, %v1532, 0
        %v1616 = vsel %vm377, %v1533, 0
        %v1619 = vsel %vm377, %v1534, 0
        %v1622 = vsel %vm377, %v1535, 0
        %v1625 = vsel %vm377, %v1536, 0
        %v1628 = vsel %vm377, %v1537, 0
        %v1631 = vand.u32 %v1575, %v435
        %1633 = vmatprep.subr.bf16.mxu0 0
        %1634 = vmatpush1.bf16.msra.mxu0 0
        %1635 = vmatprep.subr.bf16.mxu0 0
        %1636 = vmatpush1.bf16.msra.mxu0 0
        %1637 = vmatprep.subr.bf16.mxu0 0
        %1638 = vmatpush1.bf16.msra.mxu0 0
        %1639 = vmatprep.subr.bf16.mxu0 0
        %1640 = vmatpush1.bf16.msra.mxu0 0
        %1641 = vmatprep.subr.bf16.mxu0 0
        %1642 = vmatpush1.bf16.msra.mxu0 0
        %1643 = vmatprep.subr.bf16.mxu0 0
        %1644 = vmatpush1.bf16.msra.mxu0 0
        %1645 = vmatprep.subr.bf16.mxu0 0
        %1646 = vmatpush1.bf16.msra.mxu0 0
        %1647 = vmatprep.subr.bf16.mxu0 0
        %1648 = vmatpush1.bf16.msra.mxu0 %v1631
        %1649 = vmatprep.subr.bf16.mxu0 0
        %1650 = vmatpush2.bf16.msra.mxu0 0
        %1651 = vmatprep.subr.bf16.mxu0 0
        %1652 = vmatpush2.bf16.msra.mxu0 0
        %1653 = vmatprep.subr.bf16.mxu0 0
        %1654 = vmatpush2.bf16.msra.mxu0 0
        %1655 = vmatprep.subr.bf16.mxu0 0
        %1656 = vmatpush2.bf16.msra.mxu0 0
        %1657 = vmatprep.subr.bf16.mxu0 0
        %1658 = vmatpush2.bf16.msra.mxu0 0
        %1659 = vmatprep.subr.bf16.mxu0 0
        %1660 = vmatpush2.bf16.msra.mxu0 0
        %1661 = vmatprep.subr.bf16.mxu0 0
        %1662 = vmatpush2.bf16.msra.mxu0 0
        %1663 = vmatprep.subr.bf16.mxu0 0
        %1664 = vmatpush2.bf16.msra.mxu0 0
        %1665 = vmatprep.mubr.bf16.mxu0 0
        %1666 = vmatmul.mubr.bf16.gmra.mxu0 %v1577
        %v1667 = vpop.f32.mrf.mxu0
        %v1668 = vadd.f32 0.0, %v1667
        %v1669 = vpop.f32.mrf.mxu0
        %v1670 = vpop.f32.mrf.mxu0
        %v1671 = vadd.f32 0.0, %v1670
        %v1672 = vpop.f32.mrf.mxu0
        %1673 = vmatprep.mubr.bf16.mxu0 0
        %1674 = vmatmul.mubr.bf16.gmra.mxu0 %v1580
        %v1675 = vpop.f32.mrf.mxu0
        %v1676 = vadd.f32 0.0, %v1675
        %v1677 = vpop.f32.mrf.mxu0
        %v1678 = vpop.f32.mrf.mxu0
        %v1679 = vadd.f32 0.0, %v1678
        %v1680 = vpop.f32.mrf.mxu0
        %1681 = vmatprep.mubr.bf16.mxu0 0
        %1682 = vmatmul.mubr.bf16.gmra.mxu0 %v1583
        %v1683 = vpop.f32.mrf.mxu0
        %v1684 = vadd.f32 0.0, %v1683
        %v1685 = vpop.f32.mrf.mxu0
        %v1686 = vpop.f32.mrf.mxu0
        %v1687 = vadd.f32 0.0, %v1686
        %v1688 = vpop.f32.mrf.mxu0
        %1689 = vmatprep.mubr.bf16.mxu0 0
        %1690 = vmatmul.mubr.bf16.gmra.mxu0 %v1586
        %v1691 = vpop.f32.mrf.mxu0
        %v1692 = vadd.f32 0.0, %v1691
        %v1693 = vpop.f32.mrf.mxu0
        %v1694 = vpop.f32.mrf.mxu0
        %v1695 = vadd.f32 0.0, %v1694
        %v1696 = vpop.f32.mrf.mxu0
        %1697 = vmatprep.mubr.bf16.mxu0 0
        %1698 = vmatmul.mubr.bf16.gmra.mxu0 %v1589
        %v1699 = vpop.f32.mrf.mxu0
        %v1700 = vadd.f32 0.0, %v1699
        %v1701 = vpop.f32.mrf.mxu0
        %v1702 = vpop.f32.mrf.mxu0
        %v1703 = vadd.f32 0.0, %v1702
        %v1704 = vpop.f32.mrf.mxu0
        %1705 = vmatprep.mubr.bf16.mxu0 0
        %1706 = vmatmul.mubr.bf16.gmra.mxu0 %v1592
        %v1707 = vpop.f32.mrf.mxu0
        %v1708 = vadd.f32 0.0, %v1707
        %v1709 = vpop.f32.mrf.mxu0
        %v1710 = vpop.f32.mrf.mxu0
        %v1711 = vadd.f32 0.0, %v1710
        %v1712 = vpop.f32.mrf.mxu0
        %1713 = vmatprep.mubr.bf16.mxu0 0
        %1714 = vmatmul.mubr.bf16.gmra.mxu0 %v1595
        %v1715 = vpop.f32.mrf.mxu0
        %v1716 = vadd.f32 0.0, %v1715
        %v1717 = vpop.f32.mrf.mxu0
        %v1718 = vpop.f32.mrf.mxu0
        %v1719 = vadd.f32 0.0, %v1718
        %v1720 = vpop.f32.mrf.mxu0
        %1721 = vmatprep.mubr.bf16.mxu0 0
        %1722 = vmatmul.mubr.bf16.gmra.mxu0 %v1598
        %v1723 = vpop.f32.mrf.mxu0
        %v1724 = vadd.f32 0.0, %v1723
        %v1725 = vpop.f32.mrf.mxu0
        %v1726 = vpop.f32.mrf.mxu0
        %v1727 = vadd.f32 0.0, %v1726
        %v1728 = vpop.f32.mrf.mxu0
        %1729 = vmatprep.mubr.bf16.mxu0 0
        %1730 = vmatmul.mubr.bf16.gmra.mxu0 %v1601
        %v1731 = vpop.f32.mrf.mxu0
        %v1732 = vadd.f32 0.0, %v1731
        %v1733 = vpop.f32.mrf.mxu0
        %v1734 = vpop.f32.mrf.mxu0
        %v1735 = vadd.f32 0.0, %v1734
        %v1736 = vpop.f32.mrf.mxu0
        %1737 = vmatprep.mubr.bf16.mxu0 0
        %1738 = vmatmul.mubr.bf16.gmra.mxu0 %v1604
        %v1739 = vpop.f32.mrf.mxu0
        %v1740 = vadd.f32 0.0, %v1739
        %v1741 = vpop.f32.mrf.mxu0
        %v1742 = vpop.f32.mrf.mxu0
        %v1743 = vadd.f32 0.0, %v1742
        %v1744 = vpop.f32.mrf.mxu0
        %1745 = vmatprep.mubr.bf16.mxu0 0
        %1746 = vmatmul.mubr.bf16.gmra.mxu0 %v1607
        %v1747 = vpop.f32.mrf.mxu0
        %v1748 = vadd.f32 0.0, %v1747
        %v1749 = vpop.f32.mrf.mxu0
        %v1750 = vpop.f32.mrf.mxu0
        %v1751 = vadd.f32 0.0, %v1750
        %v1752 = vpop.f32.mrf.mxu0
        %1753 = vmatprep.mubr.bf16.mxu0 0
        %1754 = vmatmul.mubr.bf16.gmra.mxu0 %v1610
        %v1755 = vpop.f32.mrf.mxu0
        %v1756 = vadd.f32 0.0, %v1755
        %v1757 = vpop.f32.mrf.mxu0
        %v1758 = vpop.f32.mrf.mxu0
        %v1759 = vadd.f32 0.0, %v1758
        %v1760 = vpop.f32.mrf.mxu0
        %1761 = vmatprep.mubr.bf16.mxu0 0
        %1762 = vmatmul.mubr.bf16.gmra.mxu0 %v1613
        %v1763 = vpop.f32.mrf.mxu0
        %v1764 = vadd.f32 0.0, %v1763
        %v1765 = vpop.f32.mrf.mxu0
        %v1766 = vpop.f32.mrf.mxu0
        %v1767 = vadd.f32 0.0, %v1766
        %v1768 = vpop.f32.mrf.mxu0
        %1769 = vmatprep.mubr.bf16.mxu0 0
        %1770 = vmatmul.mubr.bf16.gmra.mxu0 %v1616
        %v1771 = vpop.f32.mrf.mxu0
        %v1772 = vadd.f32 0.0, %v1771
        %v1773 = vpop.f32.mrf.mxu0
        %v1774 = vpop.f32.mrf.mxu0
        %v1775 = vadd.f32 0.0, %v1774
        %v1776 = vpop.f32.mrf.mxu0
        %1777 = vmatprep.mubr.bf16.mxu0 0
        %1778 = vmatmul.mubr.bf16.gmra.mxu0 %v1619
        %v1779 = vpop.f32.mrf.mxu0
        %v1780 = vadd.f32 0.0, %v1779
        %v1781 = vpop.f32.mrf.mxu0
        %v1782 = vpop.f32.mrf.mxu0
        %v1783 = vadd.f32 0.0, %v1782
        %v1784 = vpop.f32.mrf.mxu0
        %1785 = vmatprep.mubr.bf16.mxu0 0
        %1786 = vmatmul.mubr.bf16.gmra.mxu0 %v1622
        %v1787 = vpop.f32.mrf.mxu0
        %v1788 = vadd.f32 0.0, %v1787
        %v1789 = vpop.f32.mrf.mxu0
        %v1790 = vpop.f32.mrf.mxu0
        %v1791 = vadd.f32 0.0, %v1790
        %v1792 = vpop.f32.mrf.mxu0
        %1793 = vmatprep.mubr.bf16.mxu0 0
        %1794 = vmatmul.mubr.bf16.gmra.mxu0 %v1625
        %v1795 = vpop.f32.mrf.mxu0
        %v1796 = vadd.f32 0.0, %v1795
        %v1797 = vpop.f32.mrf.mxu0
        %v1798 = vpop.f32.mrf.mxu0
        %v1799 = vadd.f32 0.0, %v1798
        %v1800 = vpop.f32.mrf.mxu0
        %1801 = vmatprep.mubr.bf16.mxu0 0
        %1802 = vmatmul.mubr.bf16.gmra.mxu0 %v1628
        %v1803 = vpop.f32.mrf.mxu0
        %v1804 = vadd.f32 0.0, %v1803
        %v1805 = vpop.f32.mrf.mxu0
        %v1806 = vpop.f32.mrf.mxu0
        %v1807 = vadd.f32 0.0, %v1806
        %v1808 = vpop.f32.mrf.mxu0
        %1809 = vdwg.mxu0
        %v1810 = vadd.f32 %v1538, %v1668
        %v1811 = vadd.f32 %v1539, %v1671
        %v1812 = vadd.f32 %v1540, %v1676
        %v1813 = vadd.f32 %v1541, %v1679
        %v1814 = vadd.f32 %v1542, %v1684
        %v1815 = vadd.f32 %v1543, %v1687
        %v1816 = vadd.f32 %v1544, %v1692
        %v1817 = vadd.f32 %v1545, %v1695
        %v1818 = vadd.f32 %v1546, %v1700
        %v1819 = vadd.f32 %v1547, %v1703
        %v1820 = vadd.f32 %v1548, %v1708
        %v1821 = vadd.f32 %v1549, %v1711
        %v1822 = vadd.f32 %v1550, %v1716
        %v1823 = vadd.f32 %v1551, %v1719
        %v1824 = vadd.f32 %v1552, %v1724
        %v1825 = vadd.f32 %v1553, %v1727
        %v1826 = vadd.f32 %v1554, %v1732
        %v1827 = vadd.f32 %v1555, %v1735
        %v1828 = vadd.f32 %v1556, %v1740
        %v1829 = vadd.f32 %v1557, %v1743
        %v1830 = vadd.f32 %v1558, %v1748
        %v1831 = vadd.f32 %v1559, %v1751
        %v1832 = vadd.f32 %v1560, %v1756
        %v1833 = vadd.f32 %v1561, %v1759
        %v1834 = vadd.f32 %v1562, %v1764
        %v1835 = vadd.f32 %v1563, %v1767
        %v1836 = vadd.f32 %v1564, %v1772
        %v1837 = vadd.f32 %v1565, %v1775
        %v1838 = vadd.f32 %v1566, %v1780
        %v1839 = vadd.f32 %v1567, %v1783
        %v1840 = vadd.f32 %v1568, %v1788
        %v1841 = vadd.f32 %v1569, %v1791
        %v1842 = vadd.f32 %v1570, %v1796
        %v1843 = vadd.f32 %v1571, %v1799
        %v1844 = vadd.f32 %v1572, %v1804
        %v1845 = vadd.f32 %v1573, %v1807
        %1846 = vst [vmem:[#allocation2] sm:$0xff] %v1810
        %1847 = vst [vmem:[#allocation2 + $0x8] sm:$0xff] %v1811
        %1848 = vst [vmem:[#allocation2 + $0x10] sm:$0xff] %v1812
        %1849 = vst [vmem:[#allocation2 + $0x18] sm:$0xff] %v1813
        %1850 = vst [vmem:[#allocation2 + $0x20] sm:$0xff] %v1814
        %1851 = vst [vmem:[#allocation2 + $0x28] sm:$0xff] %v1815
        %1852 = vst [vmem:[#allocation2 + $0x30] sm:$0xff] %v1816
        %1853 = vst [vmem:[#allocation2 + $0x38] sm:$0xff] %v1817
        %1854 = vst [vmem:[#allocation2 + $0x40] sm:$0xff] %v1818
        %1855 = vst [vmem:[#allocation2 + $0x48] sm:$0xff] %v1819
        %1856 = vst [vmem:[#allocation2 + $0x50] sm:$0xff] %v1820
        %1857 = vst [vmem:[#allocation2 + $0x58] sm:$0xff] %v1821
        %1858 = vst [vmem:[#allocation2 + $0x60] sm:$0xff] %v1822
        %1859 = vst [vmem:[#allocation2 + $0x68] sm:$0xff] %v1823
        %1860 = vst [vmem:[#allocation2 + $0x70] sm:$0xff] %v1824
        %1861 = vst [vmem:[#allocation2 + $0x78] sm:$0xff] %v1825
        %1862 = vst [vmem:[#allocation2 + $0x80] sm:$0xff] %v1826
        %1863 = vst [vmem:[#allocation2 + $0x88] sm:$0xff] %v1827
        %1864 = vst [vmem:[#allocation2 + $0x90] sm:$0xff] %v1828
        %1865 = vst [vmem:[#allocation2 + $0x98] sm:$0xff] %v1829
        %1866 = vst [vmem:[#allocation2 + $0xa0] sm:$0xff] %v1830
        %1867 = vst [vmem:[#allocation2 + $0xa8] sm:$0xff] %v1831
        %1868 = vst [vmem:[#allocation2 + $0xb0] sm:$0xff] %v1832
        %1869 = vst [vmem:[#allocation2 + $0xb8] sm:$0xff] %v1833
        %1870 = vst [vmem:[#allocation2 + $0xc0] sm:$0xff] %v1834
        %1871 = vst [vmem:[#allocation2 + $0xc8] sm:$0xff] %v1835
        %1872 = vst [vmem:[#allocation2 + $0xd0] sm:$0xff] %v1836
        %1873 = vst [vmem:[#allocation2 + $0xd8] sm:$0xff] %v1837
        %1874 = vst [vmem:[#allocation2 + $0xe0] sm:$0xff] %v1838
        %1875 = vst [vmem:[#allocation2 + $0xe8] sm:$0xff] %v1839
        %1876 = vst [vmem:[#allocation2 + $0xf0] sm:$0xff] %v1840
        %1877 = vst [vmem:[#allocation2 + $0xf8] sm:$0xff] %v1841
        %1878 = vst [vmem:[#allocation2 + $0x100] sm:$0xff] %v1842
        %1879 = vst [vmem:[#allocation2 + $0x108] sm:$0xff] %v1843
        %1880 = vst [vmem:[#allocation2 + $0x110] sm:$0xff] %v1844
        %1881 = vst [vmem:[#allocation2 + $0x118] sm:$0xff] %v1845
        %v1882 = vld [vmem:[%s248 + $0x13] sm:$0xff]
        %v1883 = vld [vmem:[%s248 + $0x1b] sm:$0xff]
        %v1884 = vld [vmem:[%s248 + $0x23] sm:$0xff]
        %v1885 = vld [vmem:[%s248 + $0x2b] sm:$0xff]
        %v1886 = vld [vmem:[%s248 + $0x33] sm:$0xff]
        %v1887 = vld [vmem:[%s248 + $0x3b] sm:$0xff]
        %v1888 = vld [vmem:[%s248 + $0x43] sm:$0xff]
        %v1889 = vld [vmem:[%s248 + $0x4b] sm:$0xff]
        %v1890 = vld [vmem:[%s248 + $0x53] sm:$0xff]
        %v1891 = vld [vmem:[%s248 + $0x5b] sm:$0xff]
        %v1892 = vld [vmem:[%s248 + $0x63] sm:$0xff]
        %v1893 = vld [vmem:[%s248 + $0x6b] sm:$0xff]
        %v1894 = vld [vmem:[%s248 + $0x73] sm:$0xff]
        %v1895 = vld [vmem:[%s248 + $0x7b] sm:$0xff]
        %v1896 = vld [vmem:[%s248 + $0x83] sm:$0xff]
        %v1897 = vld [vmem:[%s248 + $0x8b] sm:$0xff]
        %v1898 = vld [vmem:[%s248 + $0x93] sm:$0xff]
        %v1899 = vld [vmem:[%s248 + $0x9b] sm:$0xff]
        %v1900 = vld [vmem:[%s248 + $0xa3] sm:$0xff]
        %v1901 = vld [vmem:[%s248 + $0xab] sm:$0xff]
        %v1902 = vld [vmem:[%s248 + $0xb3] sm:$0xff]
        %v1903 = vld [vmem:[%s248 + $0xbb] sm:$0xff]
        %v1904 = vld [vmem:[%s248 + $0xc3] sm:$0xff]
        %v1905 = vld [vmem:[%s248 + $0xcb] sm:$0xff]
        %v1906 = vld [vmem:[%s248 + $0xd3] sm:$0xff]
        %v1907 = vld [vmem:[%s248 + $0xdb] sm:$0xff]
        %v1908 = vld [vmem:[%s248 + $0xe3] sm:$0xff]
        %v1909 = vld [vmem:[%s248 + $0xeb] sm:$0xff]
        %v1910 = vld [vmem:[%s248 + $0xf3] sm:$0xff]
        %v1911 = vld [vmem:[%s248 + $0xfb] sm:$0xff]
        %v1912 = vld [vmem:[%s248 + $0x103] sm:$0xff]
        %v1913 = vld [vmem:[%s248 + $0x10b] sm:$0xff]
        %v1914 = vld [vmem:[%s248 + $0x113] sm:$0xff]
        %v1915 = vld [vmem:[%s248 + $0x11b] sm:$0xff]
        %v1916 = vld [vmem:[%s248 + $0x123] sm:$0xff]
        %v1917 = vld [vmem:[%s248 + $0x12b] sm:$0xff]
        %v1918 = vpack.c.bf16 %v1883, %v1882
        %v1919 = vpack.c.bf16 %v1885, %v1884
        %v1920 = vpack.c.bf16 %v1887, %v1886
        %v1921 = vpack.c.bf16 %v1889, %v1888
        %v1922 = vpack.c.bf16 %v1891, %v1890
        %v1923 = vpack.c.bf16 %v1893, %v1892
        %v1924 = vpack.c.bf16 %v1895, %v1894
        %v1925 = vpack.c.bf16 %v1897, %v1896
        %v1926 = vpack.c.bf16 %v1899, %v1898
        %v1927 = vpack.c.bf16 %v1901, %v1900
        %v1928 = vpack.c.bf16 %v1903, %v1902
        %v1929 = vpack.c.bf16 %v1905, %v1904
        %v1930 = vpack.c.bf16 %v1907, %v1906
        %v1931 = vpack.c.bf16 %v1909, %v1908
        %v1932 = vpack.c.bf16 %v1911, %v1910
        %v1933 = vpack.c.bf16 %v1913, %v1912
        %v1934 = vpack.c.bf16 %v1915, %v1914
        %v1935 = vpack.c.bf16 %v1917, %v1916
        %v1936 = vld [vmem:[#allocation2] sm:$0xff]
        %v1937 = vld [vmem:[#allocation2 + $0x8] sm:$0xff]
        %v1938 = vld [vmem:[#allocation2 + $0x10] sm:$0xff]
        %v1939 = vld [vmem:[#allocation2 + $0x18] sm:$0xff]
        %v1940 = vld [vmem:[#allocation2 + $0x20] sm:$0xff]
        %v1941 = vld [vmem:[#allocation2 + $0x28] sm:$0xff]
        %v1942 = vld [vmem:[#allocation2 + $0x30] sm:$0xff]
        %v1943 = vld [vmem:[#allocation2 + $0x38] sm:$0xff]
        %v1944 = vld [vmem:[#allocation2 + $0x40] sm:$0xff]
        %v1945 = vld [vmem:[#allocation2 + $0x48] sm:$0xff]
        %v1946 = vld [vmem:[#allocation2 + $0x50] sm:$0xff]
        %v1947 = vld [vmem:[#allocation2 + $0x58] sm:$0xff]
        %v1948 = vld [vmem:[#allocation2 + $0x60] sm:$0xff]
        %v1949 = vld [vmem:[#allocation2 + $0x68] sm:$0xff]
        %v1950 = vld [vmem:[#allocation2 + $0x70] sm:$0xff]
        %v1951 = vld [vmem:[#allocation2 + $0x78] sm:$0xff]
        %v1952 = vld [vmem:[#allocation2 + $0x80] sm:$0xff]
        %v1953 = vld [vmem:[#allocation2 + $0x88] sm:$0xff]
        %v1954 = vld [vmem:[#allocation2 + $0x90] sm:$0xff]
        %v1955 = vld [vmem:[#allocation2 + $0x98] sm:$0xff]
        %v1956 = vld [vmem:[#allocation2 + $0xa0] sm:$0xff]
        %v1957 = vld [vmem:[#allocation2 + $0xa8] sm:$0xff]
        %v1958 = vld [vmem:[#allocation2 + $0xb0] sm:$0xff]
        %v1959 = vld [vmem:[#allocation2 + $0xb8] sm:$0xff]
        %v1960 = vld [vmem:[#allocation2 + $0xc0] sm:$0xff]
        %v1961 = vld [vmem:[#allocation2 + $0xc8] sm:$0xff]
        %v1962 = vld [vmem:[#allocation2 + $0xd0] sm:$0xff]
        %v1963 = vld [vmem:[#allocation2 + $0xd8] sm:$0xff]
        %v1964 = vld [vmem:[#allocation2 + $0xe0] sm:$0xff]
        %v1965 = vld [vmem:[#allocation2 + $0xe8] sm:$0xff]
        %v1966 = vld [vmem:[#allocation2 + $0xf0] sm:$0xff]
        %v1967 = vld [vmem:[#allocation2 + $0xf8] sm:$0xff]
        %v1968 = vld [vmem:[#allocation2 + $0x100] sm:$0xff]
        %v1969 = vld [vmem:[#allocation2 + $0x108] sm:$0xff]
        %v1970 = vld [vmem:[#allocation2 + $0x110] sm:$0xff]
        %v1971 = vld [vmem:[#allocation2 + $0x118] sm:$0xff]
        %s1972 = scalar_lea.vmem %s1, 8
        %v1973 = vld [vmem:[%s1972] sm:$0x3]
        %v1975 = vsel %vm377, %v1918, 0
        %v1978 = vsel %vm377, %v1919, 0
        %v1981 = vsel %vm377, %v1920, 0
        %v1984 = vsel %vm377, %v1921, 0
        %v1987 = vsel %vm377, %v1922, 0
        %v1990 = vsel %vm377, %v1923, 0
        %v1993 = vsel %vm377, %v1924, 0
        %v1996 = vsel %vm377, %v1925, 0
        %v1999 = vsel %vm377, %v1926, 0
        %v2002 = vsel %vm377, %v1927, 0
        %v2005 = vsel %vm377, %v1928, 0
        %v2008 = vsel %vm377, %v1929, 0
        %v2011 = vsel %vm377, %v1930, 0
        %v2014 = vsel %vm377, %v1931, 0
        %v2017 = vsel %vm377, %v1932, 0
        %v2020 = vsel %vm377, %v1933, 0
        %v2023 = vsel %vm377, %v1934, 0
        %v2026 = vsel %vm377, %v1935, 0
        %v2029 = vand.u32 %v1973, %v435
        %2031 = vmatprep.subr.bf16.mxu0 0
        %2032 = vmatpush1.bf16.msra.mxu0 0
        %2033 = vmatprep.subr.bf16.mxu0 0
        %2034 = vmatpush1.bf16.msra.mxu0 0
        %2035 = vmatprep.subr.bf16.mxu0 0
        %2036 = vmatpush1.bf16.msra.mxu0 0
        %2037 = vmatprep.subr.bf16.mxu0 0
        %2038 = vmatpush1.bf16.msra.mxu0 0
        %2039 = vmatprep.subr.bf16.mxu0 0
        %2040 = vmatpush1.bf16.msra.mxu0 0
        %2041 = vmatprep.subr.bf16.mxu0 0
        %2042 = vmatpush1.bf16.msra.mxu0 0
        %2043 = vmatprep.subr.bf16.mxu0 0
        %2044 = vmatpush1.bf16.msra.mxu0 0
        %2045 = vmatprep.subr.bf16.mxu0 0
        %2046 = vmatpush1.bf16.msra.mxu0 %v2029
        %2047 = vmatprep.subr.bf16.mxu0 0
        %2048 = vmatpush2.bf16.msra.mxu0 0
        %2049 = vmatprep.subr.bf16.mxu0 0
        %2050 = vmatpush2.bf16.msra.mxu0 0
        %2051 = vmatprep.subr.bf16.mxu0 0
        %2052 = vmatpush2.bf16.msra.mxu0 0
        %2053 = vmatprep.subr.bf16.mxu0 0
        %2054 = vmatpush2.bf16.msra.mxu0 0
        %2055 = vmatprep.subr.bf16.mxu0 0
        %2056 = vmatpush2.bf16.msra.mxu0 0
        %2057 = vmatprep.subr.bf16.mxu0 0
        %2058 = vmatpush2.bf16.msra.mxu0 0
        %2059 = vmatprep.subr.bf16.mxu0 0
        %2060 = vmatpush2.bf16.msra.mxu0 0
        %2061 = vmatprep.subr.bf16.mxu0 0
        %2062 = vmatpush2.bf16.msra.mxu0 0
        %2063 = vmatprep.mubr.bf16.mxu0 0
        %2064 = vmatmul.mubr.bf16.gmra.mxu0 %v1975
        %v2065 = vpop.f32.mrf.mxu0
        %v2066 = vadd.f32 0.0, %v2065
        %v2067 = vpop.f32.mrf.mxu0
        %v2068 = vpop.f32.mrf.mxu0
        %v2069 = vadd.f32 0.0, %v2068
        %v2070 = vpop.f32.mrf.mxu0
        %2071 = vmatprep.mubr.bf16.mxu0 0
        %2072 = vmatmul.mubr.bf16.gmra.mxu0 %v1978
        %v2073 = vpop.f32.mrf.mxu0
        %v2074 = vadd.f32 0.0, %v2073
        %v2075 = vpop.f32.mrf.mxu0
        %v2076 = vpop.f32.mrf.mxu0
        %v2077 = vadd.f32 0.0, %v2076
        %v2078 = vpop.f32.mrf.mxu0
        %2079 = vmatprep.mubr.bf16.mxu0 0
        %2080 = vmatmul.mubr.bf16.gmra.mxu0 %v1981
        %v2081 = vpop.f32.mrf.mxu0
        %v2082 = vadd.f32 0.0, %v2081
        %v2083 = vpop.f32.mrf.mxu0
        %v2084 = vpop.f32.mrf.mxu0
        %v2085 = vadd.f32 0.0, %v2084
        %v2086 = vpop.f32.mrf.mxu0
        %2087 = vmatprep.mubr.bf16.mxu0 0
        %2088 = vmatmul.mubr.bf16.gmra.mxu0 %v1984
        %v2089 = vpop.f32.mrf.mxu0
        %v2090 = vadd.f32 0.0, %v2089
        %v2091 = vpop.f32.mrf.mxu0
        %v2092 = vpop.f32.mrf.mxu0
        %v2093 = vadd.f32 0.0, %v2092
        %v2094 = vpop.f32.mrf.mxu0
        %2095 = vmatprep.mubr.bf16.mxu0 0
        %2096 = vmatmul.mubr.bf16.gmra.mxu0 %v1987
        %v2097 = vpop.f32.mrf.mxu0
        %v2098 = vadd.f32 0.0, %v2097
        %v2099 = vpop.f32.mrf.mxu0
        %v2100 = vpop.f32.mrf.mxu0
        %v2101 = vadd.f32 0.0, %v2100
        %v2102 = vpop.f32.mrf.mxu0
        %2103 = vmatprep.mubr.bf16.mxu0 0
        %2104 = vmatmul.mubr.bf16.gmra.mxu0 %v1990
        %v2105 = vpop.f32.mrf.mxu0
        %v2106 = vadd.f32 0.0, %v2105
        %v2107 = vpop.f32.mrf.mxu0
        %v2108 = vpop.f32.mrf.mxu0
        %v2109 = vadd.f32 0.0, %v2108
        %v2110 = vpop.f32.mrf.mxu0
        %2111 = vmatprep.mubr.bf16.mxu0 0
        %2112 = vmatmul.mubr.bf16.gmra.mxu0 %v1993
        %v2113 = vpop.f32.mrf.mxu0
        %v2114 = vadd.f32 0.0, %v2113
        %v2115 = vpop.f32.mrf.mxu0
        %v2116 = vpop.f32.mrf.mxu0
        %v2117 = vadd.f32 0.0, %v2116
        %v2118 = vpop.f32.mrf.mxu0
        %2119 = vmatprep.mubr.bf16.mxu0 0
        %2120 = vmatmul.mubr.bf16.gmra.mxu0 %v1996
        %v2121 = vpop.f32.mrf.mxu0
        %v2122 = vadd.f32 0.0, %v2121
        %v2123 = vpop.f32.mrf.mxu0
        %v2124 = vpop.f32.mrf.mxu0
        %v2125 = vadd.f32 0.0, %v2124
        %v2126 = vpop.f32.mrf.mxu0
        %2127 = vmatprep.mubr.bf16.mxu0 0
        %2128 = vmatmul.mubr.bf16.gmra.mxu0 %v1999
        %v2129 = vpop.f32.mrf.mxu0
        %v2130 = vadd.f32 0.0, %v2129
        %v2131 = vpop.f32.mrf.mxu0
        %v2132 = vpop.f32.mrf.mxu0
        %v2133 = vadd.f32 0.0, %v2132
        %v2134 = vpop.f32.mrf.mxu0
        %2135 = vmatprep.mubr.bf16.mxu0 0
        %2136 = vmatmul.mubr.bf16.gmra.mxu0 %v2002
        %v2137 = vpop.f32.mrf.mxu0
        %v2138 = vadd.f32 0.0, %v2137
        %v2139 = vpop.f32.mrf.mxu0
        %v2140 = vpop.f32.mrf.mxu0
        %v2141 = vadd.f32 0.0, %v2140
        %v2142 = vpop.f32.mrf.mxu0
        %2143 = vmatprep.mubr.bf16.mxu0 0
        %2144 = vmatmul.mubr.bf16.gmra.mxu0 %v2005
        %v2145 = vpop.f32.mrf.mxu0
        %v2146 = vadd.f32 0.0, %v2145
        %v2147 = vpop.f32.mrf.mxu0
        %v2148 = vpop.f32.mrf.mxu0
        %v2149 = vadd.f32 0.0, %v2148
        %v2150 = vpop.f32.mrf.mxu0
        %2151 = vmatprep.mubr.bf16.mxu0 0
        %2152 = vmatmul.mubr.bf16.gmra.mxu0 %v2008
        %v2153 = vpop.f32.mrf.mxu0
        %v2154 = vadd.f32 0.0, %v2153
        %v2155 = vpop.f32.mrf.mxu0
        %v2156 = vpop.f32.mrf.mxu0
        %v2157 = vadd.f32 0.0, %v2156
        %v2158 = vpop.f32.mrf.mxu0
        %2159 = vmatprep.mubr.bf16.mxu0 0
        %2160 = vmatmul.mubr.bf16.gmra.mxu0 %v2011
        %v2161 = vpop.f32.mrf.mxu0
        %v2162 = vadd.f32 0.0, %v2161
        %v2163 = vpop.f32.mrf.mxu0
        %v2164 = vpop.f32.mrf.mxu0
        %v2165 = vadd.f32 0.0, %v2164
        %v2166 = vpop.f32.mrf.mxu0
        %2167 = vmatprep.mubr.bf16.mxu0 0
        %2168 = vmatmul.mubr.bf16.gmra.mxu0 %v2014
        %v2169 = vpop.f32.mrf.mxu0
        %v2170 = vadd.f32 0.0, %v2169
        %v2171 = vpop.f32.mrf.mxu0
        %v2172 = vpop.f32.mrf.mxu0
        %v2173 = vadd.f32 0.0, %v2172
        %v2174 = vpop.f32.mrf.mxu0
        %2175 = vmatprep.mubr.bf16.mxu0 0
        %2176 = vmatmul.mubr.bf16.gmra.mxu0 %v2017
        %v2177 = vpop.f32.mrf.mxu0
        %v2178 = vadd.f32 0.0, %v2177
        %v2179 = vpop.f32.mrf.mxu0
        %v2180 = vpop.f32.mrf.mxu0
        %v2181 = vadd.f32 0.0, %v2180
        %v2182 = vpop.f32.mrf.mxu0
        %2183 = vmatprep.mubr.bf16.mxu0 0
        %2184 = vmatmul.mubr.bf16.gmra.mxu0 %v2020
        %v2185 = vpop.f32.mrf.mxu0
        %v2186 = vadd.f32 0.0, %v2185
        %v2187 = vpop.f32.mrf.mxu0
        %v2188 = vpop.f32.mrf.mxu0
        %v2189 = vadd.f32 0.0, %v2188
        %v2190 = vpop.f32.mrf.mxu0
        %2191 = vmatprep.mubr.bf16.mxu0 0
        %2192 = vmatmul.mubr.bf16.gmra.mxu0 %v2023
        %v2193 = vpop.f32.mrf.mxu0
        %v2194 = vadd.f32 0.0, %v2193
        %v2195 = vpop.f32.mrf.mxu0
        %v2196 = vpop.f32.mrf.mxu0
        %v2197 = vadd.f32 0.0, %v2196
        %v2198 = vpop.f32.mrf.mxu0
        %2199 = vmatprep.mubr.bf16.mxu0 0
        %2200 = vmatmul.mubr.bf16.gmra.mxu0 %v2026
        %v2201 = vpop.f32.mrf.mxu0
        %v2202 = vadd.f32 0.0, %v2201
        %v2203 = vpop.f32.mrf.mxu0
        %v2204 = vpop.f32.mrf.mxu0
        %v2205 = vadd.f32 0.0, %v2204
        %v2206 = vpop.f32.mrf.mxu0
        %2207 = vdwg.mxu0
        %v2208 = vadd.f32 %v1936, %v2066
        %v2209 = vadd.f32 %v1937, %v2069
        %v2210 = vadd.f32 %v1938, %v2074
        %v2211 = vadd.f32 %v1939, %v2077
        %v2212 = vadd.f32 %v1940, %v2082
        %v2213 = vadd.f32 %v1941, %v2085
        %v2214 = vadd.f32 %v1942, %v2090
        %v2215 = vadd.f32 %v1943, %v2093
        %v2216 = vadd.f32 %v1944, %v2098
        %v2217 = vadd.f32 %v1945, %v2101
        %v2218 = vadd.f32 %v1946, %v2106
        %v2219 = vadd.f32 %v1947, %v2109
        %v2220 = vadd.f32 %v1948, %v2114
        %v2221 = vadd.f32 %v1949, %v2117
        %v2222 = vadd.f32 %v1950, %v2122
        %v2223 = vadd.f32 %v1951, %v2125
        %v2224 = vadd.f32 %v1952, %v2130
        %v2225 = vadd.f32 %v1953, %v2133
        %v2226 = vadd.f32 %v1954, %v2138
        %v2227 = vadd.f32 %v1955, %v2141
        %v2228 = vadd.f32 %v1956, %v2146
        %v2229 = vadd.f32 %v1957, %v2149
        %v2230 = vadd.f32 %v1958, %v2154
        %v2231 = vadd.f32 %v1959, %v2157
        %v2232 = vadd.f32 %v1960, %v2162
        %v2233 = vadd.f32 %v1961, %v2165
        %v2234 = vadd.f32 %v1962, %v2170
        %v2235 = vadd.f32 %v1963, %v2173
        %v2236 = vadd.f32 %v1964, %v2178
        %v2237 = vadd.f32 %v1965, %v2181
        %v2238 = vadd.f32 %v1966, %v2186
        %v2239 = vadd.f32 %v1967, %v2189
        %v2240 = vadd.f32 %v1968, %v2194
        %v2241 = vadd.f32 %v1969, %v2197
        %v2242 = vadd.f32 %v1970, %v2202
        %v2243 = vadd.f32 %v1971, %v2205
        %2244 = vst [vmem:[#allocation2] sm:$0xff] %v2208
        %2245 = vst [vmem:[#allocation2 + $0x8] sm:$0xff] %v2209
        %2246 = vst [vmem:[#allocation2 + $0x10] sm:$0xff] %v2210
        %2247 = vst [vmem:[#allocation2 + $0x18] sm:$0xff] %v2211
        %2248 = vst [vmem:[#allocation2 + $0x20] sm:$0xff] %v2212
        %2249 = vst [vmem:[#allocation2 + $0x28] sm:$0xff] %v2213
        %2250 = vst [vmem:[#allocation2 + $0x30] sm:$0xff] %v2214
        %2251 = vst [vmem:[#allocation2 + $0x38] sm:$0xff] %v2215
        %2252 = vst [vmem:[#allocation2 + $0x40] sm:$0xff] %v2216
        %2253 = vst [vmem:[#allocation2 + $0x48] sm:$0xff] %v2217
        %2254 = vst [vmem:[#allocation2 + $0x50] sm:$0xff] %v2218
        %2255 = vst [vmem:[#allocation2 + $0x58] sm:$0xff] %v2219
        %2256 = vst [vmem:[#allocation2 + $0x60] sm:$0xff] %v2220
        %2257 = vst [vmem:[#allocation2 + $0x68] sm:$0xff] %v2221
        %2258 = vst [vmem:[#allocation2 + $0x70] sm:$0xff] %v2222
        %2259 = vst [vmem:[#allocation2 + $0x78] sm:$0xff] %v2223
        %2260 = vst [vmem:[#allocation2 + $0x80] sm:$0xff] %v2224
        %2261 = vst [vmem:[#allocation2 + $0x88] sm:$0xff] %v2225
        %2262 = vst [vmem:[#allocation2 + $0x90] sm:$0xff] %v2226
        %2263 = vst [vmem:[#allocation2 + $0x98] sm:$0xff] %v2227
        %2264 = vst [vmem:[#allocation2 + $0xa0] sm:$0xff] %v2228
        %2265 = vst [vmem:[#allocation2 + $0xa8] sm:$0xff] %v2229
        %2266 = vst [vmem:[#allocation2 + $0xb0] sm:$0xff] %v2230
        %2267 = vst [vmem:[#allocation2 + $0xb8] sm:$0xff] %v2231
        %2268 = vst [vmem:[#allocation2 + $0xc0] sm:$0xff] %v2232
        %2269 = vst [vmem:[#allocation2 + $0xc8] sm:$0xff] %v2233
        %2270 = vst [vmem:[#allocation2 + $0xd0] sm:$0xff] %v2234
        %2271 = vst [vmem:[#allocation2 + $0xd8] sm:$0xff] %v2235
        %2272 = vst [vmem:[#allocation2 + $0xe0] sm:$0xff] %v2236
        %2273 = vst [vmem:[#allocation2 + $0xe8] sm:$0xff] %v2237
        %2274 = vst [vmem:[#allocation2 + $0xf0] sm:$0xff] %v2238
        %2275 = vst [vmem:[#allocation2 + $0xf8] sm:$0xff] %v2239
        %2276 = vst [vmem:[#allocation2 + $0x100] sm:$0xff] %v2240
        %2277 = vst [vmem:[#allocation2 + $0x108] sm:$0xff] %v2241
        %2278 = vst [vmem:[#allocation2 + $0x110] sm:$0xff] %v2242
        %2279 = vst [vmem:[#allocation2 + $0x118] sm:$0xff] %v2243
        %v2280 = vld [vmem:[%s248 + $0x14] sm:$0xff]
        %v2281 = vld [vmem:[%s248 + $0x1c] sm:$0xff]
        %v2282 = vld [vmem:[%s248 + $0x24] sm:$0xff]
        %v2283 = vld [vmem:[%s248 + $0x2c] sm:$0xff]
        %v2284 = vld [vmem:[%s248 + $0x34] sm:$0xff]
        %v2285 = vld [vmem:[%s248 + $0x3c] sm:$0xff]
        %v2286 = vld [vmem:[%s248 + $0x44] sm:$0xff]
        %v2287 = vld [vmem:[%s248 + $0x4c] sm:$0xff]
        %v2288 = vld [vmem:[%s248 + $0x54] sm:$0xff]
        %v2289 = vld [vmem:[%s248 + $0x5c] sm:$0xff]
        %v2290 = vld [vmem:[%s248 + $0x64] sm:$0xff]
        %v2291 = vld [vmem:[%s248 + $0x6c] sm:$0xff]
        %v2292 = vld [vmem:[%s248 + $0x74] sm:$0xff]
        %v2293 = vld [vmem:[%s248 + $0x7c] sm:$0xff]
        %v2294 = vld [vmem:[%s248 + $0x84] sm:$0xff]
        %v2295 = vld [vmem:[%s248 + $0x8c] sm:$0xff]
        %v2296 = vld [vmem:[%s248 + $0x94] sm:$0xff]
        %v2297 = vld [vmem:[%s248 + $0x9c] sm:$0xff]
        %v2298 = vld [vmem:[%s248 + $0xa4] sm:$0xff]
        %v2299 = vld [vmem:[%s248 + $0xac] sm:$0xff]
        %v2300 = vld [vmem:[%s248 + $0xb4] sm:$0xff]
        %v2301 = vld [vmem:[%s248 + $0xbc] sm:$0xff]
        %v2302 = vld [vmem:[%s248 + $0xc4] sm:$0xff]
        %v2303 = vld [vmem:[%s248 + $0xcc] sm:$0xff]
        %v2304 = vld [vmem:[%s248 + $0xd4] sm:$0xff]
        %v2305 = vld [vmem:[%s248 + $0xdc] sm:$0xff]
        %v2306 = vld [vmem:[%s248 + $0xe4] sm:$0xff]
        %v2307 = vld [vmem:[%s248 + $0xec] sm:$0xff]
        %v2308 = vld [vmem:[%s248 + $0xf4] sm:$0xff]
        %v2309 = vld [vmem:[%s248 + $0xfc] sm:$0xff]
        %v2310 = vld [vmem:[%s248 + $0x104] sm:$0xff]
        %v2311 = vld [vmem:[%s248 + $0x10c] sm:$0xff]
        %v2312 = vld [vmem:[%s248 + $0x114] sm:$0xff]
        %v2313 = vld [vmem:[%s248 + $0x11c] sm:$0xff]
        %v2314 = vld [vmem:[%s248 + $0x124] sm:$0xff]
        %v2315 = vld [vmem:[%s248 + $0x12c] sm:$0xff]
        %v2316 = vpack.c.bf16 %v2281, %v2280
        %v2317 = vpack.c.bf16 %v2283, %v2282
        %v2318 = vpack.c.bf16 %v2285, %v2284
        %v2319 = vpack.c.bf16 %v2287, %v2286
        %v2320 = vpack.c.bf16 %v2289, %v2288
        %v2321 = vpack.c.bf16 %v2291, %v2290
        %v2322 = vpack.c.bf16 %v2293, %v2292
        %v2323 = vpack.c.bf16 %v2295, %v2294
        %v2324 = vpack.c.bf16 %v2297, %v2296
        %v2325 = vpack.c.bf16 %v2299, %v2298
        %v2326 = vpack.c.bf16 %v2301, %v2300
        %v2327 = vpack.c.bf16 %v2303, %v2302
        %v2328 = vpack.c.bf16 %v2305, %v2304
        %v2329 = vpack.c.bf16 %v2307, %v2306
        %v2330 = vpack.c.bf16 %v2309, %v2308
        %v2331 = vpack.c.bf16 %v2311, %v2310
        %v2332 = vpack.c.bf16 %v2313, %v2312
        %v2333 = vpack.c.bf16 %v2315, %v2314
        %v2334 = vld [vmem:[#allocation2] sm:$0xff]
        %v2335 = vld [vmem:[#allocation2 + $0x8] sm:$0xff]
        %v2336 = vld [vmem:[#allocation2 + $0x10] sm:$0xff]
        %v2337 = vld [vmem:[#allocation2 + $0x18] sm:$0xff]
        %v2338 = vld [vmem:[#allocation2 + $0x20] sm:$0xff]
        %v2339 = vld [vmem:[#allocation2 + $0x28] sm:$0xff]
        %v2340 = vld [vmem:[#allocation2 + $0x30] sm:$0xff]
        %v2341 = vld [vmem:[#allocation2 + $0x38] sm:$0xff]
        %v2342 = vld [vmem:[#allocation2 + $0x40] sm:$0xff]
        %v2343 = vld [vmem:[#allocation2 + $0x48] sm:$0xff]
        %v2344 = vld [vmem:[#allocation2 + $0x50] sm:$0xff]
        %v2345 = vld [vmem:[#allocation2 + $0x58] sm:$0xff]
        %v2346 = vld [vmem:[#allocation2 + $0x60] sm:$0xff]
        %v2347 = vld [vmem:[#allocation2 + $0x68] sm:$0xff]
        %v2348 = vld [vmem:[#allocation2 + $0x70] sm:$0xff]
        %v2349 = vld [vmem:[#allocation2 + $0x78] sm:$0xff]
        %v2350 = vld [vmem:[#allocation2 + $0x80] sm:$0xff]
        %v2351 = vld [vmem:[#allocation2 + $0x88] sm:$0xff]
        %v2352 = vld [vmem:[#allocation2 + $0x90] sm:$0xff]
        %v2353 = vld [vmem:[#allocation2 + $0x98] sm:$0xff]
        %v2354 = vld [vmem:[#allocation2 + $0xa0] sm:$0xff]
        %v2355 = vld [vmem:[#allocation2 + $0xa8] sm:$0xff]
        %v2356 = vld [vmem:[#allocation2 + $0xb0] sm:$0xff]
        %v2357 = vld [vmem:[#allocation2 + $0xb8] sm:$0xff]
        %v2358 = vld [vmem:[#allocation2 + $0xc0] sm:$0xff]
        %v2359 = vld [vmem:[#allocation2 + $0xc8] sm:$0xff]
        %v2360 = vld [vmem:[#allocation2 + $0xd0] sm:$0xff]
        %v2361 = vld [vmem:[#allocation2 + $0xd8] sm:$0xff]
        %v2362 = vld [vmem:[#allocation2 + $0xe0] sm:$0xff]
        %v2363 = vld [vmem:[#allocation2 + $0xe8] sm:$0xff]
        %v2364 = vld [vmem:[#allocation2 + $0xf0] sm:$0xff]
        %v2365 = vld [vmem:[#allocation2 + $0xf8] sm:$0xff]
        %v2366 = vld [vmem:[#allocation2 + $0x100] sm:$0xff]
        %v2367 = vld [vmem:[#allocation2 + $0x108] sm:$0xff]
        %v2368 = vld [vmem:[#allocation2 + $0x110] sm:$0xff]
        %v2369 = vld [vmem:[#allocation2 + $0x118] sm:$0xff]
        %s2370 = scalar_lea.vmem %s1, 10
        %v2371 = vld [vmem:[%s2370] sm:$0x3]
        %v2373 = vsel %vm377, %v2316, 0
        %v2376 = vsel %vm377, %v2317, 0
        %v2379 = vsel %vm377, %v2318, 0
        %v2382 = vsel %vm377, %v2319, 0
        %v2385 = vsel %vm377, %v2320, 0
        %v2388 = vsel %vm377, %v2321, 0
        %v2391 = vsel %vm377, %v2322, 0
        %v2394 = vsel %vm377, %v2323, 0
        %v2397 = vsel %vm377, %v2324, 0
        %v2400 = vsel %vm377, %v2325, 0
        %v2403 = vsel %vm377, %v2326, 0
        %v2406 = vsel %vm377, %v2327, 0
        %v2409 = vsel %vm377, %v2328, 0
        %v2412 = vsel %vm377, %v2329, 0
        %v2415 = vsel %vm377, %v2330, 0
        %v2418 = vsel %vm377, %v2331, 0
        %v2421 = vsel %vm377, %v2332, 0
        %v2424 = vsel %vm377, %v2333, 0
        %v2427 = vand.u32 %v2371, %v435
        %2429 = vmatprep.subr.bf16.mxu0 0
        %2430 = vmatpush1.bf16.msra.mxu0 0
        %2431 = vmatprep.subr.bf16.mxu0 0
        %2432 = vmatpush1.bf16.msra.mxu0 0
        %2433 = vmatprep.subr.bf16.mxu0 0
        %2434 = vmatpush1.bf16.msra.mxu0 0
        %2435 = vmatprep.subr.bf16.mxu0 0
        %2436 = vmatpush1.bf16.msra.mxu0 0
        %2437 = vmatprep.subr.bf16.mxu0 0
        %2438 = vmatpush1.bf16.msra.mxu0 0
        %2439 = vmatprep.subr.bf16.mxu0 0
        %2440 = vmatpush1.bf16.msra.mxu0 0
        %2441 = vmatprep.subr.bf16.mxu0 0
        %2442 = vmatpush1.bf16.msra.mxu0 0
        %2443 = vmatprep.subr.bf16.mxu0 0
        %2444 = vmatpush1.bf16.msra.mxu0 %v2427
        %2445 = vmatprep.subr.bf16.mxu0 0
        %2446 = vmatpush2.bf16.msra.mxu0 0
        %2447 = vmatprep.subr.bf16.mxu0 0
        %2448 = vmatpush2.bf16.msra.mxu0 0
        %2449 = vmatprep.subr.bf16.mxu0 0
        %2450 = vmatpush2.bf16.msra.mxu0 0
        %2451 = vmatprep.subr.bf16.mxu0 0
        %2452 = vmatpush2.bf16.msra.mxu0 0
        %2453 = vmatprep.subr.bf16.mxu0 0
        %2454 = vmatpush2.bf16.msra.mxu0 0
        %2455 = vmatprep.subr.bf16.mxu0 0
        %2456 = vmatpush2.bf16.msra.mxu0 0
        %2457 = vmatprep.subr.bf16.mxu0 0
        %2458 = vmatpush2.bf16.msra.mxu0 0
        %2459 = vmatprep.subr.bf16.mxu0 0
        %2460 = vmatpush2.bf16.msra.mxu0 0
        %2461 = vmatprep.mubr.bf16.mxu0 0
        %2462 = vmatmul.mubr.bf16.gmra.mxu0 %v2373
        %v2463 = vpop.f32.mrf.mxu0
        %v2464 = vadd.f32 0.0, %v2463
        %v2465 = vpop.f32.mrf.mxu0
        %v2466 = vpop.f32.mrf.mxu0
        %v2467 = vadd.f32 0.0, %v2466
        %v2468 = vpop.f32.mrf.mxu0
        %2469 = vmatprep.mubr.bf16.mxu0 0
        %2470 = vmatmul.mubr.bf16.gmra.mxu0 %v2376
        %v2471 = vpop.f32.mrf.mxu0
        %v2472 = vadd.f32 0.0, %v2471
        %v2473 = vpop.f32.mrf.mxu0
        %v2474 = vpop.f32.mrf.mxu0
        %v2475 = vadd.f32 0.0, %v2474
        %v2476 = vpop.f32.mrf.mxu0
        %2477 = vmatprep.mubr.bf16.mxu0 0
        %2478 = vmatmul.mubr.bf16.gmra.mxu0 %v2379
        %v2479 = vpop.f32.mrf.mxu0
        %v2480 = vadd.f32 0.0, %v2479
        %v2481 = vpop.f32.mrf.mxu0
        %v2482 = vpop.f32.mrf.mxu0
        %v2483 = vadd.f32 0.0, %v2482
        %v2484 = vpop.f32.mrf.mxu0
        %2485 = vmatprep.mubr.bf16.mxu0 0
        %2486 = vmatmul.mubr.bf16.gmra.mxu0 %v2382
        %v2487 = vpop.f32.mrf.mxu0
        %v2488 = vadd.f32 0.0, %v2487
        %v2489 = vpop.f32.mrf.mxu0
        %v2490 = vpop.f32.mrf.mxu0
        %v2491 = vadd.f32 0.0, %v2490
        %v2492 = vpop.f32.mrf.mxu0
        %2493 = vmatprep.mubr.bf16.mxu0 0
        %2494 = vmatmul.mubr.bf16.gmra.mxu0 %v2385
        %v2495 = vpop.f32.mrf.mxu0
        %v2496 = vadd.f32 0.0, %v2495
        %v2497 = vpop.f32.mrf.mxu0
        %v2498 = vpop.f32.mrf.mxu0
        %v2499 = vadd.f32 0.0, %v2498
        %v2500 = vpop.f32.mrf.mxu0
        %2501 = vmatprep.mubr.bf16.mxu0 0
        %2502 = vmatmul.mubr.bf16.gmra.mxu0 %v2388
        %v2503 = vpop.f32.mrf.mxu0
        %v2504 = vadd.f32 0.0, %v2503
        %v2505 = vpop.f32.mrf.mxu0
        %v2506 = vpop.f32.mrf.mxu0
        %v2507 = vadd.f32 0.0, %v2506
        %v2508 = vpop.f32.mrf.mxu0
        %2509 = vmatprep.mubr.bf16.mxu0 0
        %2510 = vmatmul.mubr.bf16.gmra.mxu0 %v2391
        %v2511 = vpop.f32.mrf.mxu0
        %v2512 = vadd.f32 0.0, %v2511
        %v2513 = vpop.f32.mrf.mxu0
        %v2514 = vpop.f32.mrf.mxu0
        %v2515 = vadd.f32 0.0, %v2514
        %v2516 = vpop.f32.mrf.mxu0
        %2517 = vmatprep.mubr.bf16.mxu0 0
        %2518 = vmatmul.mubr.bf16.gmra.mxu0 %v2394
        %v2519 = vpop.f32.mrf.mxu0
        %v2520 = vadd.f32 0.0, %v2519
        %v2521 = vpop.f32.mrf.mxu0
        %v2522 = vpop.f32.mrf.mxu0
        %v2523 = vadd.f32 0.0, %v2522
        %v2524 = vpop.f32.mrf.mxu0
        %2525 = vmatprep.mubr.bf16.mxu0 0
        %2526 = vmatmul.mubr.bf16.gmra.mxu0 %v2397
        %v2527 = vpop.f32.mrf.mxu0
        %v2528 = vadd.f32 0.0, %v2527
        %v2529 = vpop.f32.mrf.mxu0
        %v2530 = vpop.f32.mrf.mxu0
        %v2531 = vadd.f32 0.0, %v2530
        %v2532 = vpop.f32.mrf.mxu0
        %2533 = vmatprep.mubr.bf16.mxu0 0
        %2534 = vmatmul.mubr.bf16.gmra.mxu0 %v2400
        %v2535 = vpop.f32.mrf.mxu0
        %v2536 = vadd.f32 0.0, %v2535
        %v2537 = vpop.f32.mrf.mxu0
        %v2538 = vpop.f32.mrf.mxu0
        %v2539 = vadd.f32 0.0, %v2538
        %v2540 = vpop.f32.mrf.mxu0
        %2541 = vmatprep.mubr.bf16.mxu0 0
        %2542 = vmatmul.mubr.bf16.gmra.mxu0 %v2403
        %v2543 = vpop.f32.mrf.mxu0
        %v2544 = vadd.f32 0.0, %v2543
        %v2545 = vpop.f32.mrf.mxu0
        %v2546 = vpop.f32.mrf.mxu0
        %v2547 = vadd.f32 0.0, %v2546
        %v2548 = vpop.f32.mrf.mxu0
        %2549 = vmatprep.mubr.bf16.mxu0 0
        %2550 = vmatmul.mubr.bf16.gmra.mxu0 %v2406
        %v2551 = vpop.f32.mrf.mxu0
        %v2552 = vadd.f32 0.0, %v2551
        %v2553 = vpop.f32.mrf.mxu0
        %v2554 = vpop.f32.mrf.mxu0
        %v2555 = vadd.f32 0.0, %v2554
        %v2556 = vpop.f32.mrf.mxu0
        %2557 = vmatprep.mubr.bf16.mxu0 0
        %2558 = vmatmul.mubr.bf16.gmra.mxu0 %v2409
        %v2559 = vpop.f32.mrf.mxu0
        %v2560 = vadd.f32 0.0, %v2559
        %v2561 = vpop.f32.mrf.mxu0
        %v2562 = vpop.f32.mrf.mxu0
        %v2563 = vadd.f32 0.0, %v2562
        %v2564 = vpop.f32.mrf.mxu0
        %2565 = vmatprep.mubr.bf16.mxu0 0
        %2566 = vmatmul.mubr.bf16.gmra.mxu0 %v2412
        %v2567 = vpop.f32.mrf.mxu0
        %v2568 = vadd.f32 0.0, %v2567
        %v2569 = vpop.f32.mrf.mxu0
        %v2570 = vpop.f32.mrf.mxu0
        %v2571 = vadd.f32 0.0, %v2570
        %v2572 = vpop.f32.mrf.mxu0
        %2573 = vmatprep.mubr.bf16.mxu0 0
        %2574 = vmatmul.mubr.bf16.gmra.mxu0 %v2415
        %v2575 = vpop.f32.mrf.mxu0
        %v2576 = vadd.f32 0.0, %v2575
        %v2577 = vpop.f32.mrf.mxu0
        %v2578 = vpop.f32.mrf.mxu0
        %v2579 = vadd.f32 0.0, %v2578
        %v2580 = vpop.f32.mrf.mxu0
        %2581 = vmatprep.mubr.bf16.mxu0 0
        %2582 = vmatmul.mubr.bf16.gmra.mxu0 %v2418
        %v2583 = vpop.f32.mrf.mxu0
        %v2584 = vadd.f32 0.0, %v2583
        %v2585 = vpop.f32.mrf.mxu0
        %v2586 = vpop.f32.mrf.mxu0
        %v2587 = vadd.f32 0.0, %v2586
        %v2588 = vpop.f32.mrf.mxu0
        %2589 = vmatprep.mubr.bf16.mxu0 0
        %2590 = vmatmul.mubr.bf16.gmra.mxu0 %v2421
        %v2591 = vpop.f32.mrf.mxu0
        %v2592 = vadd.f32 0.0, %v2591
        %v2593 = vpop.f32.mrf.mxu0
        %v2594 = vpop.f32.mrf.mxu0
        %v2595 = vadd.f32 0.0, %v2594
        %v2596 = vpop.f32.mrf.mxu0
        %2597 = vmatprep.mubr.bf16.mxu0 0
        %2598 = vmatmul.mubr.bf16.gmra.mxu0 %v2424
        %v2599 = vpop.f32.mrf.mxu0
        %v2600 = vadd.f32 0.0, %v2599
        %v2601 = vpop.f32.mrf.mxu0
        %v2602 = vpop.f32.mrf.mxu0
        %v2603 = vadd.f32 0.0, %v2602
        %v2604 = vpop.f32.mrf.mxu0
        %2605 = vdwg.mxu0
        %v2606 = vadd.f32 %v2334, %v2464
        %v2607 = vadd.f32 %v2335, %v2467
        %v2608 = vadd.f32 %v2336, %v2472
        %v2609 = vadd.f32 %v2337, %v2475
        %v2610 = vadd.f32 %v2338, %v2480
        %v2611 = vadd.f32 %v2339, %v2483
        %v2612 = vadd.f32 %v2340, %v2488
        %v2613 = vadd.f32 %v2341, %v2491
        %v2614 = vadd.f32 %v2342, %v2496
        %v2615 = vadd.f32 %v2343, %v2499
        %v2616 = vadd.f32 %v2344, %v2504
        %v2617 = vadd.f32 %v2345, %v2507
        %v2618 = vadd.f32 %v2346, %v2512
        %v2619 = vadd.f32 %v2347, %v2515
        %v2620 = vadd.f32 %v2348, %v2520
        %v2621 = vadd.f32 %v2349, %v2523
        %v2622 = vadd.f32 %v2350, %v2528
        %v2623 = vadd.f32 %v2351, %v2531
        %v2624 = vadd.f32 %v2352, %v2536
        %v2625 = vadd.f32 %v2353, %v2539
        %v2626 = vadd.f32 %v2354, %v2544
        %v2627 = vadd.f32 %v2355, %v2547
        %v2628 = vadd.f32 %v2356, %v2552
        %v2629 = vadd.f32 %v2357, %v2555
        %v2630 = vadd.f32 %v2358, %v2560
        %v2631 = vadd.f32 %v2359, %v2563
        %v2632 = vadd.f32 %v2360, %v2568
        %v2633 = vadd.f32 %v2361, %v2571
        %v2634 = vadd.f32 %v2362, %v2576
        %v2635 = vadd.f32 %v2363, %v2579
        %v2636 = vadd.f32 %v2364, %v2584
        %v2637 = vadd.f32 %v2365, %v2587
        %v2638 = vadd.f32 %v2366, %v2592
        %v2639 = vadd.f32 %v2367, %v2595
        %v2640 = vadd.f32 %v2368, %v2600
        %v2641 = vadd.f32 %v2369, %v2603
        %2642 = vst [vmem:[#allocation2] sm:$0xff] %v2606
        %2643 = vst [vmem:[#allocation2 + $0x8] sm:$0xff] %v2607
        %2644 = vst [vmem:[#allocation2 + $0x10] sm:$0xff] %v2608
        %2645 = vst [vmem:[#allocation2 + $0x18] sm:$0xff] %v2609
        %2646 = vst [vmem:[#allocation2 + $0x20] sm:$0xff] %v2610
        %2647 = vst [vmem:[#allocation2 + $0x28] sm:$0xff] %v2611
        %2648 = vst [vmem:[#allocation2 + $0x30] sm:$0xff] %v2612
        %2649 = vst [vmem:[#allocation2 + $0x38] sm:$0xff] %v2613
        %2650 = vst [vmem:[#allocation2 + $0x40] sm:$0xff] %v2614
        %2651 = vst [vmem:[#allocation2 + $0x48] sm:$0xff] %v2615
        %2652 = vst [vmem:[#allocation2 + $0x50] sm:$0xff] %v2616
        %2653 = vst [vmem:[#allocation2 + $0x58] sm:$0xff] %v2617
        %2654 = vst [vmem:[#allocation2 + $0x60] sm:$0xff] %v2618
        %2655 = vst [vmem:[#allocation2 + $0x68] sm:$0xff] %v2619
        %2656 = vst [vmem:[#allocation2 + $0x70] sm:$0xff] %v2620
        %2657 = vst [vmem:[#allocation2 + $0x78] sm:$0xff] %v2621
        %2658 = vst [vmem:[#allocation2 + $0x80] sm:$0xff] %v2622
        %2659 = vst [vmem:[#allocation2 + $0x88] sm:$0xff] %v2623
        %2660 = vst [vmem:[#allocation2 + $0x90] sm:$0xff] %v2624
        %2661 = vst [vmem:[#allocation2 + $0x98] sm:$0xff] %v2625
        %2662 = vst [vmem:[#allocation2 + $0xa0] sm:$0xff] %v2626
        %2663 = vst [vmem:[#allocation2 + $0xa8] sm:$0xff] %v2627
        %2664 = vst [vmem:[#allocation2 + $0xb0] sm:$0xff] %v2628
        %2665 = vst [vmem:[#allocation2 + $0xb8] sm:$0xff] %v2629
        %2666 = vst [vmem:[#allocation2 + $0xc0] sm:$0xff] %v2630
        %2667 = vst [vmem:[#allocation2 + $0xc8] sm:$0xff] %v2631
        %2668 = vst [vmem:[#allocation2 + $0xd0] sm:$0xff] %v2632
        %2669 = vst [vmem:[#allocation2 + $0xd8] sm:$0xff] %v2633
        %2670 = vst [vmem:[#allocation2 + $0xe0] sm:$0xff] %v2634
        %2671 = vst [vmem:[#allocation2 + $0xe8] sm:$0xff] %v2635
        %2672 = vst [vmem:[#allocation2 + $0xf0] sm:$0xff] %v2636
        %2673 = vst [vmem:[#allocation2 + $0xf8] sm:$0xff] %v2637
        %2674 = vst [vmem:[#allocation2 + $0x100] sm:$0xff] %v2638
        %2675 = vst [vmem:[#allocation2 + $0x108] sm:$0xff] %v2639
        %2676 = vst [vmem:[#allocation2 + $0x110] sm:$0xff] %v2640
        %2677 = vst [vmem:[#allocation2 + $0x118] sm:$0xff] %v2641
        %v2678 = vld [vmem:[%s248 + $0x24] sm:$0xff]
        %v2679 = vld [vmem:[%s248 + $0x2c] sm:$0xff]
        %v2680 = vld [vmem:[%s248 + $0x34] sm:$0xff]
        %v2681 = vld [vmem:[%s248 + $0x3c] sm:$0xff]
        %v2682 = vld [vmem:[%s248 + $0x44] sm:$0xff]
        %v2683 = vld [vmem:[%s248 + $0x4c] sm:$0xff]
        %v2684 = vld [vmem:[%s248 + $0x54] sm:$0xff]
        %v2685 = vld [vmem:[%s248 + $0x5c] sm:$0xff]
        %v2686 = vld [vmem:[%s248 + $0x64] sm:$0xff]
        %v2687 = vld [vmem:[%s248 + $0x6c] sm:$0xff]
        %v2688 = vld [vmem:[%s248 + $0x74] sm:$0xff]
        %v2689 = vld [vmem:[%s248 + $0x7c] sm:$0xff]
        %v2690 = vld [vmem:[%s248 + $0x84] sm:$0xff]
        %v2691 = vld [vmem:[%s248 + $0x8c] sm:$0xff]
        %v2692 = vld [vmem:[%s248 + $0x94] sm:$0xff]
        %v2693 = vld [vmem:[%s248 + $0x9c] sm:$0xff]
        %v2694 = vld [vmem:[%s248 + $0xa4] sm:$0xff]
        %v2695 = vld [vmem:[%s248 + $0xac] sm:$0xff]
        %v2696 = vld [vmem:[%s248 + $0xb4] sm:$0xff]
        %v2697 = vld [vmem:[%s248 + $0xbc] sm:$0xff]
        %v2698 = vld [vmem:[%s248 + $0xc4] sm:$0xff]
        %v2699 = vld [vmem:[%s248 + $0xcc] sm:$0xff]
        %v2700 = vld [vmem:[%s248 + $0xd4] sm:$0xff]
        %v2701 = vld [vmem:[%s248 + $0xdc] sm:$0xff]
        %v2702 = vld [vmem:[%s248 + $0xe4] sm:$0xff]
        %v2703 = vld [vmem:[%s248 + $0xec] sm:$0xff]
        %v2704 = vld [vmem:[%s248 + $0xf4] sm:$0xff]
        %v2705 = vld [vmem:[%s248 + $0xfc] sm:$0xff]
        %v2706 = vld [vmem:[%s248 + $0x104] sm:$0xff]
        %v2707 = vld [vmem:[%s248 + $0x10c] sm:$0xff]
        %v2708 = vld [vmem:[%s248 + $0x114] sm:$0xff]
        %v2709 = vld [vmem:[%s248 + $0x11c] sm:$0xff]
        %v2710 = vld [vmem:[%s248 + $0x124] sm:$0xff]
        %v2711 = vld [vmem:[%s248 + $0x12c] sm:$0xff]
        %v2712 = vld [vmem:[%s248 + $0x134] sm:$0xff]
        %v2713 = vld [vmem:[%s248 + $0x13c] sm:$0xff]
        %v2714 = vpack.c.bf16 %v2679, %v2678
        %v2715 = vpack.c.bf16 %v2681, %v2680
        %v2716 = vpack.c.bf16 %v2683, %v2682
        %v2717 = vpack.c.bf16 %v2685, %v2684
        %v2718 = vpack.c.bf16 %v2687, %v2686
        %v2719 = vpack.c.bf16 %v2689, %v2688
        %v2720 = vpack.c.bf16 %v2691, %v2690
        %v2721 = vpack.c.bf16 %v2693, %v2692
        %v2722 = vpack.c.bf16 %v2695, %v2694
        %v2723 = vpack.c.bf16 %v2697, %v2696
        %v2724 = vpack.c.bf16 %v2699, %v2698
        %v2725 = vpack.c.bf16 %v2701, %v2700
        %v2726 = vpack.c.bf16 %v2703, %v2702
        %v2727 = vpack.c.bf16 %v2705, %v2704
        %v2728 = vpack.c.bf16 %v2707, %v2706
        %v2729 = vpack.c.bf16 %v2709, %v2708
        %v2730 = vpack.c.bf16 %v2711, %v2710
        %v2731 = vpack.c.bf16 %v2713, %v2712
        %v2732 = vld [vmem:[#allocation2] sm:$0xff]
        %v2733 = vld [vmem:[#allocation2 + $0x8] sm:$0xff]
        %v2734 = vld [vmem:[#allocation2 + $0x10] sm:$0xff]
        %v2735 = vld [vmem:[#allocation2 + $0x18] sm:$0xff]
        %v2736 = vld [vmem:[#allocation2 + $0x20] sm:$0xff]
        %v2737 = vld [vmem:[#allocation2 + $0x28] sm:$0xff]
        %v2738 = vld [vmem:[#allocation2 + $0x30] sm:$0xff]
        %v2739 = vld [vmem:[#allocation2 + $0x38] sm:$0xff]
        %v2740 = vld [vmem:[#allocation2 + $0x40] sm:$0xff]
        %v2741 = vld [vmem:[#allocation2 + $0x48] sm:$0xff]
        %v2742 = vld [vmem:[#allocation2 + $0x50] sm:$0xff]
        %v2743 = vld [vmem:[#allocation2 + $0x58] sm:$0xff]
        %v2744 = vld [vmem:[#allocation2 + $0x60] sm:$0xff]
        %v2745 = vld [vmem:[#allocation2 + $0x68] sm:$0xff]
        %v2746 = vld [vmem:[#allocation2 + $0x70] sm:$0xff]
        %v2747 = vld [vmem:[#allocation2 + $0x78] sm:$0xff]
        %v2748 = vld [vmem:[#allocation2 + $0x80] sm:$0xff]
        %v2749 = vld [vmem:[#allocation2 + $0x88] sm:$0xff]
        %v2750 = vld [vmem:[#allocation2 + $0x90] sm:$0xff]
        %v2751 = vld [vmem:[#allocation2 + $0x98] sm:$0xff]
        %v2752 = vld [vmem:[#allocation2 + $0xa0] sm:$0xff]
        %v2753 = vld [vmem:[#allocation2 + $0xa8] sm:$0xff]
        %v2754 = vld [vmem:[#allocation2 + $0xb0] sm:$0xff]
        %v2755 = vld [vmem:[#allocation2 + $0xb8] sm:$0xff]
        %v2756 = vld [vmem:[#allocation2 + $0xc0] sm:$0xff]
        %v2757 = vld [vmem:[#allocation2 + $0xc8] sm:$0xff]
        %v2758 = vld [vmem:[#allocation2 + $0xd0] sm:$0xff]
        %v2759 = vld [vmem:[#allocation2 + $0xd8] sm:$0xff]
        %v2760 = vld [vmem:[#allocation2 + $0xe0] sm:$0xff]
        %v2761 = vld [vmem:[#allocation2 + $0xe8] sm:$0xff]
        %v2762 = vld [vmem:[#allocation2 + $0xf0] sm:$0xff]
        %v2763 = vld [vmem:[#allocation2 + $0xf8] sm:$0xff]
        %v2764 = vld [vmem:[#allocation2 + $0x100] sm:$0xff]
        %v2765 = vld [vmem:[#allocation2 + $0x108] sm:$0xff]
        %v2766 = vld [vmem:[#allocation2 + $0x110] sm:$0xff]
        %v2767 = vld [vmem:[#allocation2 + $0x118] sm:$0xff]
        %s2768 = scalar_lea.vmem %s1, 12
        %v2769 = vld [vmem:[%s2768] sm:$0x3]
        %v2771 = vsel %vm377, %v2714, 0
        %v2774 = vsel %vm377, %v2715, 0
        %v2777 = vsel %vm377, %v2716, 0
        %v2780 = vsel %vm377, %v2717, 0
        %v2783 = vsel %vm377, %v2718, 0
        %v2786 = vsel %vm377, %v2719, 0
        %v2789 = vsel %vm377, %v2720, 0
        %v2792 = vsel %vm377, %v2721, 0
        %v2795 = vsel %vm377, %v2722, 0
        %v2798 = vsel %vm377, %v2723, 0
        %v2801 = vsel %vm377, %v2724, 0
        %v2804 = vsel %vm377, %v2725, 0
        %v2807 = vsel %vm377, %v2726, 0
        %v2810 = vsel %vm377, %v2727, 0
        %v2813 = vsel %vm377, %v2728, 0
        %v2816 = vsel %vm377, %v2729, 0
        %v2819 = vsel %vm377, %v2730, 0
        %v2822 = vsel %vm377, %v2731, 0
        %v2825 = vand.u32 %v2769, %v435
        %2827 = vmatprep.subr.bf16.mxu0 0
        %2828 = vmatpush1.bf16.msra.mxu0 0
        %2829 = vmatprep.subr.bf16.mxu0 0
        %2830 = vmatpush1.bf16.msra.mxu0 0
        %2831 = vmatprep.subr.bf16.mxu0 0
        %2832 = vmatpush1.bf16.msra.mxu0 0
        %2833 = vmatprep.subr.bf16.mxu0 0
        %2834 = vmatpush1.bf16.msra.mxu0 0
        %2835 = vmatprep.subr.bf16.mxu0 0
        %2836 = vmatpush1.bf16.msra.mxu0 0
        %2837 = vmatprep.subr.bf16.mxu0 0
        %2838 = vmatpush1.bf16.msra.mxu0 0
        %2839 = vmatprep.subr.bf16.mxu0 0
        %2840 = vmatpush1.bf16.msra.mxu0 0
        %2841 = vmatprep.subr.bf16.mxu0 0
        %2842 = vmatpush1.bf16.msra.mxu0 %v2825
        %2843 = vmatprep.subr.bf16.mxu0 0
        %2844 = vmatpush2.bf16.msra.mxu0 0
        %2845 = vmatprep.subr.bf16.mxu0 0
        %2846 = vmatpush2.bf16.msra.mxu0 0
        %2847 = vmatprep.subr.bf16.mxu0 0
        %2848 = vmatpush2.bf16.msra.mxu0 0
        %2849 = vmatprep.subr.bf16.mxu0 0
        %2850 = vmatpush2.bf16.msra.mxu0 0
        %2851 = vmatprep.subr.bf16.mxu0 0
        %2852 = vmatpush2.bf16.msra.mxu0 0
        %2853 = vmatprep.subr.bf16.mxu0 0
        %2854 = vmatpush2.bf16.msra.mxu0 0
        %2855 = vmatprep.subr.bf16.mxu0 0
        %2856 = vmatpush2.bf16.msra.mxu0 0
        %2857 = vmatprep.subr.bf16.mxu0 0
        %2858 = vmatpush2.bf16.msra.mxu0 0
        %2859 = vmatprep.mubr.bf16.mxu0 0
        %2860 = vmatmul.mubr.bf16.gmra.mxu0 %v2771
        %v2861 = vpop.f32.mrf.mxu0
        %v2862 = vadd.f32 0.0, %v2861
        %v2863 = vpop.f32.mrf.mxu0
        %v2864 = vpop.f32.mrf.mxu0
        %v2865 = vadd.f32 0.0, %v2864
        %v2866 = vpop.f32.mrf.mxu0
        %2867 = vmatprep.mubr.bf16.mxu0 0
        %2868 = vmatmul.mubr.bf16.gmra.mxu0 %v2774
        %v2869 = vpop.f32.mrf.mxu0
        %v2870 = vadd.f32 0.0, %v2869
        %v2871 = vpop.f32.mrf.mxu0
        %v2872 = vpop.f32.mrf.mxu0
        %v2873 = vadd.f32 0.0, %v2872
        %v2874 = vpop.f32.mrf.mxu0
        %2875 = vmatprep.mubr.bf16.mxu0 0
        %2876 = vmatmul.mubr.bf16.gmra.mxu0 %v2777
        %v2877 = vpop.f32.mrf.mxu0
        %v2878 = vadd.f32 0.0, %v2877
        %v2879 = vpop.f32.mrf.mxu0
        %v2880 = vpop.f32.mrf.mxu0
        %v2881 = vadd.f32 0.0, %v2880
        %v2882 = vpop.f32.mrf.mxu0
        %2883 = vmatprep.mubr.bf16.mxu0 0
        %2884 = vmatmul.mubr.bf16.gmra.mxu0 %v2780
        %v2885 = vpop.f32.mrf.mxu0
        %v2886 = vadd.f32 0.0, %v2885
        %v2887 = vpop.f32.mrf.mxu0
        %v2888 = vpop.f32.mrf.mxu0
        %v2889 = vadd.f32 0.0, %v2888
        %v2890 = vpop.f32.mrf.mxu0
        %2891 = vmatprep.mubr.bf16.mxu0 0
        %2892 = vmatmul.mubr.bf16.gmra.mxu0 %v2783
        %v2893 = vpop.f32.mrf.mxu0
        %v2894 = vadd.f32 0.0, %v2893
        %v2895 = vpop.f32.mrf.mxu0
        %v2896 = vpop.f32.mrf.mxu0
        %v2897 = vadd.f32 0.0, %v2896
        %v2898 = vpop.f32.mrf.mxu0
        %2899 = vmatprep.mubr.bf16.mxu0 0
        %2900 = vmatmul.mubr.bf16.gmra.mxu0 %v2786
        %v2901 = vpop.f32.mrf.mxu0
        %v2902 = vadd.f32 0.0, %v2901
        %v2903 = vpop.f32.mrf.mxu0
        %v2904 = vpop.f32.mrf.mxu0
        %v2905 = vadd.f32 0.0, %v2904
        %v2906 = vpop.f32.mrf.mxu0
        %2907 = vmatprep.mubr.bf16.mxu0 0
        %2908 = vmatmul.mubr.bf16.gmra.mxu0 %v2789
        %v2909 = vpop.f32.mrf.mxu0
        %v2910 = vadd.f32 0.0, %v2909
        %v2911 = vpop.f32.mrf.mxu0
        %v2912 = vpop.f32.mrf.mxu0
        %v2913 = vadd.f32 0.0, %v2912
        %v2914 = vpop.f32.mrf.mxu0
        %2915 = vmatprep.mubr.bf16.mxu0 0
        %2916 = vmatmul.mubr.bf16.gmra.mxu0 %v2792
        %v2917 = vpop.f32.mrf.mxu0
        %v2918 = vadd.f32 0.0, %v2917
        %v2919 = vpop.f32.mrf.mxu0
        %v2920 = vpop.f32.mrf.mxu0
        %v2921 = vadd.f32 0.0, %v2920
        %v2922 = vpop.f32.mrf.mxu0
        %2923 = vmatprep.mubr.bf16.mxu0 0
        %2924 = vmatmul.mubr.bf16.gmra.mxu0 %v2795
        %v2925 = vpop.f32.mrf.mxu0
        %v2926 = vadd.f32 0.0, %v2925
        %v2927 = vpop.f32.mrf.mxu0
        %v2928 = vpop.f32.mrf.mxu0
        %v2929 = vadd.f32 0.0, %v2928
        %v2930 = vpop.f32.mrf.mxu0
        %2931 = vmatprep.mubr.bf16.mxu0 0
        %2932 = vmatmul.mubr.bf16.gmra.mxu0 %v2798
        %v2933 = vpop.f32.mrf.mxu0
        %v2934 = vadd.f32 0.0, %v2933
        %v2935 = vpop.f32.mrf.mxu0
        %v2936 = vpop.f32.mrf.mxu0
        %v2937 = vadd.f32 0.0, %v2936
        %v2938 = vpop.f32.mrf.mxu0
        %2939 = vmatprep.mubr.bf16.mxu0 0
        %2940 = vmatmul.mubr.bf16.gmra.mxu0 %v2801
        %v2941 = vpop.f32.mrf.mxu0
        %v2942 = vadd.f32 0.0, %v2941
        %v2943 = vpop.f32.mrf.mxu0
        %v2944 = vpop.f32.mrf.mxu0
        %v2945 = vadd.f32 0.0, %v2944
        %v2946 = vpop.f32.mrf.mxu0
        %2947 = vmatprep.mubr.bf16.mxu0 0
        %2948 = vmatmul.mubr.bf16.gmra.mxu0 %v2804
        %v2949 = vpop.f32.mrf.mxu0
        %v2950 = vadd.f32 0.0, %v2949
        %v2951 = vpop.f32.mrf.mxu0
        %v2952 = vpop.f32.mrf.mxu0
        %v2953 = vadd.f32 0.0, %v2952
        %v2954 = vpop.f32.mrf.mxu0
        %2955 = vmatprep.mubr.bf16.mxu0 0
        %2956 = vmatmul.mubr.bf16.gmra.mxu0 %v2807
        %v2957 = vpop.f32.mrf.mxu0
        %v2958 = vadd.f32 0.0, %v2957
        %v2959 = vpop.f32.mrf.mxu0
        %v2960 = vpop.f32.mrf.mxu0
        %v2961 = vadd.f32 0.0, %v2960
        %v2962 = vpop.f32.mrf.mxu0
        %2963 = vmatprep.mubr.bf16.mxu0 0
        %2964 = vmatmul.mubr.bf16.gmra.mxu0 %v2810
        %v2965 = vpop.f32.mrf.mxu0
        %v2966 = vadd.f32 0.0, %v2965
        %v2967 = vpop.f32.mrf.mxu0
        %v2968 = vpop.f32.mrf.mxu0
        %v2969 = vadd.f32 0.0, %v2968
        %v2970 = vpop.f32.mrf.mxu0
        %2971 = vmatprep.mubr.bf16.mxu0 0
        %2972 = vmatmul.mubr.bf16.gmra.mxu0 %v2813
        %v2973 = vpop.f32.mrf.mxu0
        %v2974 = vadd.f32 0.0, %v2973
        %v2975 = vpop.f32.mrf.mxu0
        %v2976 = vpop.f32.mrf.mxu0
        %v2977 = vadd.f32 0.0, %v2976
        %v2978 = vpop.f32.mrf.mxu0
        %2979 = vmatprep.mubr.bf16.mxu0 0
        %2980 = vmatmul.mubr.bf16.gmra.mxu0 %v2816
        %v2981 = vpop.f32.mrf.mxu0
        %v2982 = vadd.f32 0.0, %v2981
        %v2983 = vpop.f32.mrf.mxu0
        %v2984 = vpop.f32.mrf.mxu0
        %v2985 = vadd.f32 0.0, %v2984
        %v2986 = vpop.f32.mrf.mxu0
        %2987 = vmatprep.mubr.bf16.mxu0 0
        %2988 = vmatmul.mubr.bf16.gmra.mxu0 %v2819
        %v2989 = vpop.f32.mrf.mxu0
        %v2990 = vadd.f32 0.0, %v2989
        %v2991 = vpop.f32.mrf.mxu0
        %v2992 = vpop.f32.mrf.mxu0
        %v2993 = vadd.f32 0.0, %v2992
        %v2994 = vpop.f32.mrf.mxu0
        %2995 = vmatprep.mubr.bf16.mxu0 0
        %2996 = vmatmul.mubr.bf16.gmra.mxu0 %v2822
        %v2997 = vpop.f32.mrf.mxu0
        %v2998 = vadd.f32 0.0, %v2997
        %v2999 = vpop.f32.mrf.mxu0
        %v3000 = vpop.f32.mrf.mxu0
        %v3001 = vadd.f32 0.0, %v3000
        %v3002 = vpop.f32.mrf.mxu0
        %3003 = vdwg.mxu0
        %v3004 = vadd.f32 %v2732, %v2862
        %v3005 = vadd.f32 %v2733, %v2865
        %v3006 = vadd.f32 %v2734, %v2870
        %v3007 = vadd.f32 %v2735, %v2873
        %v3008 = vadd.f32 %v2736, %v2878
        %v3009 = vadd.f32 %v2737, %v2881
        %v3010 = vadd.f32 %v2738, %v2886
        %v3011 = vadd.f32 %v2739, %v2889
        %v3012 = vadd.f32 %v2740, %v2894
        %v3013 = vadd.f32 %v2741, %v2897
        %v3014 = vadd.f32 %v2742, %v2902
        %v3015 = vadd.f32 %v2743, %v2905
        %v3016 = vadd.f32 %v2744, %v2910
        %v3017 = vadd.f32 %v2745, %v2913
        %v3018 = vadd.f32 %v2746, %v2918
        %v3019 = vadd.f32 %v2747, %v2921
        %v3020 = vadd.f32 %v2748, %v2926
        %v3021 = vadd.f32 %v2749, %v2929
        %v3022 = vadd.f32 %v2750, %v2934
        %v3023 = vadd.f32 %v2751, %v2937
        %v3024 = vadd.f32 %v2752, %v2942
        %v3025 = vadd.f32 %v2753, %v2945
        %v3026 = vadd.f32 %v2754, %v2950
        %v3027 = vadd.f32 %v2755, %v2953
        %v3028 = vadd.f32 %v2756, %v2958
        %v3029 = vadd.f32 %v2757, %v2961
        %v3030 = vadd.f32 %v2758, %v2966
        %v3031 = vadd.f32 %v2759, %v2969
        %v3032 = vadd.f32 %v2760, %v2974
        %v3033 = vadd.f32 %v2761, %v2977
        %v3034 = vadd.f32 %v2762, %v2982
        %v3035 = vadd.f32 %v2763, %v2985
        %v3036 = vadd.f32 %v2764, %v2990
        %v3037 = vadd.f32 %v2765, %v2993
        %v3038 = vadd.f32 %v2766, %v2998
        %v3039 = vadd.f32 %v2767, %v3001
        %3040 = vst [vmem:[#allocation2] sm:$0xff] %v3004
        %3041 = vst [vmem:[#allocation2 + $0x8] sm:$0xff] %v3005
        %3042 = vst [vmem:[#allocation2 + $0x10] sm:$0xff] %v3006
        %3043 = vst [vmem:[#allocation2 + $0x18] sm:$0xff] %v3007
        %3044 = vst [vmem:[#allocation2 + $0x20] sm:$0xff] %v3008
        %3045 = vst [vmem:[#allocation2 + $0x28] sm:$0xff] %v3009
        %3046 = vst [vmem:[#allocation2 + $0x30] sm:$0xff] %v3010
        %3047 = vst [vmem:[#allocation2 + $0x38] sm:$0xff] %v3011
        %3048 = vst [vmem:[#allocation2 + $0x40] sm:$0xff] %v3012
        %3049 = vst [vmem:[#allocation2 + $0x48] sm:$0xff] %v3013
        %3050 = vst [vmem:[#allocation2 + $0x50] sm:$0xff] %v3014
        %3051 = vst [vmem:[#allocation2 + $0x58] sm:$0xff] %v3015
        %3052 = vst [vmem:[#allocation2 + $0x60] sm:$0xff] %v3016
        %3053 = vst [vmem:[#allocation2 + $0x68] sm:$0xff] %v3017
        %3054 = vst [vmem:[#allocation2 + $0x70] sm:$0xff] %v3018
        %3055 = vst [vmem:[#allocation2 + $0x78] sm:$0xff] %v3019
        %3056 = vst [vmem:[#allocation2 + $0x80] sm:$0xff] %v3020
        %3057 = vst [vmem:[#allocation2 + $0x88] sm:$0xff] %v3021
        %3058 = vst [vmem:[#allocation2 + $0x90] sm:$0xff] %v3022
        %3059 = vst [vmem:[#allocation2 + $0x98] sm:$0xff] %v3023
        %3060 = vst [vmem:[#allocation2 + $0xa0] sm:$0xff] %v3024
        %3061 = vst [vmem:[#allocation2 + $0xa8] sm:$0xff] %v3025
        %3062 = vst [vmem:[#allocation2 + $0xb0] sm:$0xff] %v3026
        %3063 = vst [vmem:[#allocation2 + $0xb8] sm:$0xff] %v3027
        %3064 = vst [vmem:[#allocation2 + $0xc0] sm:$0xff] %v3028
        %3065 = vst [vmem:[#allocation2 + $0xc8] sm:$0xff] %v3029
        %3066 = vst [vmem:[#allocation2 + $0xd0] sm:$0xff] %v3030
        %3067 = vst [vmem:[#allocation2 + $0xd8] sm:$0xff] %v3031
        %3068 = vst [vmem:[#allocation2 + $0xe0] sm:$0xff] %v3032
        %3069 = vst [vmem:[#allocation2 + $0xe8] sm:$0xff] %v3033
        %3070 = vst [vmem:[#allocation2 + $0xf0] sm:$0xff] %v3034
        %3071 = vst [vmem:[#allocation2 + $0xf8] sm:$0xff] %v3035
        %3072 = vst [vmem:[#allocation2 + $0x100] sm:$0xff] %v3036
        %3073 = vst [vmem:[#allocation2 + $0x108] sm:$0xff] %v3037
        %3074 = vst [vmem:[#allocation2 + $0x110] sm:$0xff] %v3038
        %3075 = vst [vmem:[#allocation2 + $0x118] sm:$0xff] %v3039
        %v3076 = vld [vmem:[%s248 + $0x25] sm:$0xff]
        %v3077 = vld [vmem:[%s248 + $0x2d] sm:$0xff]
        %v3078 = vld [vmem:[%s248 + $0x35] sm:$0xff]
        %v3079 = vld [vmem:[%s248 + $0x3d] sm:$0xff]
        %v3080 = vld [vmem:[%s248 + $0x45] sm:$0xff]
        %v3081 = vld [vmem:[%s248 + $0x4d] sm:$0xff]
        %v3082 = vld [vmem:[%s248 + $0x55] sm:$0xff]
        %v3083 = vld [vmem:[%s248 + $0x5d] sm:$0xff]
        %v3084 = vld [vmem:[%s248 + $0x65] sm:$0xff]
        %v3085 = vld [vmem:[%s248 + $0x6d] sm:$0xff]
        %v3086 = vld [vmem:[%s248 + $0x75] sm:$0xff]
        %v3087 = vld [vmem:[%s248 + $0x7d] sm:$0xff]
        %v3088 = vld [vmem:[%s248 + $0x85] sm:$0xff]
        %v3089 = vld [vmem:[%s248 + $0x8d] sm:$0xff]
        %v3090 = vld [vmem:[%s248 + $0x95] sm:$0xff]
        %v3091 = vld [vmem:[%s248 + $0x9d] sm:$0xff]
        %v3092 = vld [vmem:[%s248 + $0xa5] sm:$0xff]
        %v3093 = vld [vmem:[%s248 + $0xad] sm:$0xff]
        %v3094 = vld [vmem:[%s248 + $0xb5] sm:$0xff]
        %v3095 = vld [vmem:[%s248 + $0xbd] sm:$0xff]
        %v3096 = vld [vmem:[%s248 + $0xc5] sm:$0xff]
        %v3097 = vld [vmem:[%s248 + $0xcd] sm:$0xff]
        %v3098 = vld [vmem:[%s248 + $0xd5] sm:$0xff]
        %v3099 = vld [vmem:[%s248 + $0xdd] sm:$0xff]
        %v3100 = vld [vmem:[%s248 + $0xe5] sm:$0xff]
        %v3101 = vld [vmem:[%s248 + $0xed] sm:$0xff]
        %v3102 = vld [vmem:[%s248 + $0xf5] sm:$0xff]
        %v3103 = vld [vmem:[%s248 + $0xfd] sm:$0xff]
        %v3104 = vld [vmem:[%s248 + $0x105] sm:$0xff]
        %v3105 = vld [vmem:[%s248 + $0x10d] sm:$0xff]
        %v3106 = vld [vmem:[%s248 + $0x115] sm:$0xff]
        %v3107 = vld [vmem:[%s248 + $0x11d] sm:$0xff]
        %v3108 = vld [vmem:[%s248 + $0x125] sm:$0xff]
        %v3109 = vld [vmem:[%s248 + $0x12d] sm:$0xff]
        %v3110 = vld [vmem:[%s248 + $0x135] sm:$0xff]
        %v3111 = vld [vmem:[%s248 + $0x13d] sm:$0xff]
        %v3112 = vpack.c.bf16 %v3077, %v3076
        %v3113 = vpack.c.bf16 %v3079, %v3078
        %v3114 = vpack.c.bf16 %v3081, %v3080
        %v3115 = vpack.c.bf16 %v3083, %v3082
        %v3116 = vpack.c.bf16 %v3085, %v3084
        %v3117 = vpack.c.bf16 %v3087, %v3086
        %v3118 = vpack.c.bf16 %v3089, %v3088
        %v3119 = vpack.c.bf16 %v3091, %v3090
        %v3120 = vpack.c.bf16 %v3093, %v3092
        %v3121 = vpack.c.bf16 %v3095, %v3094
        %v3122 = vpack.c.bf16 %v3097, %v3096
        %v3123 = vpack.c.bf16 %v3099, %v3098
        %v3124 = vpack.c.bf16 %v3101, %v3100
        %v3125 = vpack.c.bf16 %v3103, %v3102
        %v3126 = vpack.c.bf16 %v3105, %v3104
        %v3127 = vpack.c.bf16 %v3107, %v3106
        %v3128 = vpack.c.bf16 %v3109, %v3108
        %v3129 = vpack.c.bf16 %v3111, %v3110
        %v3130 = vld [vmem:[#allocation2] sm:$0xff]
        %v3131 = vld [vmem:[#allocation2 + $0x8] sm:$0xff]
        %v3132 = vld [vmem:[#allocation2 + $0x10] sm:$0xff]
        %v3133 = vld [vmem:[#allocation2 + $0x18] sm:$0xff]
        %v3134 = vld [vmem:[#allocation2 + $0x20] sm:$0xff]
        %v3135 = vld [vmem:[#allocation2 + $0x28] sm:$0xff]
        %v3136 = vld [vmem:[#allocation2 + $0x30] sm:$0xff]
        %v3137 = vld [vmem:[#allocation2 + $0x38] sm:$0xff]
        %v3138 = vld [vmem:[#allocation2 + $0x40] sm:$0xff]
        %v3139 = vld [vmem:[#allocation2 + $0x48] sm:$0xff]
        %v3140 = vld [vmem:[#allocation2 + $0x50] sm:$0xff]
        %v3141 = vld [vmem:[#allocation2 + $0x58] sm:$0xff]
        %v3142 = vld [vmem:[#allocation2 + $0x60] sm:$0xff]
        %v3143 = vld [vmem:[#allocation2 + $0x68] sm:$0xff]
        %v3144 = vld [vmem:[#allocation2 + $0x70] sm:$0xff]
        %v3145 = vld [vmem:[#allocation2 + $0x78] sm:$0xff]
        %v3146 = vld [vmem:[#allocation2 + $0x80] sm:$0xff]
        %v3147 = vld [vmem:[#allocation2 + $0x88] sm:$0xff]
        %v3148 = vld [vmem:[#allocation2 + $0x90] sm:$0xff]
        %v3149 = vld [vmem:[#allocation2 + $0x98] sm:$0xff]
        %v3150 = vld [vmem:[#allocation2 + $0xa0] sm:$0xff]
        %v3151 = vld [vmem:[#allocation2 + $0xa8] sm:$0xff]
        %v3152 = vld [vmem:[#allocation2 + $0xb0] sm:$0xff]
        %v3153 = vld [vmem:[#allocation2 + $0xb8] sm:$0xff]
        %v3154 = vld [vmem:[#allocation2 + $0xc0] sm:$0xff]
        %v3155 = vld [vmem:[#allocation2 + $0xc8] sm:$0xff]
        %v3156 = vld [vmem:[#allocation2 + $0xd0] sm:$0xff]
        %v3157 = vld [vmem:[#allocation2 + $0xd8] sm:$0xff]
        %v3158 = vld [vmem:[#allocation2 + $0xe0] sm:$0xff]
        %v3159 = vld [vmem:[#allocation2 + $0xe8] sm:$0xff]
        %v3160 = vld [vmem:[#allocation2 + $0xf0] sm:$0xff]
        %v3161 = vld [vmem:[#allocation2 + $0xf8] sm:$0xff]
        %v3162 = vld [vmem:[#allocation2 + $0x100] sm:$0xff]
        %v3163 = vld [vmem:[#allocation2 + $0x108] sm:$0xff]
        %v3164 = vld [vmem:[#allocation2 + $0x110] sm:$0xff]
        %v3165 = vld [vmem:[#allocation2 + $0x118] sm:$0xff]
        %s3166 = scalar_lea.vmem %s1, 14
        %v3167 = vld [vmem:[%s3166] sm:$0x3]
        %v3169 = vsel %vm377, %v3112, 0
        %v3172 = vsel %vm377, %v3113, 0
        %v3175 = vsel %vm377, %v3114, 0
        %v3178 = vsel %vm377, %v3115, 0
        %v3181 = vsel %vm377, %v3116, 0
        %v3184 = vsel %vm377, %v3117, 0
        %v3187 = vsel %vm377, %v3118, 0
        %v3190 = vsel %vm377, %v3119, 0
        %v3193 = vsel %vm377, %v3120, 0
        %v3196 = vsel %vm377, %v3121, 0
        %v3199 = vsel %vm377, %v3122, 0
        %v3202 = vsel %vm377, %v3123, 0
        %v3205 = vsel %vm377, %v3124, 0
        %v3208 = vsel %vm377, %v3125, 0
        %v3211 = vsel %vm377, %v3126, 0
        %v3214 = vsel %vm377, %v3127, 0
        %v3217 = vsel %vm377, %v3128, 0
        %v3220 = vsel %vm377, %v3129, 0
        %v3223 = vand.u32 %v3167, %v435
        %3225 = vmatprep.subr.bf16.mxu0 0
        %3226 = vmatpush1.bf16.msra.mxu0 0
        %3227 = vmatprep.subr.bf16.mxu0 0
        %3228 = vmatpush1.bf16.msra.mxu0 0
        %3229 = vmatprep.subr.bf16.mxu0 0
        %3230 = vmatpush1.bf16.msra.mxu0 0
        %3231 = vmatprep.subr.bf16.mxu0 0
        %3232 = vmatpush1.bf16.msra.mxu0 0
        %3233 = vmatprep.subr.bf16.mxu0 0
        %3234 = vmatpush1.bf16.msra.mxu0 0
        %3235 = vmatprep.subr.bf16.mxu0 0
        %3236 = vmatpush1.bf16.msra.mxu0 0
        %3237 = vmatprep.subr.bf16.mxu0 0
        %3238 = vmatpush1.bf16.msra.mxu0 0
        %3239 = vmatprep.subr.bf16.mxu0 0
        %3240 = vmatpush1.bf16.msra.mxu0 %v3223
        %3241 = vmatprep.subr.bf16.mxu0 0
        %3242 = vmatpush2.bf16.msra.mxu0 0
        %3243 = vmatprep.subr.bf16.mxu0 0
        %3244 = vmatpush2.bf16.msra.mxu0 0
        %3245 = vmatprep.subr.bf16.mxu0 0
        %3246 = vmatpush2.bf16.msra.mxu0 0
        %3247 = vmatprep.subr.bf16.mxu0 0
        %3248 = vmatpush2.bf16.msra.mxu0 0
        %3249 = vmatprep.subr.bf16.mxu0 0
        %3250 = vmatpush2.bf16.msra.mxu0 0
        %3251 = vmatprep.subr.bf16.mxu0 0
        %3252 = vmatpush2.bf16.msra.mxu0 0
        %3253 = vmatprep.subr.bf16.mxu0 0
        %3254 = vmatpush2.bf16.msra.mxu0 0
        %3255 = vmatprep.subr.bf16.mxu0 0
        %3256 = vmatpush2.bf16.msra.mxu0 0
        %3257 = vmatprep.mubr.bf16.mxu0 0
        %3258 = vmatmul.mubr.bf16.gmra.mxu0 %v3169
        %v3259 = vpop.f32.mrf.mxu0
        %v3260 = vadd.f32 0.0, %v3259
        %v3261 = vpop.f32.mrf.mxu0
        %v3262 = vpop.f32.mrf.mxu0
        %v3263 = vadd.f32 0.0, %v3262
        %v3264 = vpop.f32.mrf.mxu0
        %3265 = vmatprep.mubr.bf16.mxu0 0
        %3266 = vmatmul.mubr.bf16.gmra.mxu0 %v3172
        %v3267 = vpop.f32.mrf.mxu0
        %v3268 = vadd.f32 0.0, %v3267
        %v3269 = vpop.f32.mrf.mxu0
        %v3270 = vpop.f32.mrf.mxu0
        %v3271 = vadd.f32 0.0, %v3270
        %v3272 = vpop.f32.mrf.mxu0
        %3273 = vmatprep.mubr.bf16.mxu0 0
        %3274 = vmatmul.mubr.bf16.gmra.mxu0 %v3175
        %v3275 = vpop.f32.mrf.mxu0
        %v3276 = vadd.f32 0.0, %v3275
        %v3277 = vpop.f32.mrf.mxu0
        %v3278 = vpop.f32.mrf.mxu0
        %v3279 = vadd.f32 0.0, %v3278
        %v3280 = vpop.f32.mrf.mxu0
        %3281 = vmatprep.mubr.bf16.mxu0 0
        %3282 = vmatmul.mubr.bf16.gmra.mxu0 %v3178
        %v3283 = vpop.f32.mrf.mxu0
        %v3284 = vadd.f32 0.0, %v3283
        %v3285 = vpop.f32.mrf.mxu0
        %v3286 = vpop.f32.mrf.mxu0
        %v3287 = vadd.f32 0.0, %v3286
        %v3288 = vpop.f32.mrf.mxu0
        %3289 = vmatprep.mubr.bf16.mxu0 0
        %3290 = vmatmul.mubr.bf16.gmra.mxu0 %v3181
        %v3291 = vpop.f32.mrf.mxu0
        %v3292 = vadd.f32 0.0, %v3291
        %v3293 = vpop.f32.mrf.mxu0
        %v3294 = vpop.f32.mrf.mxu0
        %v3295 = vadd.f32 0.0, %v3294
        %v3296 = vpop.f32.mrf.mxu0
        %3297 = vmatprep.mubr.bf16.mxu0 0
        %3298 = vmatmul.mubr.bf16.gmra.mxu0 %v3184
        %v3299 = vpop.f32.mrf.mxu0
        %v3300 = vadd.f32 0.0, %v3299
        %v3301 = vpop.f32.mrf.mxu0
        %v3302 = vpop.f32.mrf.mxu0
        %v3303 = vadd.f32 0.0, %v3302
        %v3304 = vpop.f32.mrf.mxu0
        %3305 = vmatprep.mubr.bf16.mxu0 0
        %3306 = vmatmul.mubr.bf16.gmra.mxu0 %v3187
        %v3307 = vpop.f32.mrf.mxu0
        %v3308 = vadd.f32 0.0, %v3307
        %v3309 = vpop.f32.mrf.mxu0
        %v3310 = vpop.f32.mrf.mxu0
        %v3311 = vadd.f32 0.0, %v3310
        %v3312 = vpop.f32.mrf.mxu0
        %3313 = vmatprep.mubr.bf16.mxu0 0
        %3314 = vmatmul.mubr.bf16.gmra.mxu0 %v3190
        %v3315 = vpop.f32.mrf.mxu0
        %v3316 = vadd.f32 0.0, %v3315
        %v3317 = vpop.f32.mrf.mxu0
        %v3318 = vpop.f32.mrf.mxu0
        %v3319 = vadd.f32 0.0, %v3318
        %v3320 = vpop.f32.mrf.mxu0
        %3321 = vmatprep.mubr.bf16.mxu0 0
        %3322 = vmatmul.mubr.bf16.gmra.mxu0 %v3193
        %v3323 = vpop.f32.mrf.mxu0
        %v3324 = vadd.f32 0.0, %v3323
        %v3325 = vpop.f32.mrf.mxu0
        %v3326 = vpop.f32.mrf.mxu0
        %v3327 = vadd.f32 0.0, %v3326
        %v3328 = vpop.f32.mrf.mxu0
        %3329 = vmatprep.mubr.bf16.mxu0 0
        %3330 = vmatmul.mubr.bf16.gmra.mxu0 %v3196
        %v3331 = vpop.f32.mrf.mxu0
        %v3332 = vadd.f32 0.0, %v3331
        %v3333 = vpop.f32.mrf.mxu0
        %v3334 = vpop.f32.mrf.mxu0
        %v3335 = vadd.f32 0.0, %v3334
        %v3336 = vpop.f32.mrf.mxu0
        %3337 = vmatprep.mubr.bf16.mxu0 0
        %3338 = vmatmul.mubr.bf16.gmra.mxu0 %v3199
        %v3339 = vpop.f32.mrf.mxu0
        %v3340 = vadd.f32 0.0, %v3339
        %v3341 = vpop.f32.mrf.mxu0
        %v3342 = vpop.f32.mrf.mxu0
        %v3343 = vadd.f32 0.0, %v3342
        %v3344 = vpop.f32.mrf.mxu0
        %3345 = vmatprep.mubr.bf16.mxu0 0
        %3346 = vmatmul.mubr.bf16.gmra.mxu0 %v3202
        %v3347 = vpop.f32.mrf.mxu0
        %v3348 = vadd.f32 0.0, %v3347
        %v3349 = vpop.f32.mrf.mxu0
        %v3350 = vpop.f32.mrf.mxu0
        %v3351 = vadd.f32 0.0, %v3350
        %v3352 = vpop.f32.mrf.mxu0
        %3353 = vmatprep.mubr.bf16.mxu0 0
        %3354 = vmatmul.mubr.bf16.gmra.mxu0 %v3205
        %v3355 = vpop.f32.mrf.mxu0
        %v3356 = vadd.f32 0.0, %v3355
        %v3357 = vpop.f32.mrf.mxu0
        %v3358 = vpop.f32.mrf.mxu0
        %v3359 = vadd.f32 0.0, %v3358
        %v3360 = vpop.f32.mrf.mxu0
        %3361 = vmatprep.mubr.bf16.mxu0 0
        %3362 = vmatmul.mubr.bf16.gmra.mxu0 %v3208
        %v3363 = vpop.f32.mrf.mxu0
        %v3364 = vadd.f32 0.0, %v3363
        %v3365 = vpop.f32.mrf.mxu0
        %v3366 = vpop.f32.mrf.mxu0
        %v3367 = vadd.f32 0.0, %v3366
        %v3368 = vpop.f32.mrf.mxu0
        %3369 = vmatprep.mubr.bf16.mxu0 0
        %3370 = vmatmul.mubr.bf16.gmra.mxu0 %v3211
        %v3371 = vpop.f32.mrf.mxu0
        %v3372 = vadd.f32 0.0, %v3371
        %v3373 = vpop.f32.mrf.mxu0
        %v3374 = vpop.f32.mrf.mxu0
        %v3375 = vadd.f32 0.0, %v3374
        %v3376 = vpop.f32.mrf.mxu0
        %3377 = vmatprep.mubr.bf16.mxu0 0
        %3378 = vmatmul.mubr.bf16.gmra.mxu0 %v3214
        %v3379 = vpop.f32.mrf.mxu0
        %v3380 = vadd.f32 0.0, %v3379
        %v3381 = vpop.f32.mrf.mxu0
        %v3382 = vpop.f32.mrf.mxu0
        %v3383 = vadd.f32 0.0, %v3382
        %v3384 = vpop.f32.mrf.mxu0
        %3385 = vmatprep.mubr.bf16.mxu0 0
        %3386 = vmatmul.mubr.bf16.gmra.mxu0 %v3217
        %v3387 = vpop.f32.mrf.mxu0
        %v3388 = vadd.f32 0.0, %v3387
        %v3389 = vpop.f32.mrf.mxu0
        %v3390 = vpop.f32.mrf.mxu0
        %v3391 = vadd.f32 0.0, %v3390
        %v3392 = vpop.f32.mrf.mxu0
        %3393 = vmatprep.mubr.bf16.mxu0 0
        %3394 = vmatmul.mubr.bf16.gmra.mxu0 %v3220
        %v3395 = vpop.f32.mrf.mxu0
        %v3396 = vadd.f32 0.0, %v3395
        %v3397 = vpop.f32.mrf.mxu0
        %v3398 = vpop.f32.mrf.mxu0
        %v3399 = vadd.f32 0.0, %v3398
        %v3400 = vpop.f32.mrf.mxu0
        %3401 = vdwg.mxu0
        %v3402 = vadd.f32 %v3130, %v3260
        %v3403 = vadd.f32 %v3131, %v3263
        %v3404 = vadd.f32 %v3132, %v3268
        %v3405 = vadd.f32 %v3133, %v3271
        %v3406 = vadd.f32 %v3134, %v3276
        %v3407 = vadd.f32 %v3135, %v3279
        %v3408 = vadd.f32 %v3136, %v3284
        %v3409 = vadd.f32 %v3137, %v3287
        %v3410 = vadd.f32 %v3138, %v3292
        %v3411 = vadd.f32 %v3139, %v3295
        %v3412 = vadd.f32 %v3140, %v3300
        %v3413 = vadd.f32 %v3141, %v3303
        %v3414 = vadd.f32 %v3142, %v3308
        %v3415 = vadd.f32 %v3143, %v3311
        %v3416 = vadd.f32 %v3144, %v3316
        %v3417 = vadd.f32 %v3145, %v3319
        %v3418 = vadd.f32 %v3146, %v3324
        %v3419 = vadd.f32 %v3147, %v3327
        %v3420 = vadd.f32 %v3148, %v3332
        %v3421 = vadd.f32 %v3149, %v3335
        %v3422 = vadd.f32 %v3150, %v3340
        %v3423 = vadd.f32 %v3151, %v3343
        %v3424 = vadd.f32 %v3152, %v3348
        %v3425 = vadd.f32 %v3153, %v3351
        %v3426 = vadd.f32 %v3154, %v3356
        %v3427 = vadd.f32 %v3155, %v3359
        %v3428 = vadd.f32 %v3156, %v3364
        %v3429 = vadd.f32 %v3157, %v3367
        %v3430 = vadd.f32 %v3158, %v3372
        %v3431 = vadd.f32 %v3159, %v3375
        %v3432 = vadd.f32 %v3160, %v3380
        %v3433 = vadd.f32 %v3161, %v3383
        %v3434 = vadd.f32 %v3162, %v3388
        %v3435 = vadd.f32 %v3163, %v3391
        %v3436 = vadd.f32 %v3164, %v3396
        %v3437 = vadd.f32 %v3165, %v3399
        %3438 = vst [vmem:[#allocation2] sm:$0xff] %v3402
        %3439 = vst [vmem:[#allocation2 + $0x8] sm:$0xff] %v3403
        %3440 = vst [vmem:[#allocation2 + $0x10] sm:$0xff] %v3404
        %3441 = vst [vmem:[#allocation2 + $0x18] sm:$0xff] %v3405
        %3442 = vst [vmem:[#allocation2 + $0x20] sm:$0xff] %v3406
        %3443 = vst [vmem:[#allocation2 + $0x28] sm:$0xff] %v3407
        %3444 = vst [vmem:[#allocation2 + $0x30] sm:$0xff] %v3408
        %3445 = vst [vmem:[#allocation2 + $0x38] sm:$0xff] %v3409
        %3446 = vst [vmem:[#allocation2 + $0x40] sm:$0xff] %v3410
        %3447 = vst [vmem:[#allocation2 + $0x48] sm:$0xff] %v3411
        %3448 = vst [vmem:[#allocation2 + $0x50] sm:$0xff] %v3412
        %3449 = vst [vmem:[#allocation2 + $0x58] sm:$0xff] %v3413
        %3450 = vst [vmem:[#allocation2 + $0x60] sm:$0xff] %v3414
        %3451 = vst [vmem:[#allocation2 + $0x68] sm:$0xff] %v3415
        %3452 = vst [vmem:[#allocation2 + $0x70] sm:$0xff] %v3416
        %3453 = vst [vmem:[#allocation2 + $0x78] sm:$0xff] %v3417
        %3454 = vst [vmem:[#allocation2 + $0x80] sm:$0xff] %v3418
        %3455 = vst [vmem:[#allocation2 + $0x88] sm:$0xff] %v3419
        %3456 = vst [vmem:[#allocation2 + $0x90] sm:$0xff] %v3420
        %3457 = vst [vmem:[#allocation2 + $0x98] sm:$0xff] %v3421
        %3458 = vst [vmem:[#allocation2 + $0xa0] sm:$0xff] %v3422
        %3459 = vst [vmem:[#allocation2 + $0xa8] sm:$0xff] %v3423
        %3460 = vst [vmem:[#allocation2 + $0xb0] sm:$0xff] %v3424
        %3461 = vst [vmem:[#allocation2 + $0xb8] sm:$0xff] %v3425
        %3462 = vst [vmem:[#allocation2 + $0xc0] sm:$0xff] %v3426
        %3463 = vst [vmem:[#allocation2 + $0xc8] sm:$0xff] %v3427
        %3464 = vst [vmem:[#allocation2 + $0xd0] sm:$0xff] %v3428
        %3465 = vst [vmem:[#allocation2 + $0xd8] sm:$0xff] %v3429
        %3466 = vst [vmem:[#allocation2 + $0xe0] sm:$0xff] %v3430
        %3467 = vst [vmem:[#allocation2 + $0xe8] sm:$0xff] %v3431
        %3468 = vst [vmem:[#allocation2 + $0xf0] sm:$0xff] %v3432
        %3469 = vst [vmem:[#allocation2 + $0xf8] sm:$0xff] %v3433
        %3470 = vst [vmem:[#allocation2 + $0x100] sm:$0xff] %v3434
        %3471 = vst [vmem:[#allocation2 + $0x108] sm:$0xff] %v3435
        %3472 = vst [vmem:[#allocation2 + $0x110] sm:$0xff] %v3436
        %3473 = vst [vmem:[#allocation2 + $0x118] sm:$0xff] %v3437
        %v3474 = vld [vmem:[%s248 + $0x26] sm:$0xff]
        %v3475 = vld [vmem:[%s248 + $0x2e] sm:$0xff]
        %v3476 = vld [vmem:[%s248 + $0x36] sm:$0xff]
        %v3477 = vld [vmem:[%s248 + $0x3e] sm:$0xff]
        %v3478 = vld [vmem:[%s248 + $0x46] sm:$0xff]
        %v3479 = vld [vmem:[%s248 + $0x4e] sm:$0xff]
        %v3480 = vld [vmem:[%s248 + $0x56] sm:$0xff]
        %v3481 = vld [vmem:[%s248 + $0x5e] sm:$0xff]
        %v3482 = vld [vmem:[%s248 + $0x66] sm:$0xff]
        %v3483 = vld [vmem:[%s248 + $0x6e] sm:$0xff]
        %v3484 = vld [vmem:[%s248 + $0x76] sm:$0xff]
        %v3485 = vld [vmem:[%s248 + $0x7e] sm:$0xff]
        %v3486 = vld [vmem:[%s248 + $0x86] sm:$0xff]
        %v3487 = vld [vmem:[%s248 + $0x8e] sm:$0xff]
        %v3488 = vld [vmem:[%s248 + $0x96] sm:$0xff]
        %v3489 = vld [vmem:[%s248 + $0x9e] sm:$0xff]
        %v3490 = vld [vmem:[%s248 + $0xa6] sm:$0xff]
        %v3491 = vld [vmem:[%s248 + $0xae] sm:$0xff]
        %v3492 = vld [vmem:[%s248 + $0xb6] sm:$0xff]
        %v3493 = vld [vmem:[%s248 + $0xbe] sm:$0xff]
        %v3494 = vld [vmem:[%s248 + $0xc6] sm:$0xff]
        %v3495 = vld [vmem:[%s248 + $0xce] sm:$0xff]
        %v3496 = vld [vmem:[%s248 + $0xd6] sm:$0xff]
        %v3497 = vld [vmem:[%s248 + $0xde] sm:$0xff]
        %v3498 = vld [vmem:[%s248 + $0xe6] sm:$0xff]
        %v3499 = vld [vmem:[%s248 + $0xee] sm:$0xff]
        %v3500 = vld [vmem:[%s248 + $0xf6] sm:$0xff]
        %v3501 = vld [vmem:[%s248 + $0xfe] sm:$0xff]
        %v3502 = vld [vmem:[%s248 + $0x106] sm:$0xff]
        %v3503 = vld [vmem:[%s248 + $0x10e] sm:$0xff]
        %v3504 = vld [vmem:[%s248 + $0x116] sm:$0xff]
        %v3505 = vld [vmem:[%s248 + $0x11e] sm:$0xff]
        %v3506 = vld [vmem:[%s248 + $0x126] sm:$0xff]
        %v3507 = vld [vmem:[%s248 + $0x12e] sm:$0xff]
        %v3508 = vld [vmem:[%s248 + $0x136] sm:$0xff]
        %v3509 = vld [vmem:[%s248 + $0x13e] sm:$0xff]
        %v3510 = vpack.c.bf16 %v3475, %v3474
        %v3511 = vpack.c.bf16 %v3477, %v3476
        %v3512 = vpack.c.bf16 %v3479, %v3478
        %v3513 = vpack.c.bf16 %v3481, %v3480
        %v3514 = vpack.c.bf16 %v3483, %v3482
        %v3515 = vpack.c.bf16 %v3485, %v3484
        %v3516 = vpack.c.bf16 %v3487, %v3486
        %v3517 = vpack.c.bf16 %v3489, %v3488
        %v3518 = vpack.c.bf16 %v3491, %v3490
        %v3519 = vpack.c.bf16 %v3493, %v3492
        %v3520 = vpack.c.bf16 %v3495, %v3494
        %v3521 = vpack.c.bf16 %v3497, %v3496
        %v3522 = vpack.c.bf16 %v3499, %v3498
        %v3523 = vpack.c.bf16 %v3501, %v3500
        %v3524 = vpack.c.bf16 %v3503, %v3502
        %v3525 = vpack.c.bf16 %v3505, %v3504
        %v3526 = vpack.c.bf16 %v3507, %v3506
        %v3527 = vpack.c.bf16 %v3509, %v3508
        %v3528 = vld [vmem:[#allocation2] sm:$0xff]
        %v3529 = vld [vmem:[#allocation2 + $0x8] sm:$0xff]
        %v3530 = vld [vmem:[#allocation2 + $0x10] sm:$0xff]
        %v3531 = vld [vmem:[#allocation2 + $0x18] sm:$0xff]
        %v3532 = vld [vmem:[#allocation2 + $0x20] sm:$0xff]
        %v3533 = vld [vmem:[#allocation2 + $0x28] sm:$0xff]
        %v3534 = vld [vmem:[#allocation2 + $0x30] sm:$0xff]
        %v3535 = vld [vmem:[#allocation2 + $0x38] sm:$0xff]
        %v3536 = vld [vmem:[#allocation2 + $0x40] sm:$0xff]
        %v3537 = vld [vmem:[#allocation2 + $0x48] sm:$0xff]
        %v3538 = vld [vmem:[#allocation2 + $0x50] sm:$0xff]
        %v3539 = vld [vmem:[#allocation2 + $0x58] sm:$0xff]
        %v3540 = vld [vmem:[#allocation2 + $0x60] sm:$0xff]
        %v3541 = vld [vmem:[#allocation2 + $0x68] sm:$0xff]
        %v3542 = vld [vmem:[#allocation2 + $0x70] sm:$0xff]
        %v3543 = vld [vmem:[#allocation2 + $0x78] sm:$0xff]
        %v3544 = vld [vmem:[#allocation2 + $0x80] sm:$0xff]
        %v3545 = vld [vmem:[#allocation2 + $0x88] sm:$0xff]
        %v3546 = vld [vmem:[#allocation2 + $0x90] sm:$0xff]
        %v3547 = vld [vmem:[#allocation2 + $0x98] sm:$0xff]
        %v3548 = vld [vmem:[#allocation2 + $0xa0] sm:$0xff]
        %v3549 = vld [vmem:[#allocation2 + $0xa8] sm:$0xff]
        %v3550 = vld [vmem:[#allocation2 + $0xb0] sm:$0xff]
        %v3551 = vld [vmem:[#allocation2 + $0xb8] sm:$0xff]
        %v3552 = vld [vmem:[#allocation2 + $0xc0] sm:$0xff]
        %v3553 = vld [vmem:[#allocation2 + $0xc8] sm:$0xff]
        %v3554 = vld [vmem:[#allocation2 + $0xd0] sm:$0xff]
        %v3555 = vld [vmem:[#allocation2 + $0xd8] sm:$0xff]
        %v3556 = vld [vmem:[#allocation2 + $0xe0] sm:$0xff]
        %v3557 = vld [vmem:[#allocation2 + $0xe8] sm:$0xff]
        %v3558 = vld [vmem:[#allocation2 + $0xf0] sm:$0xff]
        %v3559 = vld [vmem:[#allocation2 + $0xf8] sm:$0xff]
        %v3560 = vld [vmem:[#allocation2 + $0x100] sm:$0xff]
        %v3561 = vld [vmem:[#allocation2 + $0x108] sm:$0xff]
        %v3562 = vld [vmem:[#allocation2 + $0x110] sm:$0xff]
        %v3563 = vld [vmem:[#allocation2 + $0x118] sm:$0xff]
        %s3564 = scalar_lea.vmem %s1, 16
        %v3565 = vld [vmem:[%s3564] sm:$0x3]
        %v3567 = vsel %vm377, %v3510, 0
        %v3570 = vsel %vm377, %v3511, 0
        %v3573 = vsel %vm377, %v3512, 0
        %v3576 = vsel %vm377, %v3513, 0
        %v3579 = vsel %vm377, %v3514, 0
        %v3582 = vsel %vm377, %v3515, 0
        %v3585 = vsel %vm377, %v3516, 0
        %v3588 = vsel %vm377, %v3517, 0
        %v3591 = vsel %vm377, %v3518, 0
        %v3594 = vsel %vm377, %v3519, 0
        %v3597 = vsel %vm377, %v3520, 0
        %v3600 = vsel %vm377, %v3521, 0
        %v3603 = vsel %vm377, %v3522, 0
        %v3606 = vsel %vm377, %v3523, 0
        %v3609 = vsel %vm377, %v3524, 0
        %v3612 = vsel %vm377, %v3525, 0
        %v3615 = vsel %vm377, %v3526, 0
        %v3618 = vsel %vm377, %v3527, 0
        %v3621 = vand.u32 %v3565, %v435
        %3623 = vmatprep.subr.bf16.mxu0 0
        %3624 = vmatpush1.bf16.msra.mxu0 0
        %3625 = vmatprep.subr.bf16.mxu0 0
        %3626 = vmatpush1.bf16.msra.mxu0 0
        %3627 = vmatprep.subr.bf16.mxu0 0
        %3628 = vmatpush1.bf16.msra.mxu0 0
        %3629 = vmatprep.subr.bf16.mxu0 0
        %3630 = vmatpush1.bf16.msra.mxu0 0
        %3631 = vmatprep.subr.bf16.mxu0 0
        %3632 = vmatpush1.bf16.msra.mxu0 0
        %3633 = vmatprep.subr.bf16.mxu0 0
        %3634 = vmatpush1.bf16.msra.mxu0 0
        %3635 = vmatprep.subr.bf16.mxu0 0
        %3636 = vmatpush1.bf16.msra.mxu0 0
        %3637 = vmatprep.subr.bf16.mxu0 0
        %3638 = vmatpush1.bf16.msra.mxu0 %v3621
        %3639 = vmatprep.subr.bf16.mxu0 0
        %3640 = vmatpush2.bf16.msra.mxu0 0
        %3641 = vmatprep.subr.bf16.mxu0 0
        %3642 = vmatpush2.bf16.msra.mxu0 0
        %3643 = vmatprep.subr.bf16.mxu0 0
        %3644 = vmatpush2.bf16.msra.mxu0 0
        %3645 = vmatprep.subr.bf16.mxu0 0
        %3646 = vmatpush2.bf16.msra.mxu0 0
        %3647 = vmatprep.subr.bf16.mxu0 0
        %3648 = vmatpush2.bf16.msra.mxu0 0
        %3649 = vmatprep.subr.bf16.mxu0 0
        %3650 = vmatpush2.bf16.msra.mxu0 0
        %3651 = vmatprep.subr.bf16.mxu0 0
        %3652 = vmatpush2.bf16.msra.mxu0 0
        %3653 = vmatprep.subr.bf16.mxu0 0
        %3654 = vmatpush2.bf16.msra.mxu0 0
        %3655 = vmatprep.mubr.bf16.mxu0 0
        %3656 = vmatmul.mubr.bf16.gmra.mxu0 %v3567
        %v3657 = vpop.f32.mrf.mxu0
        %v3658 = vadd.f32 0.0, %v3657
        %v3659 = vpop.f32.mrf.mxu0
        %v3660 = vpop.f32.mrf.mxu0
        %v3661 = vadd.f32 0.0, %v3660
        %v3662 = vpop.f32.mrf.mxu0
        %3663 = vmatprep.mubr.bf16.mxu0 0
        %3664 = vmatmul.mubr.bf16.gmra.mxu0 %v3570
        %v3665 = vpop.f32.mrf.mxu0
        %v3666 = vadd.f32 0.0, %v3665
        %v3667 = vpop.f32.mrf.mxu0
        %v3668 = vpop.f32.mrf.mxu0
        %v3669 = vadd.f32 0.0, %v3668
        %v3670 = vpop.f32.mrf.mxu0
        %3671 = vmatprep.mubr.bf16.mxu0 0
        %3672 = vmatmul.mubr.bf16.gmra.mxu0 %v3573
        %v3673 = vpop.f32.mrf.mxu0
        %v3674 = vadd.f32 0.0, %v3673
        %v3675 = vpop.f32.mrf.mxu0
        %v3676 = vpop.f32.mrf.mxu0
        %v3677 = vadd.f32 0.0, %v3676
        %v3678 = vpop.f32.mrf.mxu0
        %3679 = vmatprep.mubr.bf16.mxu0 0
        %3680 = vmatmul.mubr.bf16.gmra.mxu0 %v3576
        %v3681 = vpop.f32.mrf.mxu0
        %v3682 = vadd.f32 0.0, %v3681
        %v3683 = vpop.f32.mrf.mxu0
        %v3684 = vpop.f32.mrf.mxu0
        %v3685 = vadd.f32 0.0, %v3684
        %v3686 = vpop.f32.mrf.mxu0
        %3687 = vmatprep.mubr.bf16.mxu0 0
        %3688 = vmatmul.mubr.bf16.gmra.mxu0 %v3579
        %v3689 = vpop.f32.mrf.mxu0
        %v3690 = vadd.f32 0.0, %v3689
        %v3691 = vpop.f32.mrf.mxu0
        %v3692 = vpop.f32.mrf.mxu0
        %v3693 = vadd.f32 0.0, %v3692
        %v3694 = vpop.f32.mrf.mxu0
        %3695 = vmatprep.mubr.bf16.mxu0 0
        %3696 = vmatmul.mubr.bf16.gmra.mxu0 %v3582
        %v3697 = vpop.f32.mrf.mxu0
        %v3698 = vadd.f32 0.0, %v3697
        %v3699 = vpop.f32.mrf.mxu0
        %v3700 = vpop.f32.mrf.mxu0
        %v3701 = vadd.f32 0.0, %v3700
        %v3702 = vpop.f32.mrf.mxu0
        %3703 = vmatprep.mubr.bf16.mxu0 0
        %3704 = vmatmul.mubr.bf16.gmra.mxu0 %v3585
        %v3705 = vpop.f32.mrf.mxu0
        %v3706 = vadd.f32 0.0, %v3705
        %v3707 = vpop.f32.mrf.mxu0
        %v3708 = vpop.f32.mrf.mxu0
        %v3709 = vadd.f32 0.0, %v3708
        %v3710 = vpop.f32.mrf.mxu0
        %3711 = vmatprep.mubr.bf16.mxu0 0
        %3712 = vmatmul.mubr.bf16.gmra.mxu0 %v3588
        %v3713 = vpop.f32.mrf.mxu0
        %v3714 = vadd.f32 0.0, %v3713
        %v3715 = vpop.f32.mrf.mxu0
        %v3716 = vpop.f32.mrf.mxu0
        %v3717 = vadd.f32 0.0, %v3716
        %v3718 = vpop.f32.mrf.mxu0
        %3719 = vmatprep.mubr.bf16.mxu0 0
        %3720 = vmatmul.mubr.bf16.gmra.mxu0 %v3591
        %v3721 = vpop.f32.mrf.mxu0
        %v3722 = vadd.f32 0.0, %v3721
        %v3723 = vpop.f32.mrf.mxu0
        %v3724 = vpop.f32.mrf.mxu0
        %v3725 = vadd.f32 0.0, %v3724
        %v3726 = vpop.f32.mrf.mxu0
        %3727 = vmatprep.mubr.bf16.mxu0 0
        %3728 = vmatmul.mubr.bf16.gmra.mxu0 %v3594
        %v3729 = vpop.f32.mrf.mxu0
        %v3730 = vadd.f32 0.0, %v3729
        %v3731 = vpop.f32.mrf.mxu0
        %v3732 = vpop.f32.mrf.mxu0
        %v3733 = vadd.f32 0.0, %v3732
        %v3734 = vpop.f32.mrf.mxu0
        %3735 = vmatprep.mubr.bf16.mxu0 0
        %3736 = vmatmul.mubr.bf16.gmra.mxu0 %v3597
        %v3737 = vpop.f32.mrf.mxu0
        %v3738 = vadd.f32 0.0, %v3737
        %v3739 = vpop.f32.mrf.mxu0
        %v3740 = vpop.f32.mrf.mxu0
        %v3741 = vadd.f32 0.0, %v3740
        %v3742 = vpop.f32.mrf.mxu0
        %3743 = vmatprep.mubr.bf16.mxu0 0
        %3744 = vmatmul.mubr.bf16.gmra.mxu0 %v3600
        %v3745 = vpop.f32.mrf.mxu0
        %v3746 = vadd.f32 0.0, %v3745
        %v3747 = vpop.f32.mrf.mxu0
        %v3748 = vpop.f32.mrf.mxu0
        %v3749 = vadd.f32 0.0, %v3748
        %v3750 = vpop.f32.mrf.mxu0
        %3751 = vmatprep.mubr.bf16.mxu0 0
        %3752 = vmatmul.mubr.bf16.gmra.mxu0 %v3603
        %v3753 = vpop.f32.mrf.mxu0
        %v3754 = vadd.f32 0.0, %v3753
        %v3755 = vpop.f32.mrf.mxu0
        %v3756 = vpop.f32.mrf.mxu0
        %v3757 = vadd.f32 0.0, %v3756
        %v3758 = vpop.f32.mrf.mxu0
        %3759 = vmatprep.mubr.bf16.mxu0 0
        %3760 = vmatmul.mubr.bf16.gmra.mxu0 %v3606
        %v3761 = vpop.f32.mrf.mxu0
        %v3762 = vadd.f32 0.0, %v3761
        %v3763 = vpop.f32.mrf.mxu0
        %v3764 = vpop.f32.mrf.mxu0
        %v3765 = vadd.f32 0.0, %v3764
        %v3766 = vpop.f32.mrf.mxu0
        %3767 = vmatprep.mubr.bf16.mxu0 0
        %3768 = vmatmul.mubr.bf16.gmra.mxu0 %v3609
        %v3769 = vpop.f32.mrf.mxu0
        %v3770 = vadd.f32 0.0, %v3769
        %v3771 = vpop.f32.mrf.mxu0
        %v3772 = vpop.f32.mrf.mxu0
        %v3773 = vadd.f32 0.0, %v3772
        %v3774 = vpop.f32.mrf.mxu0
        %3775 = vmatprep.mubr.bf16.mxu0 0
        %3776 = vmatmul.mubr.bf16.gmra.mxu0 %v3612
        %v3777 = vpop.f32.mrf.mxu0
        %v3778 = vadd.f32 0.0, %v3777
        %v3779 = vpop.f32.mrf.mxu0
        %v3780 = vpop.f32.mrf.mxu0
        %v3781 = vadd.f32 0.0, %v3780
        %v3782 = vpop.f32.mrf.mxu0
        %3783 = vmatprep.mubr.bf16.mxu0 0
        %3784 = vmatmul.mubr.bf16.gmra.mxu0 %v3615
        %v3785 = vpop.f32.mrf.mxu0
        %v3786 = vadd.f32 0.0, %v3785
        %v3787 = vpop.f32.mrf.mxu0
        %v3788 = vpop.f32.mrf.mxu0
        %v3789 = vadd.f32 0.0, %v3788
        %v3790 = vpop.f32.mrf.mxu0
        %3791 = vmatprep.mubr.bf16.mxu0 0
        %3792 = vmatmul.mubr.bf16.gmra.mxu0 %v3618
        %v3793 = vpop.f32.mrf.mxu0
        %v3794 = vadd.f32 0.0, %v3793
        %v3795 = vpop.f32.mrf.mxu0
        %v3796 = vpop.f32.mrf.mxu0
        %v3797 = vadd.f32 0.0, %v3796
        %v3798 = vpop.f32.mrf.mxu0
        %3799 = vdwg.mxu0
        %v3800 = vadd.f32 %v3528, %v3658
        %v3801 = vadd.f32 %v3529, %v3661
        %v3802 = vadd.f32 %v3530, %v3666
        %v3803 = vadd.f32 %v3531, %v3669
        %v3804 = vadd.f32 %v3532, %v3674
        %v3805 = vadd.f32 %v3533, %v3677
        %v3806 = vadd.f32 %v3534, %v3682
        %v3807 = vadd.f32 %v3535, %v3685
        %v3808 = vadd.f32 %v3536, %v3690
        %v3809 = vadd.f32 %v3537, %v3693
        %v3810 = vadd.f32 %v3538, %v3698
        %v3811 = vadd.f32 %v3539, %v3701
        %v3812 = vadd.f32 %v3540, %v3706
        %v3813 = vadd.f32 %v3541, %v3709
        %v3814 = vadd.f32 %v3542, %v3714
        %v3815 = vadd.f32 %v3543, %v3717
        %v3816 = vadd.f32 %v3544, %v3722
        %v3817 = vadd.f32 %v3545, %v3725
        %v3818 = vadd.f32 %v3546, %v3730
        %v3819 = vadd.f32 %v3547, %v3733
        %v3820 = vadd.f32 %v3548, %v3738
        %v3821 = vadd.f32 %v3549, %v3741
        %v3822 = vadd.f32 %v3550, %v3746
        %v3823 = vadd.f32 %v3551, %v3749
        %v3824 = vadd.f32 %v3552, %v3754
        %v3825 = vadd.f32 %v3553, %v3757
        %v3826 = vadd.f32 %v3554, %v3762
        %v3827 = vadd.f32 %v3555, %v3765
        %v3828 = vadd.f32 %v3556, %v3770
        %v3829 = vadd.f32 %v3557, %v3773
        %v3830 = vadd.f32 %v3558, %v3778
        %v3831 = vadd.f32 %v3559, %v3781
        %v3832 = vadd.f32 %v3560, %v3786
        %v3833 = vadd.f32 %v3561, %v3789
        %v3834 = vadd.f32 %v3562, %v3794
        %v3835 = vadd.f32 %v3563, %v3797
        %3836 = vst [vmem:[#allocation2] sm:$0xff] %v3800
        %3837 = vst [vmem:[#allocation2 + $0x8] sm:$0xff] %v3801
        %3838 = vst [vmem:[#allocation2 + $0x10] sm:$0xff] %v3802
        %3839 = vst [vmem:[#allocation2 + $0x18] sm:$0xff] %v3803
        %3840 = vst [vmem:[#allocation2 + $0x20] sm:$0xff] %v3804
        %3841 = vst [vmem:[#allocation2 + $0x28] sm:$0xff] %v3805
        %3842 = vst [vmem:[#allocation2 + $0x30] sm:$0xff] %v3806
        %3843 = vst [vmem:[#allocation2 + $0x38] sm:$0xff] %v3807
        %3844 = vst [vmem:[#allocation2 + $0x40] sm:$0xff] %v3808
        %3845 = vst [vmem:[#allocation2 + $0x48] sm:$0xff] %v3809
        %3846 = vst [vmem:[#allocation2 + $0x50] sm:$0xff] %v3810
        %3847 = vst [vmem:[#allocation2 + $0x58] sm:$0xff] %v3811
        %3848 = vst [vmem:[#allocation2 + $0x60] sm:$0xff] %v3812
        %3849 = vst [vmem:[#allocation2 + $0x68] sm:$0xff] %v3813
        %3850 = vst [vmem:[#allocation2 + $0x70] sm:$0xff] %v3814
        %3851 = vst [vmem:[#allocation2 + $0x78] sm:$0xff] %v3815
        %3852 = vst [vmem:[#allocation2 + $0x80] sm:$0xff] %v3816
        %3853 = vst [vmem:[#allocation2 + $0x88] sm:$0xff] %v3817
        %3854 = vst [vmem:[#allocation2 + $0x90] sm:$0xff] %v3818
        %3855 = vst [vmem:[#allocation2 + $0x98] sm:$0xff] %v3819
        %3856 = vst [vmem:[#allocation2 + $0xa0] sm:$0xff] %v3820
        %3857 = vst [vmem:[#allocation2 + $0xa8] sm:$0xff] %v3821
        %3858 = vst [vmem:[#allocation2 + $0xb0] sm:$0xff] %v3822
        %3859 = vst [vmem:[#allocation2 + $0xb8] sm:$0xff] %v3823
        %3860 = vst [vmem:[#allocation2 + $0xc0] sm:$0xff] %v3824
        %3861 = vst [vmem:[#allocation2 + $0xc8] sm:$0xff] %v3825
        %3862 = vst [vmem:[#allocation2 + $0xd0] sm:$0xff] %v3826
        %3863 = vst [vmem:[#allocation2 + $0xd8] sm:$0xff] %v3827
        %3864 = vst [vmem:[#allocation2 + $0xe0] sm:$0xff] %v3828
        %3865 = vst [vmem:[#allocation2 + $0xe8] sm:$0xff] %v3829
        %3866 = vst [vmem:[#allocation2 + $0xf0] sm:$0xff] %v3830
        %3867 = vst [vmem:[#allocation2 + $0xf8] sm:$0xff] %v3831
        %3868 = vst [vmem:[#allocation2 + $0x100] sm:$0xff] %v3832
        %3869 = vst [vmem:[#allocation2 + $0x108] sm:$0xff] %v3833
        %3870 = vst [vmem:[#allocation2 + $0x110] sm:$0xff] %v3834
        %3871 = vst [vmem:[#allocation2 + $0x118] sm:$0xff] %v3835
        %v3872 = vld [vmem:[#allocation2] sm:$0xff]
        %v3873 = vld [vmem:[#allocation2 + $0x8] sm:$0xff]
        %v3874 = vld [vmem:[#allocation2 + $0x10] sm:$0xff]
        %v3875 = vld [vmem:[#allocation2 + $0x18] sm:$0xff]
        %v3876 = vld [vmem:[#allocation2 + $0x20] sm:$0xff]
        %v3877 = vld [vmem:[#allocation2 + $0x28] sm:$0xff]
        %v3878 = vld [vmem:[#allocation2 + $0x30] sm:$0xff]
        %v3879 = vld [vmem:[#allocation2 + $0x38] sm:$0xff]
        %v3880 = vld [vmem:[#allocation2 + $0x40] sm:$0xff]
        %v3881 = vld [vmem:[#allocation2 + $0x48] sm:$0xff]
        %v3882 = vld [vmem:[#allocation2 + $0x50] sm:$0xff]
        %v3883 = vld [vmem:[#allocation2 + $0x58] sm:$0xff]
        %v3884 = vld [vmem:[#allocation2 + $0x60] sm:$0xff]
        %v3885 = vld [vmem:[#allocation2 + $0x68] sm:$0xff]
        %v3886 = vld [vmem:[#allocation2 + $0x70] sm:$0xff]
        %v3887 = vld [vmem:[#allocation2 + $0x78] sm:$0xff]
        %v3888 = vld [vmem:[#allocation2 + $0x80] sm:$0xff]
        %v3889 = vld [vmem:[#allocation2 + $0x88] sm:$0xff]
        %v3890 = vld [vmem:[#allocation2 + $0x90] sm:$0xff]
        %v3891 = vld [vmem:[#allocation2 + $0x98] sm:$0xff]
        %v3892 = vld [vmem:[#allocation2 + $0xa0] sm:$0xff]
        %v3893 = vld [vmem:[#allocation2 + $0xa8] sm:$0xff]
        %v3894 = vld [vmem:[#allocation2 + $0xb0] sm:$0xff]
        %v3895 = vld [vmem:[#allocation2 + $0xb8] sm:$0xff]
        %v3896 = vld [vmem:[#allocation2 + $0xc0] sm:$0xff]
        %v3897 = vld [vmem:[#allocation2 + $0xc8] sm:$0xff]
        %v3898 = vld [vmem:[#allocation2 + $0xd0] sm:$0xff]
        %v3899 = vld [vmem:[#allocation2 + $0xd8] sm:$0xff]
        %v3900 = vld [vmem:[#allocation2 + $0xe0] sm:$0xff]
        %v3901 = vld [vmem:[#allocation2 + $0xe8] sm:$0xff]
        %v3902 = vld [vmem:[#allocation2 + $0xf0] sm:$0xff]
        %v3903 = vld [vmem:[#allocation2 + $0xf8] sm:$0xff]
        %v3904 = vld [vmem:[#allocation2 + $0x100] sm:$0xff]
        %v3905 = vld [vmem:[#allocation2 + $0x108] sm:$0xff]
        %v3906 = vld [vmem:[#allocation2 + $0x110] sm:$0xff]
        %v3907 = vld [vmem:[#allocation2 + $0x118] sm:$0xff]
        %v3908 = vld [vmem:[%s2] sm:$0x1]
        %v3910 = vlaneseq
        %v3911 = vshrl.u32 %v3910, 7
        %v3912 = vsub.s32 0, %v3911
        %v3913 = vrot.slane %v3908, %v3912
        %v3915 = vadd.f32 %v3872, %v3913
        %v3916 = vadd.f32 %v3873, %v3913
        %v3917 = vadd.f32 %v3874, %v3913
        %v3918 = vadd.f32 %v3875, %v3913
        %v3919 = vadd.f32 %v3876, %v3913
        %v3920 = vadd.f32 %v3877, %v3913
        %v3921 = vadd.f32 %v3878, %v3913
        %v3922 = vadd.f32 %v3879, %v3913
        %v3923 = vadd.f32 %v3880, %v3913
        %v3924 = vadd.f32 %v3881, %v3913
        %v3925 = vadd.f32 %v3882, %v3913
        %v3926 = vadd.f32 %v3883, %v3913
        %v3927 = vadd.f32 %v3884, %v3913
        %v3928 = vadd.f32 %v3885, %v3913
        %v3929 = vadd.f32 %v3886, %v3913
        %v3930 = vadd.f32 %v3887, %v3913
        %v3931 = vadd.f32 %v3888, %v3913
        %v3932 = vadd.f32 %v3889, %v3913
        %v3933 = vadd.f32 %v3890, %v3913
        %v3934 = vadd.f32 %v3891, %v3913
        %v3935 = vadd.f32 %v3892, %v3913
        %v3936 = vadd.f32 %v3893, %v3913
        %v3937 = vadd.f32 %v3894, %v3913
        %v3938 = vadd.f32 %v3895, %v3913
        %v3939 = vadd.f32 %v3896, %v3913
        %v3940 = vadd.f32 %v3897, %v3913
        %v3941 = vadd.f32 %v3898, %v3913
        %v3942 = vadd.f32 %v3899, %v3913
        %v3943 = vadd.f32 %v3900, %v3913
        %v3944 = vadd.f32 %v3901, %v3913
        %v3945 = vadd.f32 %v3902, %v3913
        %v3946 = vadd.f32 %v3903, %v3913
        %v3947 = vadd.f32 %v3904, %v3913
        %v3948 = vadd.f32 %v3905, %v3913
        %v3949 = vadd.f32 %v3906, %v3913
        %v3950 = vadd.f32 %v3907, %v3913
        %v3951 = vmax.f32 %v3915, 0.0
        %v3952 = vmax.f32 %v3916, 0.0
        %v3953 = vmax.f32 %v3917, 0.0
        %v3954 = vmax.f32 %v3918, 0.0
        %v3955 = vmax.f32 %v3919, 0.0
        %v3956 = vmax.f32 %v3920, 0.0
        %v3957 = vmax.f32 %v3921, 0.0
        %v3958 = vmax.f32 %v3922, 0.0
        %v3959 = vmax.f32 %v3923, 0.0
        %v3960 = vmax.f32 %v3924, 0.0
        %v3961 = vmax.f32 %v3925, 0.0
        %v3962 = vmax.f32 %v3926, 0.0
        %v3963 = vmax.f32 %v3927, 0.0
        %v3964 = vmax.f32 %v3928, 0.0
        %v3965 = vmax.f32 %v3929, 0.0
        %v3966 = vmax.f32 %v3930, 0.0
        %v3967 = vmax.f32 %v3931, 0.0
        %v3968 = vmax.f32 %v3932, 0.0
        %v3969 = vmax.f32 %v3933, 0.0
        %v3970 = vmax.f32 %v3934, 0.0
        %v3971 = vmax.f32 %v3935, 0.0
        %v3972 = vmax.f32 %v3936, 0.0
        %v3973 = vmax.f32 %v3937, 0.0
        %v3974 = vmax.f32 %v3938, 0.0
        %v3975 = vmax.f32 %v3939, 0.0
        %v3976 = vmax.f32 %v3940, 0.0
        %v3977 = vmax.f32 %v3941, 0.0
        %v3978 = vmax.f32 %v3942, 0.0
        %v3979 = vmax.f32 %v3943, 0.0
        %v3980 = vmax.f32 %v3944, 0.0
        %v3981 = vmax.f32 %v3945, 0.0
        %v3982 = vmax.f32 %v3946, 0.0
        %v3983 = vmax.f32 %v3947, 0.0
        %v3984 = vmax.f32 %v3948, 0.0
        %v3985 = vmax.f32 %v3949, 0.0
        %v3986 = vmax.f32 %v3950, 0.0
        %v3987 = vld [vmem:[%s3] sm:$0x7]
        %v3989 = vlaneseq
        %v3990 = vshrl.u32 %v3989, 7
        %v3991 = vsub.s32 0, %v3990
        %v3992 = vrot.slane %v3987, %v3991
        %v3993 = vlaneseq
        %v3994 = vshrl.u32 %v3993, 7
        %v3995 = vsub.s32 1, %v3994
        %v3996 = vrot.slane %v3987, %v3995
        %v3997 = vlaneseq
        %v3998 = vshrl.u32 %v3997, 7
        %v3999 = vsub.s32 2, %v3998
        %v4000 = vrot.slane %v3987, %v3999
        %vm4003 = vcmask 261120
        %v4004 = vsel %vm4003, %v4000, 0
        %4006 = vmatprep.subr.mxu0 0.0
        %4007 = vmatpush1.msra.mxu0 %v3966
        %4008 = vmatprep.subr.mxu0 0.0
        %4009 = vmatpush1.msra.mxu0 %v3965
        %4010 = vmatprep.subr.mxu0 0.0
        %4011 = vmatpush1.msra.mxu0 %v3964
        %4012 = vmatprep.subr.mxu0 0.0
        %4013 = vmatpush1.msra.mxu0 %v3963
        %4014 = vmatprep.subr.mxu0 0.0
        %4015 = vmatpush1.msra.mxu0 %v3962
        %4016 = vmatprep.subr.mxu0 0.0
        %4017 = vmatpush1.msra.mxu0 %v3961
        %4018 = vmatprep.subr.mxu0 0.0
        %4019 = vmatpush1.msra.mxu0 %v3960
        %4020 = vmatprep.subr.mxu0 0.0
        %4021 = vmatpush1.msra.mxu0 %v3959
        %4022 = vmatprep.subr.mxu0 0.0
        %4023 = vmatpush1.msra.mxu0 %v3958
        %4024 = vmatprep.subr.mxu0 0.0
        %4025 = vmatpush1.msra.mxu0 %v3957
        %4026 = vmatprep.subr.mxu0 0.0
        %4027 = vmatpush1.msra.mxu0 %v3956
        %4028 = vmatprep.subr.mxu0 0.0
        %4029 = vmatpush1.msra.mxu0 %v3955
        %4030 = vmatprep.subr.mxu0 0.0
        %4031 = vmatpush1.msra.mxu0 %v3954
        %4032 = vmatprep.subr.mxu0 0.0
        %4033 = vmatpush1.msra.mxu0 %v3953
        %4034 = vmatprep.subr.mxu0 0.0
        %4035 = vmatpush1.msra.mxu0 %v3952
        %4036 = vmatprep.subr.mxu0 0.0
        %4037 = vmatpush1.msra.mxu0 %v3951
        %4038 = vmatprep.subr.mxu0 0.0
        %4039 = vmatpush2.msra.mxu0 %v3982
        %4040 = vmatprep.subr.mxu0 0.0
        %4041 = vmatpush2.msra.mxu0 %v3981
        %4042 = vmatprep.subr.mxu0 0.0
        %4043 = vmatpush2.msra.mxu0 %v3980
        %4044 = vmatprep.subr.mxu0 0.0
        %4045 = vmatpush2.msra.mxu0 %v3979
        %4046 = vmatprep.subr.mxu0 0.0
        %4047 = vmatpush2.msra.mxu0 %v3978
        %4048 = vmatprep.subr.mxu0 0.0
        %4049 = vmatpush2.msra.mxu0 %v3977
        %4050 = vmatprep.subr.mxu0 0.0
        %4051 = vmatpush2.msra.mxu0 %v3976
        %4052 = vmatprep.subr.mxu0 0.0
        %4053 = vmatpush2.msra.mxu0 %v3975
        %4054 = vmatprep.subr.mxu0 0.0
        %4055 = vmatpush2.msra.mxu0 %v3974
        %4056 = vmatprep.subr.mxu0 0.0
        %4057 = vmatpush2.msra.mxu0 %v3973
        %4058 = vmatprep.subr.mxu0 0.0
        %4059 = vmatpush2.msra.mxu0 %v3972
        %4060 = vmatprep.subr.mxu0 0.0
        %4061 = vmatpush2.msra.mxu0 %v3971
        %4062 = vmatprep.subr.mxu0 0.0
        %4063 = vmatpush2.msra.mxu0 %v3970
        %4064 = vmatprep.subr.mxu0 0.0
        %4065 = vmatpush2.msra.mxu0 %v3969
        %4066 = vmatprep.subr.mxu0 0.0
        %4067 = vmatpush2.msra.mxu0 %v3968
        %4068 = vmatprep.subr.mxu0 0.0
        %4069 = vmatpush2.msra.mxu0 %v3967
        %4070 = vmatprep.mubr.f32.mxu0 %v3996
        %4071 = vmatmul.mubr.f32.gmra.mxu0 %v3992
        %v4072 = vpop.f32.mrf.mxu0
        %v4073 = vadd.f32 0.0, %v4072
        %v4074 = vpop.f32.mrf.mxu0
        %4075 = vdwg.mxu0
        %4076 = vmatprep.subr.mxu0 0.0
        %4077 = vmatpush1.msra.mxu0 0.0
        %4078 = vmatprep.subr.mxu0 0.0
        %4079 = vmatpush1.msra.mxu0 0.0
        %4080 = vmatprep.subr.mxu0 0.0
        %4081 = vmatpush1.msra.mxu0 0.0
        %4082 = vmatprep.subr.mxu0 0.0
        %4083 = vmatpush1.msra.mxu0 0.0
        %4084 = vmatprep.subr.mxu0 0.0
        %4085 = vmatpush1.msra.mxu0 0.0
        %4086 = vmatprep.subr.mxu0 0.0
        %4087 = vmatpush1.msra.mxu0 0.0
        %4088 = vmatprep.subr.mxu0 0.0
        %4089 = vmatpush1.msra.mxu0 0.0
        %4090 = vmatprep.subr.mxu0 0.0
        %4091 = vmatpush1.msra.mxu0 0.0
        %4092 = vmatprep.subr.mxu0 0.0
        %4093 = vmatpush1.msra.mxu0 0.0
        %4094 = vmatprep.subr.mxu0 0.0
        %4095 = vmatpush1.msra.mxu0 0.0
        %4096 = vmatprep.subr.mxu0 0.0
        %4097 = vmatpush1.msra.mxu0 0.0
        %4098 = vmatprep.subr.mxu0 0.0
        %4099 = vmatpush1.msra.mxu0 0.0
        %4100 = vmatprep.subr.mxu0 0.0
        %4101 = vmatpush1.msra.mxu0 %v3986
        %4102 = vmatprep.subr.mxu0 0.0
        %4103 = vmatpush1.msra.mxu0 %v3985
        %4104 = vmatprep.subr.mxu0 0.0
        %4105 = vmatpush1.msra.mxu0 %v3984
        %4106 = vmatprep.subr.mxu0 0.0
        %4107 = vmatpush1.msra.mxu0 %v3983
        %4108 = vmatprep.subr.mxu0 0.0
        %4109 = vmatpush2.msra.mxu0 0.0
        %4110 = vmatprep.subr.mxu0 0.0
        %4111 = vmatpush2.msra.mxu0 0.0
        %4112 = vmatprep.subr.mxu0 0.0
        %4113 = vmatpush2.msra.mxu0 0.0
        %4114 = vmatprep.subr.mxu0 0.0
        %4115 = vmatpush2.msra.mxu0 0.0
        %4116 = vmatprep.subr.mxu0 0.0
        %4117 = vmatpush2.msra.mxu0 0.0
        %4118 = vmatprep.subr.mxu0 0.0
        %4119 = vmatpush2.msra.mxu0 0.0
        %4120 = vmatprep.subr.mxu0 0.0
        %4121 = vmatpush2.msra.mxu0 0.0
        %4122 = vmatprep.subr.mxu0 0.0
        %4123 = vmatpush2.msra.mxu0 0.0
        %4124 = vmatprep.subr.mxu0 0.0
        %4125 = vmatpush2.msra.mxu0 0.0
        %4126 = vmatprep.subr.mxu0 0.0
        %4127 = vmatpush2.msra.mxu0 0.0
        %4128 = vmatprep.subr.mxu0 0.0
        %4129 = vmatpush2.msra.mxu0 0.0
        %4130 = vmatprep.subr.mxu0 0.0
        %4131 = vmatpush2.msra.mxu0 0.0
        %4132 = vmatprep.subr.mxu0 0.0
        %4133 = vmatpush2.msra.mxu0 0.0
        %4134 = vmatprep.subr.mxu0 0.0
        %4135 = vmatpush2.msra.mxu0 0.0
        %4136 = vmatprep.subr.mxu0 0.0
        %4137 = vmatpush2.msra.mxu0 0.0
        %4138 = vmatprep.subr.mxu0 0.0
        %4139 = vmatpush2.msra.mxu0 0.0
        %4140 = vmatprep.mubr.f32.mxu0 0.0
        %4141 = vmatmul.mubr.f32.gmra.mxu0 %v4004
        %v4142 = vpop.f32.mrf.mxu0
        %v4143 = vadd.f32 %v4073, %v4142
        %v4144 = vpop.f32.mrf.mxu0
        %4145 = vdwg.mxu0
        %v4146 = vld [vmem:[%s4] sm:$0xff]
        %v4147 = vld [vmem:[%s4 + $0x8] sm:$0xff]
        %v4148 = vld [vmem:[%s4 + $0x10] sm:$0xff]
        %v4149 = vld [vmem:[%s4 + $0x18] sm:$0xff]
        %v4150 = vld [vmem:[%s4 + $0x20] sm:$0xff]
        %v4151 = vld [vmem:[%s4 + $0x28] sm:$0xff]
        %v4152 = vld [vmem:[%s4 + $0x30] sm:$0xff]
        %v4153 = vld [vmem:[%s4 + $0x38] sm:$0xff]
        %v4154 = vld [vmem:[%s4 + $0x40] sm:$0xff]
        %v4155 = vld [vmem:[%s4 + $0x48] sm:$0xff]
        %v4156 = vld [vmem:[%s4 + $0x50] sm:$0xff]
        %v4157 = vld [vmem:[%s4 + $0x58] sm:$0xff]
        %v4158 = vld [vmem:[%s4 + $0x60] sm:$0xff]
        %v4159 = vld [vmem:[%s4 + $0x68] sm:$0xff]
        %v4160 = vld [vmem:[%s4 + $0x70] sm:$0xff]
        %v4161 = vld [vmem:[%s4 + $0x78] sm:$0xff]
        %v4162 = vld [vmem:[%s5] sm:$0x1]
        %4163 = vmatprep.subr.mxu0 0.0
        %4164 = vmatpush1.msra.mxu0 %v4161
        %4165 = vmatprep.subr.mxu0 0.0
        %4166 = vmatpush1.msra.mxu0 %v4160
        %4167 = vmatprep.subr.mxu0 0.0
        %4168 = vmatpush1.msra.mxu0 %v4159
        %4169 = vmatprep.subr.mxu0 0.0
        %4170 = vmatpush1.msra.mxu0 %v4158
        %4171 = vmatprep.subr.mxu0 0.0
        %4172 = vmatpush1.msra.mxu0 %v4157
        %4173 = vmatprep.subr.mxu0 0.0
        %4174 = vmatpush1.msra.mxu0 %v4156
        %4175 = vmatprep.subr.mxu0 0.0
        %4176 = vmatpush1.msra.mxu0 %v4155
        %4177 = vmatprep.subr.mxu0 0.0
        %4178 = vmatpush1.msra.mxu0 %v4154
        %4179 = vmatprep.subr.mxu0 0.0
        %4180 = vmatpush1.msra.mxu0 %v4153
        %4181 = vmatprep.subr.mxu0 0.0
        %4182 = vmatpush1.msra.mxu0 %v4152
        %4183 = vmatprep.subr.mxu0 0.0
        %4184 = vmatpush1.msra.mxu0 %v4151
        %4185 = vmatprep.subr.mxu0 0.0
        %4186 = vmatpush1.msra.mxu0 %v4150
        %4187 = vmatprep.subr.mxu0 0.0
        %4188 = vmatpush1.msra.mxu0 %v4149
        %4189 = vmatprep.subr.mxu0 0.0
        %4190 = vmatpush1.msra.mxu0 %v4148
        %4191 = vmatprep.subr.mxu0 0.0
        %4192 = vmatpush1.msra.mxu0 %v4147
        %4193 = vmatprep.subr.mxu0 0.0
        %4194 = vmatpush1.msra.mxu0 %v4146
        %4195 = vmatprep.subr.mxu0 0.0
        %4196 = vmatpush2.msra.mxu0 0.0
        %4197 = vmatprep.subr.mxu0 0.0
        %4198 = vmatpush2.msra.mxu0 0.0
        %4199 = vmatprep.subr.mxu0 0.0
        %4200 = vmatpush2.msra.mxu0 0.0
        %4201 = vmatprep.subr.mxu0 0.0
        %4202 = vmatpush2.msra.mxu0 0.0
        %4203 = vmatprep.subr.mxu0 0.0
        %4204 = vmatpush2.msra.mxu0 0.0
        %4205 = vmatprep.subr.mxu0 0.0
        %4206 = vmatpush2.msra.mxu0 0.0
        %4207 = vmatprep.subr.mxu0 0.0
        %4208 = vmatpush2.msra.mxu0 0.0
        %4209 = vmatprep.subr.mxu0 0.0
        %4210 = vmatpush2.msra.mxu0 0.0
        %4211 = vmatprep.subr.mxu0 0.0
        %4212 = vmatpush2.msra.mxu0 0.0
        %4213 = vmatprep.subr.mxu0 0.0
        %4214 = vmatpush2.msra.mxu0 0.0
        %4215 = vmatprep.subr.mxu0 0.0
        %4216 = vmatpush2.msra.mxu0 0.0
        %4217 = vmatprep.subr.mxu0 0.0
        %4218 = vmatpush2.msra.mxu0 0.0
        %4219 = vmatprep.subr.mxu0 0.0
        %4220 = vmatpush2.msra.mxu0 0.0
        %4221 = vmatprep.subr.mxu0 0.0
        %4222 = vmatpush2.msra.mxu0 0.0
        %4223 = vmatprep.subr.mxu0 0.0
        %4224 = vmatpush2.msra.mxu0 0.0
        %4225 = vmatprep.subr.mxu0 0.0
        %4226 = vmatpush2.msra.mxu0 0.0
        %4227 = vmatprep.mubr.f32.mxu0 0.0
        %4228 = vmatmul.mubr.f32.gmra.mxu0 %v4143
        %v4229 = vpop.f32.mrf.mxu0
        %v4230 = vadd.f32 %v4162, %v4229
        %v4231 = vpop.f32.mrf.mxu0
        %4232 = vdwg.mxu0
        %4233 = vst [vmem:[%s243] sm:$0x1] %v4230
        %s4234 = sand.u32 %s159, 1
        %s4235 = scalar_lea.sflag [#allocation4], %s4234
        %s4236 = sand.u32 %s159, 1
        %s4237 = scalar_lea.vmem [#allocation3], %s4236
        // Predicated region
        $region45: #{tpu_custom_call.1} parent=43 // pred_check
          %p4238 = pneg %p169
        $region46: #{tpu_custom_call.1} parent=43 // pred_check_branch
          %4240 = sbr.rel (%p4238) target = $region48
        $region47: #{tpu_custom_call.1} parent=43 // pred_region
          %s4242 = ssub.s32 16, 16
          %4243 = vsyncadd %s4235, %s4242
          %s4244 = smul.addr %s20, 16
          %s4245 = scalar_lea.hbm %s6, %s4244
          %s4247 = sshll.u32 %s4237, 4
          %s4248 = int_to_ptr.vmem [resolvable:$true] %s4247
          %4250 = dma.vmem_to_hbm [thread:$0]  %s4248, 16, %s4245, %s4235
        $region48: #{tpu_custom_call.1} parent=43 // pred_fallthru
          _
      $region44: #{tpu_custom_call.1} parent=5 // pred_fallthru
        _
      %p4251 = scmp.le.s32.totalorder 2, %s15
      // Predicated region
      $region49: #{tpu_custom_call.1} parent=5 // pred_check
        %p4252 = pneg %p4251
      $region50: #{tpu_custom_call.1} parent=5 // pred_check_branch
        %4254 = sbr.rel (%p4252) target = $region52
      $region51: #{tpu_custom_call.1} parent=5 // pred_region
        %s4255 = ssub.s32 %s15, 2
        // Predicated region
        $region53: #{tpu_custom_call.1} parent=51 // pred_check
          %p4256 = pneg %p175
        $region54: #{tpu_custom_call.1} parent=51 // pred_check_branch
          %4258 = sbr.rel (%p4256) target = $region56
        $region55: #{tpu_custom_call.1} parent=51 // pred_region
          %s4259 = sand.u32 %s160, 1
          %s4260 = scalar_lea.sflag [#allocation4], %s4259
          %s4261 = sand.u32 %s160, 1
          %s4262 = scalar_lea.vmem [#allocation3], %s4261
          %4263 = dma.done %s4260, 16
        $region56: #{tpu_custom_call.1} parent=51 // pred_fallthru
          _
      $region52: #{tpu_custom_call.1} parent=5 // pred_fallthru
        _
    $region6: #{tpu_custom_call.1} parent=1 // loop_footer
      %s19 = sadd.s32 1, %s15
    $region7: #{tpu_custom_call.1} parent=1 // loop_footer_branch
      %14 = sbr.rel target = $region3
    $region8: #{tpu_custom_call.1} parent=1 // loop_exit
      _
    %4264 = vsyncpa [#allocation4], 1
    %s4265 = scalar_lea.sflag [#allocation4], 1
    %4266 = vsyncpa %s4265, 1

</llo_original>
